<compile_context>
chip_gen: v6e
topology: v6e:2x2x1
jax: 0.10.0
libtpu: 0.0.40
codegen_flags: <defaults>
</compile_context>

<pallas_src>
import functools

import jax
import jax.numpy as jnp
from jax.experimental import pallas as pl
from jax.experimental.pallas import tpu as pltpu


# ----------------------------------------------------------------------------
# Fused Pallas kernel: depth x ConvLSTMCell + per-pixel MLP (one batch tile)
# ----------------------------------------------------------------------------
def _fused_kernel(x_ref, h_in_ref, c_in_ref, w_ref, b_ref,
                  w1_ref, b1_ref, w2_ref, b2_ref,
                  h_out_ref, c_out_ref, y_ref,
                  comb_ref, *, H, W):
    """Per-grid-step shapes (HW = H*W pixels of ONE batch element, on lanes):

      x_ref:     (1, C, HW)  f32         input features, channels-first flat
      h_in_ref:  (1, depth, 1, Ch, HW)   f32  hidden state (selected sensor)
      c_in_ref:  (1, depth, 1, Ch, HW)   f32  cell state   (selected sensor)
      w_ref:     (1, depth, 9, 4Ch, Ct)  bf16 conv taps, [i|f|o|g] x [x-ch|h-ch|pad]
      b_ref:     (1, depth, 4Ch, 1)      f32
      w1_ref:(2Ch,Ch) b1_ref:(2Ch,1) w2_ref:(C,2Ch) b2_ref:(C,1)   per-pixel MLP
      h_out_ref/c_out_ref: same as h_in/c_in (aliased with the inputs)
      y_ref:     (1, C, HW)  f32
      comb_ref:  VMEM (Ct, HW + 2*(W+1)) bf16  flat-padded concat([x, h]) slab
    """
    C = x_ref.shape[1]
    HW = x_ref.shape[2]
    depth = h_in_ref.shape[1]
    Ch = h_in_ref.shape[3]
    Ct = w_ref.shape[4]
    P = W + 1                       # max |flat shift| of a 3x3 tap = W + 1

    # Halo-only zeroing, once per grid step.  The interior rows [0:K] are fully
    # rewritten every layer; rows >= K are never read because the weight is
    # sliced to K input channels below (no reliance on zero weight columns).
    comb_ref[:, 0:P] = jnp.zeros((Ct, P), jnp.bfloat16)
    comb_ref[:, P + HW:P + HW + P] = jnp.zeros((Ct, P), jnp.bfloat16)

    # Column-validity masks for horizontally shifted taps (row over/underflow is
    # handled by the zeroed flat halo).
    col = jax.lax.broadcasted_iota(jnp.int32, (1, HW), 1) % W
    mask_dx = {-1: col >= 1, 0: None, 1: col <= (W - 2)}

    x_cur = x_ref[0].astype(jnp.bfloat16)            # (C, HW) layer-0 input
    for d in range(depth):                           # static unroll over depth
        cin = C if d == 0 else Ch
        K = cin + Ch

        # concat([x_cur, h_prev]) written once into the flat-padded bf16 slab.
        comb_ref[0:cin, P:P + HW] = x_cur
        comb_ref[cin:K, P:P + HW] = h_in_ref[0, d, 0].astype(jnp.bfloat16)

        # 3x3 conv = 9 shifted (4Ch, K) @ (K, HW) matmuls, f32 accumulate.
        acc = jnp.zeros((4 * Ch, HW), jnp.float32)
        for k in range(9):
            dy, dx = k // 3 - 1, k % 3 - 1
            s = dy * W + dx
            shifted = comb_ref[0:K, P + s:P + s + HW]          # (K, HW) bf16
            m = mask_dx[dx]
            if m is not None:
                shifted = jnp.where(m, shifted, jnp.zeros((), jnp.bfloat16))
            acc = acc + jnp.dot(w_ref[0, d, k, :, 0:K], shifted,
                                preferred_element_type=jnp.float32)
        gates = acc + b_ref[0, d]                              # (4Ch, HW) f32

        # Gates: fused sigmoid over [i|f|o], tanh over g; all lane-dense, f32.
        sig = jax.nn.sigmoid(gates[0:3 * Ch, :])
        i_g = sig[0:Ch]
        f_g = sig[Ch:2 * Ch]
        o_g = sig[2 * Ch:3 * Ch]
        g_g = jnp.tanh(gates[3 * Ch:4 * Ch, :])

        c_prev = c_in_ref[0, d, 0]                             # (Ch, HW) f32
        c_next = f_g * c_prev + i_g * g_g                      # c kept in f32
        h_next = o_g * jnp.tanh(c_next)

        h_out_ref[0, d, 0] = h_next                            # unmasked stores
        c_out_ref[0, d, 0] = c_next
        x_cur = h_next.astype(jnp.bfloat16)

    # Per-pixel MLP on the last layer's h (never leaves the chip).
    h1 = jnp.dot(w1_ref[...], x_cur,
                 preferred_element_type=jnp.float32) + b1_ref[...]
    h1 = jnp.maximum(h1, 0.0)
    y = jnp.dot(w2_ref[...], h1.astype(jnp.bfloat16),
                preferred_element_type=jnp.float32) + b2_ref[...]
    y_ref[0] = y


def _fused_forward(x_cf, h_full, c_full, w_conv, b_conv, w1, b1, w2, b2, *,
                   sensor_id, H, W):
    """Single pallas_call for one sensor forward step.

    h_full/c_full are the FULL (S, depth, B, Ch, H*W) latent arrays; the kernel
    reads/writes only the `sensor_id` slice, and the outputs alias the inputs so
    every other sensor's state is preserved without copying it through VMEM.
    """
    S, depth, B, Ch, HW = h_full.shape
    C = x_cf.shape[1]
    Ct = w_conv.shape[-1]
    assert depth >= 1, "depth must be >= 1"
    sid = int(sensor_id)

    kernel = functools.partial(_fused_kernel, H=H, W=W)

    in_specs = [
        pl.BlockSpec((1, C, HW), lambda b: (b, 0, 0)),                         # x
        pl.BlockSpec((1, depth, 1, Ch, HW), lambda b: (sid, 0, b, 0, 0)),      # h
        pl.BlockSpec((1, depth, 1, Ch, HW), lambda b: (sid, 0, b, 0, 0)),      # c
        pl.BlockSpec((1, depth, 9, 4 * Ch, Ct), lambda b: (sid, 0, 0, 0, 0)),  # w
        pl.BlockSpec((1, depth, 4 * Ch, 1), lambda b: (sid, 0, 0, 0)),         # b
        pl.BlockSpec(w1.shape, lambda b: (0, 0)),
        pl.BlockSpec(b1.shape, lambda b: (0, 0)),
        pl.BlockSpec(w2.shape, lambda b: (0, 0)),
        pl.BlockSpec(b2.shape, lambda b: (0, 0)),
    ]
    out_specs = (
        pl.BlockSpec((1, depth, 1, Ch, HW), lambda b: (sid, 0, b, 0, 0)),      # h'
        pl.BlockSpec((1, depth, 1, Ch, HW), lambda b: (sid, 0, b, 0, 0)),      # c'
        pl.BlockSpec((1, C, HW), lambda b: (b, 0, 0)),                         # y
    )
    out_shape = (
        jax.ShapeDtypeStruct(h_full.shape, jnp.float32),
        jax.ShapeDtypeStruct(c_full.shape, jnp.float32),
        jax.ShapeDtypeStruct((B, C, HW), jnp.float32),
    )
    return pl.pallas_call(
        kernel,
        out_shape=out_shape,
        grid=(B,),    # TODO(synk): add a row-tile (+1-row halo) axis for huge BEV maps
        in_specs=in_specs,
        out_specs=out_specs,
        scratch_shapes=[
            pltpu.VMEM((Ct, HW + 2 * (W + 1)), jnp.bfloat16),  # flat-padded concat slab
        ],
        # In-place update of the selected sensor's latents (KV-cache pattern):
        # unwritten sensor blocks keep their input values.
        input_output_aliases={1: 0, 2: 1},
        compiler_params=pltpu.CompilerParams(
            dimension_semantics=("parallel",),
        ),
    )(x_cf, h_full, c_full, w_conv, b_conv, w1, b1, w2, b2)


# ----------------------------------------------------------------------------
# Model: parameter init + forward (mirrors the PyTorch module's semantics)
# ----------------------------------------------------------------------------
def init_params(key, *, num_sensors, depth, feature_channels, feature_size):
    C = feature_channels
    Ch = C // 2
    H, W = feature_size
    Ct = C + Ch

    def nrm(k, shape, scale=0.1):
        return scale * jax.random.normal(k, shape, jnp.float32)

    cnt = [0]

    def nk():
        k = jax.random.fold_in(key, cnt[0])
        cnt[0] += 1
        return k

    # Conv weights generated in HWIO (3,3,cin+Ch,4*Ch), gate order [i|f|o|g]
    # (= torch.split(combined_conv, hidden, dim=1)); input-channel order is
    # [layer input, hidden] (= torch.cat([x, h], dim=1)).  Layers d>0 are
    # zero-padded on the input-channel axis to Ct so all layers share one packed
    # (depth, 9, 4*Ch, Ct) slab; the kernel slices the true K per layer, so it
    # never relies on the zero columns.
    w_sensors, b_sensors = [], []
    for _ in range(num_sensors):
        ws, bs = [], []
        for d in range(depth):
            cin = C if d == 0 else Ch
            w = nrm(nk(), (3, 3, cin + Ch, 4 * Ch))
            b = nrm(nk(), (4 * Ch,))
            if cin + Ch < Ct:
                w = jnp.pad(w, ((0, 0), (0, 0), (0, Ct - (cin + Ch)), (0, 0)))
            # (ky,kx,ic,oc) -> (k, oc, ic): kernel computes W_k @ x_shift
            ws.append(jnp.transpose(w, (0, 1, 3, 2)).reshape(9, 4 * Ch, Ct))
            bs.append(b.reshape(4 * Ch, 1))
        w_sensors.append(jnp.stack(ws))
        b_sensors.append(jnp.stack(bs))

    return {
        # bf16 MXU inputs (accumulation, gates and c stay f32 inside the kernel).
        "w_conv": jnp.stack(w_sensors).astype(jnp.bfloat16),   # (S, depth, 9, 4Ch, Ct)
        "b_conv": jnp.stack(b_sensors),                        # (S, depth, 4Ch, 1) f32
        # Initial states keep the reference NCHW parameter shape.
        "init_sensor_h": nrm(nk(), (num_sensors, depth, 1, Ch, H, W), 1.0),
        "init_sensor_c": nrm(nk(), (num_sensors, depth, 1, Ch, H, W), 1.0),
        "latents": nrm(nk(), (num_sensors, 1, H, W, C), 1.0),
        # MLP in PyTorch (out, in) convention; kernel applies it as W @ h.
        "mlp_w1": nrm(nk(), (2 * Ch, Ch)).astype(jnp.bfloat16),
        "mlp_b1": nrm(nk(), (2 * Ch, 1)),
        "mlp_w2": nrm(nk(), (C, 2 * Ch)).astype(jnp.bfloat16),
        "mlp_b2": nrm(nk(), (C, 1)),
    }


def init_latents(params, batch_size):
    """Latents carried between forward calls.

    h/c are stored channels-first-flat: (S, depth, B, Ch, H*W) f32, so the
    kernel reads/writes them with pixels on lanes and no relayouts; `output`
    keeps the reference (S, B, H, W, C) layout.
    """
    S, depth, _, Ch, H, W = params["init_sensor_h"].shape
    C = params["latents"].shape[-1]

    def cf_flat(p):                  # (S,depth,1,Ch,H,W) -> (S,depth,B,Ch,H*W)
        p = p.reshape(S, depth, 1, Ch, H * W)
        return jnp.broadcast_to(p, (S, depth, batch_size, Ch, H * W))

    return {
        "h": cf_flat(params["init_sensor_h"]),
        "c": cf_flat(params["init_sensor_c"]),
        "output": jnp.broadcast_to(params["latents"],
                                   (S, batch_size, H, W, C)),
    }


def forward(params, data, sensor_id, latents=None):
    """Mirrors CenterPointConvLSTM.forward; returns (combined_output, new_latents).

    sensor_id must be a static Python int (it selects per-sensor parameters,
    exactly like indexing the nn.ModuleList in the reference module).
    """
    S, depth, _, Ch, H, W = params["init_sensor_h"].shape
    C = params["latents"].shape[-1]

    B = data.shape[0] if data is not None else latents["h"].shape[2]
    if latents is None:
        latents = init_latents(params, B)
    if data is None:
        data = latents["output"][sensor_id]                      # (B, H, W, C)

    # Layout plumbing only: present the kernel a pixels-on-lanes slab.
    x_cf = jnp.transpose(data.astype(jnp.float32).reshape(B, H * W, C),
                         (0, 2, 1))                              # (B, C, H*W)

    h_new, c_new, y_cf = _fused_forward(
        x_cf, latents["h"], latents["c"],
        params["w_conv"], params["b_conv"],
        params["mlp_w1"], params["mlp_b1"], params["mlp_w2"], params["mlp_b2"],
        sensor_id=sensor_id, H=H, W=W)

    sensor_out = jnp.transpose(y_cf, (0, 2, 1)).reshape(B, H, W, C)
    new_latents = {
        "h": h_new,      # full latent arrays, sensor slice updated in-place
        "c": c_new,
        "output": latents["output"].at[sensor_id].set(sensor_out),
    }
    # Same row-major reshape as torch: (S, B, H, W, C) -> (B, S*H*W, C).
    combined = new_latents["output"].reshape(B, S * H * W, C)
    return combined, new_latents


# ----------------------------------------------------------------------------
# Pure-JAX f32 reference of one forward step (validates gate order / packing)
# ----------------------------------------------------------------------------
def _reference_forward(params, data, sensor_id, latents):
    S, depth, _, Ch, H, W = params["init_sensor_h"].shape
    C = params["latents"].shape[-1]
    B = data.shape[0]
    Ct = C + Ch

    h_st = latents["h"][sensor_id].reshape(depth, B, Ch, H, W)
    h_st = jnp.transpose(h_st, (0, 1, 3, 4, 2))                  # NHWC
    c_st = latents["c"][sensor_id].reshape(depth, B, Ch, H, W)
    c_st = jnp.transpose(c_st, (0, 1, 3, 4, 2))

    w_all = params["w_conv"][sensor_id].astype(jnp.float32)      # (depth,9,4Ch,Ct)
    w_all = jnp.transpose(w_all.reshape(depth, 3, 3, 4 * Ch, Ct),
                          (0, 1, 2, 4, 3))                       # HWIO
    b_all = params["b_conv"][sensor_id].reshape(depth, 4 * Ch)

    x = data.astype(jnp.float32)
    hs, cs = [], []
    for d in range(depth):
        pad_c = Ct - x.shape[-1] - Ch
        comb = jnp.concatenate(
            [x, h_st[d], jnp.zeros((B, H, W, pad_c), jnp.float32)], axis=-1)
        cc = jax.lax.conv_general_dilated(
            comb, w_all[d], window_strides=(1, 1), padding="SAME",
            dimension_numbers=("NHWC", "HWIO", "NHWC")) + b_all[d]
        i = jax.nn.sigmoid(cc[..., 0:Ch])
        f = jax.nn.sigmoid(cc[..., Ch:2 * Ch])
        o = jax.nn.sigmoid(cc[..., 2 * Ch:3 * Ch])
        g = jnp.tanh(cc[..., 3 * Ch:4 * Ch])
        c = f * c_st[d] + i * g
        h = o * jnp.tanh(c)
        hs.append(jnp.transpose(h, (0, 3, 1, 2)).reshape(B, Ch, H * W))
        cs.append(jnp.transpose(c, (0, 3, 1, 2)).reshape(B, Ch, H * W))
        x = h
    xf = x.reshape(B * H * W, Ch)
    w1 = params["mlp_w1"].astype(jnp.float32)
    w2 = params["mlp_w2"].astype(jnp.float32)
    h1 = jnp.maximum(xf @ w1.T + params["mlp_b1"].reshape(-1), 0.0)
    y = h1 @ w2.T + params["mlp_b2"].reshape(-1)
    return jnp.stack(hs), jnp.stack(cs), y.reshape(B, H, W, C)


# ----------------------------------------------------------------------------
if __name__ == "__main__":
    key = jax.random.PRNGKey(0)
    kp, kd = jax.random.split(key)

    # Small, module-consistent shapes (num_latents / latent_dim are unused by
    # the reference forward).
    feature_channels = 8          # hidden = feature_channels // 2 = 4
    feature_size = (16, 16)
    num_sensors = 2
    depth = 2
    B = 2
    H, W = feature_size

    params = init_params(kp, num_sensors=num_sensors, depth=depth,
                         feature_channels=feature_channels,
                         feature_size=feature_size)
    data = jax.random.normal(kd, (B, H, W, feature_channels), jnp.float32)

    fwd = jax.jit(forward, static_argnames=("sensor_id",))

    # Step 1: fresh latents (latents=None path), explicit data, sensor 0.
    combined, latents1 = fwd(params, data, sensor_id=0)
    combined = jax.block_until_ready(combined)
    assert combined.shape == (B, num_sensors * H * W, feature_channels)
    assert bool(jnp.all(jnp.isfinite(combined)))

    # Numerical check vs. pure-JAX f32 reference (loose tol: bf16 MXU inputs).
    latents0 = init_latents(params, B)   # identical to what fwd built internally
    ref_h, ref_c, ref_y = _reference_forward(params, data, 0, latents0)
    assert float(jnp.max(jnp.abs(latents1["h"][0] - ref_h))) < 1e-1
    assert float(jnp.max(jnp.abs(latents1["c"][0] - ref_c))) < 1e-1
    assert float(jnp.max(jnp.abs(latents1["output"][0] - ref_y))) < 1e-1
    # The aliased in-place update must leave the other sensor's state untouched.
    assert bool(jnp.array_equal(latents1["h"][1], latents0["h"][1]))
    assert bool(jnp.array_equal(latents1["c"][1], latents0["c"][1]))

    # Step 2: carry latents forward, data=None path (uses stored output), sensor 1.
    combined2, latents2 = fwd(params, None, sensor_id=1, latents=latents1)
    combined2 = jax.block_until_ready(combined2)
    assert combined2.shape == combined.shape
    assert bool(jnp.all(jnp.isfinite(combined2)))

    print("KERNEL_OK")
</pallas_src>

<mosaic_0001>
module attributes {stable_mosaic.version = 11 : i64} {
  func.func @_fused_kernel(%arg0: i32, %arg1: memref<1x8x256xf32, #tpu.memory_space<vmem>>, %arg2: memref<1x2x1x4x256xf32, #tpu.memory_space<vmem>>, %arg3: memref<1x2x1x4x256xf32, #tpu.memory_space<vmem>>, %arg4: memref<1x2x9x16x12xbf16, #tpu.memory_space<vmem>>, %arg5: memref<1x2x16x1xf32, #tpu.memory_space<vmem>>, %arg6: memref<8x4xbf16, #tpu.memory_space<vmem>>, %arg7: memref<8x1xf32, #tpu.memory_space<vmem>>, %arg8: memref<8x8xbf16, #tpu.memory_space<vmem>>, %arg9: memref<8x1xf32, #tpu.memory_space<vmem>>, %arg10: memref<1x2x1x4x256xf32, #tpu.memory_space<vmem>>, %arg11: memref<1x2x1x4x256xf32, #tpu.memory_space<vmem>>, %arg12: memref<1x8x256xf32, #tpu.memory_space<vmem>>, %arg13: memref<12x290xbf16, #tpu.memory_space<vmem>>) attributes {dimension_semantics = [#tpu.dimension_semantics<parallel>], iteration_bounds = array<i64: 2>, scalar_prefetch = 0 : i64, scratch_operands = 1 : i64, tpu.core_type = #tpu.core_type<tc>, window_params = [{transform_indices = @transform_0, window_bounds = array<i64: 1, 8, 256>}, {transform_indices = @transform_1, window_bounds = array<i64: 1, 2, 1, 4, 256>}, {transform_indices = @transform_2, window_bounds = array<i64: 1, 2, 1, 4, 256>}, {transform_indices = @transform_3, window_bounds = array<i64: 1, 2, 9, 16, 12>}, {transform_indices = @transform_4, window_bounds = array<i64: 1, 2, 16, 1>}, {pipeline_mode = #tpu.pipeline_mode<synchronous>, transform_indices = @transform_5, window_bounds = array<i64: 8, 4>}, {pipeline_mode = #tpu.pipeline_mode<synchronous>, transform_indices = @transform_6, window_bounds = array<i64: 8, 1>}, {pipeline_mode = #tpu.pipeline_mode<synchronous>, transform_indices = @transform_7, window_bounds = array<i64: 8, 8>}, {pipeline_mode = #tpu.pipeline_mode<synchronous>, transform_indices = @transform_8, window_bounds = array<i64: 8, 1>}, {transform_indices = @transform_9, window_bounds = array<i64: 1, 2, 1, 4, 256>}, {transform_indices = @transform_10, window_bounds = array<i64: 1, 2, 1, 4, 256>}, {transform_indices = @transform_11, window_bounds = array<i64: 1, 8, 256>}]} {
    %cst = arith.constant 0.000000e+00 : bf16
    %0 = vector.broadcast %cst : bf16 to vector<12x17xbf16>
    %c0 = arith.constant 0 : index
    %c0_0 = arith.constant 0 : index
    %1 = vector.load %arg13[%c0, %c0_0] : memref<12x290xbf16, #tpu.memory_space<vmem>>, vector<12x17xbf16>
    tpu.vector_store %arg13[%c0, %c0_0], %0 {strides = array<i32>} : memref<12x290xbf16, #tpu.memory_space<vmem>>, vector<12x17xbf16>,
    %cst_1 = arith.constant 0.000000e+00 : bf16
    %2 = vector.broadcast %cst_1 : bf16 to vector<12x17xbf16>
    %c0_2 = arith.constant 0 : index
    %c273 = arith.constant 273 : index
    %3 = vector.load %arg13[%c0_2, %c273] : memref<12x290xbf16, #tpu.memory_space<vmem>>, vector<12x17xbf16>
    tpu.vector_store %arg13[%c0_2, %c273], %2 {strides = array<i32>} : memref<12x290xbf16, #tpu.memory_space<vmem>>, vector<12x17xbf16>,
    %4 = tpu.iota {dimensions = array<i32: 1>} : vector<1x256xi32>
    %c16_i32 = arith.constant 16 : i32
    %c0_i32 = arith.constant 0 : i32
    %5 = arith.cmpi eq, %c16_i32, %c0_i32 : i32
    %c1_i32 = arith.constant 1 : i32
    %6 = arith.select %5, %c1_i32, %c16_i32 : i32
    %7 = vector.broadcast %6 : i32 to vector<1x256xi32>
    %8 = arith.remsi %4, %7 : vector<1x256xi32>
    %c0_i32_3 = arith.constant 0 : i32
    %9 = vector.broadcast %c0_i32_3 : i32 to vector<1x256xi32>
    %10 = arith.cmpi ne, %8, %9 : vector<1x256xi32>
    %c0_i32_4 = arith.constant 0 : i32
    %11 = vector.broadcast %c0_i32_4 : i32 to vector<1x256xi32>
    %12 = arith.cmpi slt, %8, %11 : vector<1x256xi32>
    %c0_i32_5 = arith.constant 0 : i32
    %13 = arith.cmpi slt, %6, %c0_i32_5 : i32
    %14 = vector.broadcast %13 : i1 to vector<1x256xi1>
    %15 = vector.broadcast %14 : vector<1x256xi1> to vector<1x256xi1>
    %16 = arith.xori %12, %15 : vector<1x256xi1>
    %17 = arith.andi %16, %10 : vector<1x256xi1>
    %18 = vector.broadcast %6 : i32 to vector<1x256xi32>
    %19 = arith.addi %8, %18 : vector<1x256xi32>
    %20 = arith.select %17, %19, %8 : vector<1x256xi1>, vector<1x256xi32>
    %c1_i32_6 = arith.constant 1 : i32
    %21 = vector.broadcast %c1_i32_6 : i32 to vector<1x256xi32>
    %22 = arith.cmpi sge, %20, %21 : vector<1x256xi32>
    %c14_i32 = arith.constant 14 : i32
    %23 = vector.broadcast %c14_i32 : i32 to vector<1x256xi32>
    %24 = arith.cmpi sle, %20, %23 : vector<1x256xi32>
    %c0_7 = arith.constant 0 : index
    %c0_8 = arith.constant 0 : index
    %c0_9 = arith.constant 0 : index
    %25 = vector.load %arg1[%c0_7, %c0_8, %c0_9] : memref<1x8x256xf32, #tpu.memory_space<vmem>>, vector<1x8x256xf32>
    %26 = vector.shape_cast %25 : vector<1x8x256xf32> to vector<8x256xf32>
    %27 = arith.truncf %26 : vector<8x256xf32> to vector<8x256xbf16>
    %c0_10 = arith.constant 0 : index
    %c17 = arith.constant 17 : index
    %28 = vector.load %arg13[%c0_10, %c17] : memref<12x290xbf16, #tpu.memory_space<vmem>>, vector<8x256xbf16>
    tpu.vector_store %arg13[%c0_10, %c17], %27 {strides = array<i32>} : memref<12x290xbf16, #tpu.memory_space<vmem>>, vector<8x256xbf16>,
    %c0_11 = arith.constant 0 : index
    %c0_12 = arith.constant 0 : index
    %c0_13 = arith.constant 0 : index
    %c0_14 = arith.constant 0 : index
    %c0_15 = arith.constant 0 : index
    %29 = vector.load %arg2[%c0_11, %c0_12, %c0_13, %c0_14, %c0_15] : memref<1x2x1x4x256xf32, #tpu.memory_space<vmem>>, vector<1x1x1x4x256xf32>
    %30 = vector.shape_cast %29 : vector<1x1x1x4x256xf32> to vector<4x256xf32>
    %31 = arith.truncf %30 : vector<4x256xf32> to vector<4x256xbf16>
    %c8 = arith.constant 8 : index
    %c17_16 = arith.constant 17 : index
    %32 = vector.load %arg13[%c8, %c17_16] : memref<12x290xbf16, #tpu.memory_space<vmem>>, vector<4x256xbf16>
    tpu.vector_store %arg13[%c8, %c17_16], %31 {strides = array<i32>} : memref<12x290xbf16, #tpu.memory_space<vmem>>, vector<4x256xbf16>,
    %cst_17 = arith.constant 0.000000e+00 : f32
    %33 = vector.broadcast %cst_17 : f32 to vector<16x256xf32>
    %c0_18 = arith.constant 0 : index
    %c0_19 = arith.constant 0 : index
    %34 = vector.load %arg13[%c0_18, %c0_19] : memref<12x290xbf16, #tpu.memory_space<vmem>>, vector<12x256xbf16>
    %cst_20 = arith.constant 0.000000e+00 : bf16
    %35 = vector.shape_cast %22 : vector<1x256xi1> to vector<1x256xi1>
    %36 = vector.broadcast %35 : vector<1x256xi1> to vector<12x256xi1>
    %37 = vector.broadcast %cst_20 : bf16 to vector<12x256xbf16>
    %38 = arith.select %36, %34, %37 : vector<12x256xi1>, vector<12x256xbf16>
    %c0_21 = arith.constant 0 : index
    %c0_22 = arith.constant 0 : index
    %c0_23 = arith.constant 0 : index
    %c0_24 = arith.constant 0 : index
    %c0_25 = arith.constant 0 : index
    %39 = vector.load %arg4[%c0_21, %c0_22, %c0_23, %c0_24, %c0_25] : memref<1x2x9x16x12xbf16, #tpu.memory_space<vmem>>, vector<1x1x1x16x12xbf16>
    %40 = vector.shape_cast %39 : vector<1x1x1x16x12xbf16> to vector<16x12xbf16>
    %cst_26 = arith.constant dense<0.000000e+00> : vector<16x256xf32>
    %41 = tpu.matmul %40, %38, %cst_26 {dimension_numbers = #tpu.dot_dimension_numbers<[1], [0], [0], [1], [0, 0, 1, 1], [], []>} : vector<16x12xbf16>, vector<12x256xbf16>, vector<16x256xf32> -> vector<16x256xf32>
    %42 = arith.addf %33, %41 : vector<16x256xf32>
    %c0_27 = arith.constant 0 : index
    %c1 = arith.constant 1 : index
    %43 = vector.load %arg13[%c0_27, %c1] : memref<12x290xbf16, #tpu.memory_space<vmem>>, vector<12x256xbf16>
    %c0_28 = arith.constant 0 : index
    %c0_29 = arith.constant 0 : index
    %c1_30 = arith.constant 1 : index
    %c0_31 = arith.constant 0 : index
    %c0_32 = arith.constant 0 : index
    %44 = vector.load %arg4[%c0_28, %c0_29, %c1_30, %c0_31, %c0_32] : memref<1x2x9x16x12xbf16, #tpu.memory_space<vmem>>, vector<1x1x1x16x12xbf16>
    %45 = vector.shape_cast %44 : vector<1x1x1x16x12xbf16> to vector<16x12xbf16>
    %cst_33 = arith.constant dense<0.000000e+00> : vector<16x256xf32>
    %46 = tpu.matmul %45, %43, %cst_33 {dimension_numbers = #tpu.dot_dimension_numbers<[1], [0], [0], [1], [0, 0, 1, 1], [], []>} : vector<16x12xbf16>, vector<12x256xbf16>, vector<16x256xf32> -> vector<16x256xf32>
    %47 = arith.addf %42, %46 : vector<16x256xf32>
    %c0_34 = arith.constant 0 : index
    %c2 = arith.constant 2 : index
    %48 = vector.load %arg13[%c0_34, %c2] : memref<12x290xbf16, #tpu.memory_space<vmem>>, vector<12x256xbf16>
    %cst_35 = arith.constant 0.000000e+00 : bf16
    %49 = vector.shape_cast %24 : vector<1x256xi1> to vector<1x256xi1>
    %50 = vector.broadcast %49 : vector<1x256xi1> to vector<12x256xi1>
    %51 = vector.broadcast %cst_35 : bf16 to vector<12x256xbf16>
    %52 = arith.select %50, %48, %51 : vector<12x256xi1>, vector<12x256xbf16>
    %c0_36 = arith.constant 0 : index
    %c0_37 = arith.constant 0 : index
    %c2_38 = arith.constant 2 : index
    %c0_39 = arith.constant 0 : index
    %c0_40 = arith.constant 0 : index
    %53 = vector.load %arg4[%c0_36, %c0_37, %c2_38, %c0_39, %c0_40] : memref<1x2x9x16x12xbf16, #tpu.memory_space<vmem>>, vector<1x1x1x16x12xbf16>
    %54 = vector.shape_cast %53 : vector<1x1x1x16x12xbf16> to vector<16x12xbf16>
    %cst_41 = arith.constant dense<0.000000e+00> : vector<16x256xf32>
    %55 = tpu.matmul %54, %52, %cst_41 {dimension_numbers = #tpu.dot_dimension_numbers<[1], [0], [0], [1], [0, 0, 1, 1], [], []>} : vector<16x12xbf16>, vector<12x256xbf16>, vector<16x256xf32> -> vector<16x256xf32>
    %56 = arith.addf %47, %55 : vector<16x256xf32>
    %c0_42 = arith.constant 0 : index
    %c16 = arith.constant 16 : index
    %57 = vector.load %arg13[%c0_42, %c16] : memref<12x290xbf16, #tpu.memory_space<vmem>>, vector<12x256xbf16>
    %cst_43 = arith.constant 0.000000e+00 : bf16
    %58 = vector.shape_cast %22 : vector<1x256xi1> to vector<1x256xi1>
    %59 = vector.broadcast %58 : vector<1x256xi1> to vector<12x256xi1>
    %60 = vector.broadcast %cst_43 : bf16 to vector<12x256xbf16>
    %61 = arith.select %59, %57, %60 : vector<12x256xi1>, vector<12x256xbf16>
    %c0_44 = arith.constant 0 : index
    %c0_45 = arith.constant 0 : index
    %c3 = arith.constant 3 : index
    %c0_46 = arith.constant 0 : index
    %c0_47 = arith.constant 0 : index
    %62 = vector.load %arg4[%c0_44, %c0_45, %c3, %c0_46, %c0_47] : memref<1x2x9x16x12xbf16, #tpu.memory_space<vmem>>, vector<1x1x1x16x12xbf16>
    %63 = vector.shape_cast %62 : vector<1x1x1x16x12xbf16> to vector<16x12xbf16>
    %cst_48 = arith.constant dense<0.000000e+00> : vector<16x256xf32>
    %64 = tpu.matmul %63, %61, %cst_48 {dimension_numbers = #tpu.dot_dimension_numbers<[1], [0], [0], [1], [0, 0, 1, 1], [], []>} : vector<16x12xbf16>, vector<12x256xbf16>, vector<16x256xf32> -> vector<16x256xf32>
    %65 = arith.addf %56, %64 : vector<16x256xf32>
    %c0_49 = arith.constant 0 : index
    %c17_50 = arith.constant 17 : index
    %66 = vector.load %arg13[%c0_49, %c17_50] : memref<12x290xbf16, #tpu.memory_space<vmem>>, vector<12x256xbf16>
    %c0_51 = arith.constant 0 : index
    %c0_52 = arith.constant 0 : index
    %c4 = arith.constant 4 : index
    %c0_53 = arith.constant 0 : index
    %c0_54 = arith.constant 0 : index
    %67 = vector.load %arg4[%c0_51, %c0_52, %c4, %c0_53, %c0_54] : memref<1x2x9x16x12xbf16, #tpu.memory_space<vmem>>, vector<1x1x1x16x12xbf16>
    %68 = vector.shape_cast %67 : vector<1x1x1x16x12xbf16> to vector<16x12xbf16>
    %cst_55 = arith.constant dense<0.000000e+00> : vector<16x256xf32>
    %69 = tpu.matmul %68, %66, %cst_55 {dimension_numbers = #tpu.dot_dimension_numbers<[1], [0], [0], [1], [0, 0, 1, 1], [], []>} : vector<16x12xbf16>, vector<12x256xbf16>, vector<16x256xf32> -> vector<16x256xf32>
    %70 = arith.addf %65, %69 : vector<16x256xf32>
    %c0_56 = arith.constant 0 : index
    %c18 = arith.constant 18 : index
    %71 = vector.load %arg13[%c0_56, %c18] : memref<12x290xbf16, #tpu.memory_space<vmem>>, vector<12x256xbf16>
    %cst_57 = arith.constant 0.000000e+00 : bf16
    %72 = vector.shape_cast %24 : vector<1x256xi1> to vector<1x256xi1>
    %73 = vector.broadcast %72 : vector<1x256xi1> to vector<12x256xi1>
    %74 = vector.broadcast %cst_57 : bf16 to vector<12x256xbf16>
    %75 = arith.select %73, %71, %74 : vector<12x256xi1>, vector<12x256xbf16>
    %c0_58 = arith.constant 0 : index
    %c0_59 = arith.constant 0 : index
    %c5 = arith.constant 5 : index
    %c0_60 = arith.constant 0 : index
    %c0_61 = arith.constant 0 : index
    %76 = vector.load %arg4[%c0_58, %c0_59, %c5, %c0_60, %c0_61] : memref<1x2x9x16x12xbf16, #tpu.memory_space<vmem>>, vector<1x1x1x16x12xbf16>
    %77 = vector.shape_cast %76 : vector<1x1x1x16x12xbf16> to vector<16x12xbf16>
    %cst_62 = arith.constant dense<0.000000e+00> : vector<16x256xf32>
    %78 = tpu.matmul %77, %75, %cst_62 {dimension_numbers = #tpu.dot_dimension_numbers<[1], [0], [0], [1], [0, 0, 1, 1], [], []>} : vector<16x12xbf16>, vector<12x256xbf16>, vector<16x256xf32> -> vector<16x256xf32>
    %79 = arith.addf %70, %78 : vector<16x256xf32>
    %c0_63 = arith.constant 0 : index
    %c32 = arith.constant 32 : index
    %80 = vector.load %arg13[%c0_63, %c32] : memref<12x290xbf16, #tpu.memory_space<vmem>>, vector<12x256xbf16>
    %cst_64 = arith.constant 0.000000e+00 : bf16
    %81 = vector.shape_cast %22 : vector<1x256xi1> to vector<1x256xi1>
    %82 = vector.broadcast %81 : vector<1x256xi1> to vector<12x256xi1>
    %83 = vector.broadcast %cst_64 : bf16 to vector<12x256xbf16>
    %84 = arith.select %82, %80, %83 : vector<12x256xi1>, vector<12x256xbf16>
    %c0_65 = arith.constant 0 : index
    %c0_66 = arith.constant 0 : index
    %c6 = arith.constant 6 : index
    %c0_67 = arith.constant 0 : index
    %c0_68 = arith.constant 0 : index
    %85 = vector.load %arg4[%c0_65, %c0_66, %c6, %c0_67, %c0_68] : memref<1x2x9x16x12xbf16, #tpu.memory_space<vmem>>, vector<1x1x1x16x12xbf16>
    %86 = vector.shape_cast %85 : vector<1x1x1x16x12xbf16> to vector<16x12xbf16>
    %cst_69 = arith.constant dense<0.000000e+00> : vector<16x256xf32>
    %87 = tpu.matmul %86, %84, %cst_69 {dimension_numbers = #tpu.dot_dimension_numbers<[1], [0], [0], [1], [0, 0, 1, 1], [], []>} : vector<16x12xbf16>, vector<12x256xbf16>, vector<16x256xf32> -> vector<16x256xf32>
    %88 = arith.addf %79, %87 : vector<16x256xf32>
    %c0_70 = arith.constant 0 : index
    %c33 = arith.constant 33 : index
    %89 = vector.load %arg13[%c0_70, %c33] : memref<12x290xbf16, #tpu.memory_space<vmem>>, vector<12x256xbf16>
    %c0_71 = arith.constant 0 : index
    %c0_72 = arith.constant 0 : index
    %c7 = arith.constant 7 : index
    %c0_73 = arith.constant 0 : index
    %c0_74 = arith.constant 0 : index
    %90 = vector.load %arg4[%c0_71, %c0_72, %c7, %c0_73, %c0_74] : memref<1x2x9x16x12xbf16, #tpu.memory_space<vmem>>, vector<1x1x1x16x12xbf16>
    %91 = vector.shape_cast %90 : vector<1x1x1x16x12xbf16> to vector<16x12xbf16>
    %cst_75 = arith.constant dense<0.000000e+00> : vector<16x256xf32>
    %92 = tpu.matmul %91, %89, %cst_75 {dimension_numbers = #tpu.dot_dimension_numbers<[1], [0], [0], [1], [0, 0, 1, 1], [], []>} : vector<16x12xbf16>, vector<12x256xbf16>, vector<16x256xf32> -> vector<16x256xf32>
    %93 = arith.addf %88, %92 : vector<16x256xf32>
    %c0_76 = arith.constant 0 : index
    %c34 = arith.constant 34 : index
    %94 = vector.load %arg13[%c0_76, %c34] : memref<12x290xbf16, #tpu.memory_space<vmem>>, vector<12x256xbf16>
    %cst_77 = arith.constant 0.000000e+00 : bf16
    %95 = vector.shape_cast %24 : vector<1x256xi1> to vector<1x256xi1>
    %96 = vector.broadcast %95 : vector<1x256xi1> to vector<12x256xi1>
    %97 = vector.broadcast %cst_77 : bf16 to vector<12x256xbf16>
    %98 = arith.select %96, %94, %97 : vector<12x256xi1>, vector<12x256xbf16>
    %c0_78 = arith.constant 0 : index
    %c0_79 = arith.constant 0 : index
    %c8_80 = arith.constant 8 : index
    %c0_81 = arith.constant 0 : index
    %c0_82 = arith.constant 0 : index
    %99 = vector.load %arg4[%c0_78, %c0_79, %c8_80, %c0_81, %c0_82] : memref<1x2x9x16x12xbf16, #tpu.memory_space<vmem>>, vector<1x1x1x16x12xbf16>
    %100 = vector.shape_cast %99 : vector<1x1x1x16x12xbf16> to vector<16x12xbf16>
    %cst_83 = arith.constant dense<0.000000e+00> : vector<16x256xf32>
    %101 = tpu.matmul %100, %98, %cst_83 {dimension_numbers = #tpu.dot_dimension_numbers<[1], [0], [0], [1], [0, 0, 1, 1], [], []>} : vector<16x12xbf16>, vector<12x256xbf16>, vector<16x256xf32> -> vector<16x256xf32>
    %102 = arith.addf %93, %101 : vector<16x256xf32>
    %c0_84 = arith.constant 0 : index
    %c0_85 = arith.constant 0 : index
    %c0_86 = arith.constant 0 : index
    %c0_87 = arith.constant 0 : index
    %103 = vector.load %arg5[%c0_84, %c0_85, %c0_86, %c0_87] : memref<1x2x16x1xf32, #tpu.memory_space<vmem>>, vector<1x1x16x1xf32>
    %104 = vector.shape_cast %103 : vector<1x1x16x1xf32> to vector<16x1xf32>
    %105 = vector.broadcast %104 : vector<16x1xf32> to vector<16x256xf32>
    %106 = arith.addf %102, %105 : vector<16x256xf32>
    %107 = vector.extract_strided_slice %106 {offsets = [0, 0], sizes = [12, 256], strides = [1, 1]} : vector<16x256xf32> to vector<12x256xf32>
    %108 = arith.negf %107 : vector<12x256xf32>
    %109 = math.exp %108 : vector<12x256xf32>
    %cst_88 = arith.constant 1.000000e+00 : f32
    %110 = vector.broadcast %cst_88 : f32 to vector<12x256xf32>
    %111 = arith.addf %110, %109 : vector<12x256xf32>
    %112 = arith.divf %110, %111 : vector<12x256xf32>
    %113 = vector.extract_strided_slice %112 {offsets = [0, 0], sizes = [4, 256], strides = [1, 1]} : vector<12x256xf32> to vector<4x256xf32>
    %114 = vector.extract_strided_slice %112 {offsets = [4, 0], sizes = [4, 256], strides = [1, 1]} : vector<12x256xf32> to vector<4x256xf32>
    %115 = vector.extract_strided_slice %112 {offsets = [8, 0], sizes = [4, 256], strides = [1, 1]} : vector<12x256xf32> to vector<4x256xf32>
    %116 = vector.extract_strided_slice %106 {offsets = [12, 0], sizes = [4, 256], strides = [1, 1]} : vector<16x256xf32> to vector<4x256xf32>
    %117 = math.tanh %116 : vector<4x256xf32>
    %c0_89 = arith.constant 0 : index
    %c0_90 = arith.constant 0 : index
    %c0_91 = arith.constant 0 : index
    %c0_92 = arith.constant 0 : index
    %c0_93 = arith.constant 0 : index
    %118 = vector.load %arg3[%c0_89, %c0_90, %c0_91, %c0_92, %c0_93] : memref<1x2x1x4x256xf32, #tpu.memory_space<vmem>>, vector<1x1x1x4x256xf32>
    %119 = vector.shape_cast %118 : vector<1x1x1x4x256xf32> to vector<4x256xf32>
    %120 = arith.mulf %114, %119 : vector<4x256xf32>
    %121 = arith.mulf %113, %117 : vector<4x256xf32>
    %122 = arith.addf %120, %121 : vector<4x256xf32>
    %123 = math.tanh %122 : vector<4x256xf32>
    %124 = arith.mulf %115, %123 : vector<4x256xf32>
    %c0_94 = arith.constant 0 : index
    %c0_95 = arith.constant 0 : index
    %c0_96 = arith.constant 0 : index
    %c0_97 = arith.constant 0 : index
    %c0_98 = arith.constant 0 : index
    %125 = vector.load %arg10[%c0_94, %c0_95, %c0_96, %c0_97, %c0_98] : memref<1x2x1x4x256xf32, #tpu.memory_space<vmem>>, vector<1x1x1x4x256xf32>
    %126 = vector.shape_cast %125 : vector<1x1x1x4x256xf32> to vector<4x256xf32>
    %127 = vector.shape_cast %124 : vector<4x256xf32> to vector<1x1x1x4x256xf32>
    tpu.vector_store %arg10[%c0_94, %c0_95, %c0_96, %c0_97, %c0_98], %127 {strides = array<i32>} : memref<1x2x1x4x256xf32, #tpu.memory_space<vmem>>, vector<1x1x1x4x256xf32>,
    %c0_99 = arith.constant 0 : index
    %c0_100 = arith.constant 0 : index
    %c0_101 = arith.constant 0 : index
    %c0_102 = arith.constant 0 : index
    %c0_103 = arith.constant 0 : index
    %128 = vector.load %arg11[%c0_99, %c0_100, %c0_101, %c0_102, %c0_103] : memref<1x2x1x4x256xf32, #tpu.memory_space<vmem>>, vector<1x1x1x4x256xf32>
    %129 = vector.shape_cast %128 : vector<1x1x1x4x256xf32> to vector<4x256xf32>
    %130 = vector.shape_cast %122 : vector<4x256xf32> to vector<1x1x1x4x256xf32>
    tpu.vector_store %arg11[%c0_99, %c0_100, %c0_101, %c0_102, %c0_103], %130 {strides = array<i32>} : memref<1x2x1x4x256xf32, #tpu.memory_space<vmem>>, vector<1x1x1x4x256xf32>,
    %131 = arith.truncf %124 : vector<4x256xf32> to vector<4x256xbf16>
    %c0_104 = arith.constant 0 : index
    %c17_105 = arith.constant 17 : index
    %132 = vector.load %arg13[%c0_104, %c17_105] : memref<12x290xbf16, #tpu.memory_space<vmem>>, vector<4x256xbf16>
    tpu.vector_store %arg13[%c0_104, %c17_105], %131 {strides = array<i32>} : memref<12x290xbf16, #tpu.memory_space<vmem>>, vector<4x256xbf16>,
    %c0_106 = arith.constant 0 : index
    %c1_107 = arith.constant 1 : index
    %c0_108 = arith.constant 0 : index
    %c0_109 = arith.constant 0 : index
    %c0_110 = arith.constant 0 : index
    %133 = vector.load %arg2[%c0_106, %c1_107, %c0_108, %c0_109, %c0_110] : memref<1x2x1x4x256xf32, #tpu.memory_space<vmem>>, vector<1x1x1x4x256xf32>
    %134 = vector.shape_cast %133 : vector<1x1x1x4x256xf32> to vector<4x256xf32>
    %135 = arith.truncf %134 : vector<4x256xf32> to vector<4x256xbf16>
    %c4_111 = arith.constant 4 : index
    %c17_112 = arith.constant 17 : index
    %136 = vector.load %arg13[%c4_111, %c17_112] : memref<12x290xbf16, #tpu.memory_space<vmem>>, vector<4x256xbf16>
    tpu.vector_store %arg13[%c4_111, %c17_112], %135 {strides = array<i32>} : memref<12x290xbf16, #tpu.memory_space<vmem>>, vector<4x256xbf16>,
    %cst_113 = arith.constant 0.000000e+00 : f32
    %137 = vector.broadcast %cst_113 : f32 to vector<16x256xf32>
    %c0_114 = arith.constant 0 : index
    %c0_115 = arith.constant 0 : index
    %138 = vector.load %arg13[%c0_114, %c0_115] : memref<12x290xbf16, #tpu.memory_space<vmem>>, vector<8x256xbf16>
    %cst_116 = arith.constant 0.000000e+00 : bf16
    %139 = vector.shape_cast %22 : vector<1x256xi1> to vector<1x256xi1>
    %140 = vector.broadcast %139 : vector<1x256xi1> to vector<8x256xi1>
    %141 = vector.broadcast %cst_116 : bf16 to vector<8x256xbf16>
    %142 = arith.select %140, %138, %141 : vector<8x256xi1>, vector<8x256xbf16>
    %c0_117 = arith.constant 0 : index
    %c1_118 = arith.constant 1 : index
    %c0_119 = arith.constant 0 : index
    %c0_120 = arith.constant 0 : index
    %c0_121 = arith.constant 0 : index
    %143 = vector.load %arg4[%c0_117, %c1_118, %c0_119, %c0_120, %c0_121] : memref<1x2x9x16x12xbf16, #tpu.memory_space<vmem>>, vector<1x1x1x16x8xbf16>
    %144 = vector.shape_cast %143 : vector<1x1x1x16x8xbf16> to vector<16x8xbf16>
    %cst_122 = arith.constant dense<0.000000e+00> : vector<16x256xf32>
    %145 = tpu.matmul %144, %142, %cst_122 {dimension_numbers = #tpu.dot_dimension_numbers<[1], [0], [0], [1], [0, 0, 1, 1], [], []>} : vector<16x8xbf16>, vector<8x256xbf16>, vector<16x256xf32> -> vector<16x256xf32>
    %146 = arith.addf %137, %145 : vector<16x256xf32>
    %c0_123 = arith.constant 0 : index
    %c1_124 = arith.constant 1 : index
    %147 = vector.load %arg13[%c0_123, %c1_124] : memref<12x290xbf16, #tpu.memory_space<vmem>>, vector<8x256xbf16>
    %c0_125 = arith.constant 0 : index
    %c1_126 = arith.constant 1 : index
    %c1_127 = arith.constant 1 : index
    %c0_128 = arith.constant 0 : index
    %c0_129 = arith.constant 0 : index
    %148 = vector.load %arg4[%c0_125, %c1_126, %c1_127, %c0_128, %c0_129] : memref<1x2x9x16x12xbf16, #tpu.memory_space<vmem>>, vector<1x1x1x16x8xbf16>
    %149 = vector.shape_cast %148 : vector<1x1x1x16x8xbf16> to vector<16x8xbf16>
    %cst_130 = arith.constant dense<0.000000e+00> : vector<16x256xf32>
    %150 = tpu.matmul %149, %147, %cst_130 {dimension_numbers = #tpu.dot_dimension_numbers<[1], [0], [0], [1], [0, 0, 1, 1], [], []>} : vector<16x8xbf16>, vector<8x256xbf16>, vector<16x256xf32> -> vector<16x256xf32>
    %151 = arith.addf %146, %150 : vector<16x256xf32>
    %c0_131 = arith.constant 0 : index
    %c2_132 = arith.constant 2 : index
    %152 = vector.load %arg13[%c0_131, %c2_132] : memref<12x290xbf16, #tpu.memory_space<vmem>>, vector<8x256xbf16>
    %cst_133 = arith.constant 0.000000e+00 : bf16
    %153 = vector.shape_cast %24 : vector<1x256xi1> to vector<1x256xi1>
    %154 = vector.broadcast %153 : vector<1x256xi1> to vector<8x256xi1>
    %155 = vector.broadcast %cst_133 : bf16 to vector<8x256xbf16>
    %156 = arith.select %154, %152, %155 : vector<8x256xi1>, vector<8x256xbf16>
    %c0_134 = arith.constant 0 : index
    %c1_135 = arith.constant 1 : index
    %c2_136 = arith.constant 2 : index
    %c0_137 = arith.constant 0 : index
    %c0_138 = arith.constant 0 : index
    %157 = vector.load %arg4[%c0_134, %c1_135, %c2_136, %c0_137, %c0_138] : memref<1x2x9x16x12xbf16, #tpu.memory_space<vmem>>, vector<1x1x1x16x8xbf16>
    %158 = vector.shape_cast %157 : vector<1x1x1x16x8xbf16> to vector<16x8xbf16>
    %cst_139 = arith.constant dense<0.000000e+00> : vector<16x256xf32>
    %159 = tpu.matmul %158, %156, %cst_139 {dimension_numbers = #tpu.dot_dimension_numbers<[1], [0], [0], [1], [0, 0, 1, 1], [], []>} : vector<16x8xbf16>, vector<8x256xbf16>, vector<16x256xf32> -> vector<16x256xf32>
    %160 = arith.addf %151, %159 : vector<16x256xf32>
    %c0_140 = arith.constant 0 : index
    %c16_141 = arith.constant 16 : index
    %161 = vector.load %arg13[%c0_140, %c16_141] : memref<12x290xbf16, #tpu.memory_space<vmem>>, vector<8x256xbf16>
    %cst_142 = arith.constant 0.000000e+00 : bf16
    %162 = vector.shape_cast %22 : vector<1x256xi1> to vector<1x256xi1>
    %163 = vector.broadcast %162 : vector<1x256xi1> to vector<8x256xi1>
    %164 = vector.broadcast %cst_142 : bf16 to vector<8x256xbf16>
    %165 = arith.select %163, %161, %164 : vector<8x256xi1>, vector<8x256xbf16>
    %c0_143 = arith.constant 0 : index
    %c1_144 = arith.constant 1 : index
    %c3_145 = arith.constant 3 : index
    %c0_146 = arith.constant 0 : index
    %c0_147 = arith.constant 0 : index
    %166 = vector.load %arg4[%c0_143, %c1_144, %c3_145, %c0_146, %c0_147] : memref<1x2x9x16x12xbf16, #tpu.memory_space<vmem>>, vector<1x1x1x16x8xbf16>
    %167 = vector.shape_cast %166 : vector<1x1x1x16x8xbf16> to vector<16x8xbf16>
    %cst_148 = arith.constant dense<0.000000e+00> : vector<16x256xf32>
    %168 = tpu.matmul %167, %165, %cst_148 {dimension_numbers = #tpu.dot_dimension_numbers<[1], [0], [0], [1], [0, 0, 1, 1], [], []>} : vector<16x8xbf16>, vector<8x256xbf16>, vector<16x256xf32> -> vector<16x256xf32>
    %169 = arith.addf %160, %168 : vector<16x256xf32>
    %c0_149 = arith.constant 0 : index
    %c17_150 = arith.constant 17 : index
    %170 = vector.load %arg13[%c0_149, %c17_150] : memref<12x290xbf16, #tpu.memory_space<vmem>>, vector<8x256xbf16>
    %c0_151 = arith.constant 0 : index
    %c1_152 = arith.constant 1 : index
    %c4_153 = arith.constant 4 : index
    %c0_154 = arith.constant 0 : index
    %c0_155 = arith.constant 0 : index
    %171 = vector.load %arg4[%c0_151, %c1_152, %c4_153, %c0_154, %c0_155] : memref<1x2x9x16x12xbf16, #tpu.memory_space<vmem>>, vector<1x1x1x16x8xbf16>
    %172 = vector.shape_cast %171 : vector<1x1x1x16x8xbf16> to vector<16x8xbf16>
    %cst_156 = arith.constant dense<0.000000e+00> : vector<16x256xf32>
    %173 = tpu.matmul %172, %170, %cst_156 {dimension_numbers = #tpu.dot_dimension_numbers<[1], [0], [0], [1], [0, 0, 1, 1], [], []>} : vector<16x8xbf16>, vector<8x256xbf16>, vector<16x256xf32> -> vector<16x256xf32>
    %174 = arith.addf %169, %173 : vector<16x256xf32>
    %c0_157 = arith.constant 0 : index
    %c18_158 = arith.constant 18 : index
    %175 = vector.load %arg13[%c0_157, %c18_158] : memref<12x290xbf16, #tpu.memory_space<vmem>>, vector<8x256xbf16>
    %cst_159 = arith.constant 0.000000e+00 : bf16
    %176 = vector.shape_cast %24 : vector<1x256xi1> to vector<1x256xi1>
    %177 = vector.broadcast %176 : vector<1x256xi1> to vector<8x256xi1>
    %178 = vector.broadcast %cst_159 : bf16 to vector<8x256xbf16>
    %179 = arith.select %177, %175, %178 : vector<8x256xi1>, vector<8x256xbf16>
    %c0_160 = arith.constant 0 : index
    %c1_161 = arith.constant 1 : index
    %c5_162 = arith.constant 5 : index
    %c0_163 = arith.constant 0 : index
    %c0_164 = arith.constant 0 : index
    %180 = vector.load %arg4[%c0_160, %c1_161, %c5_162, %c0_163, %c0_164] : memref<1x2x9x16x12xbf16, #tpu.memory_space<vmem>>, vector<1x1x1x16x8xbf16>
    %181 = vector.shape_cast %180 : vector<1x1x1x16x8xbf16> to vector<16x8xbf16>
    %cst_165 = arith.constant dense<0.000000e+00> : vector<16x256xf32>
    %182 = tpu.matmul %181, %179, %cst_165 {dimension_numbers = #tpu.dot_dimension_numbers<[1], [0], [0], [1], [0, 0, 1, 1], [], []>} : vector<16x8xbf16>, vector<8x256xbf16>, vector<16x256xf32> -> vector<16x256xf32>
    %183 = arith.addf %174, %182 : vector<16x256xf32>
    %c0_166 = arith.constant 0 : index
    %c32_167 = arith.constant 32 : index
    %184 = vector.load %arg13[%c0_166, %c32_167] : memref<12x290xbf16, #tpu.memory_space<vmem>>, vector<8x256xbf16>
    %cst_168 = arith.constant 0.000000e+00 : bf16
    %185 = vector.shape_cast %22 : vector<1x256xi1> to vector<1x256xi1>
    %186 = vector.broadcast %185 : vector<1x256xi1> to vector<8x256xi1>
    %187 = vector.broadcast %cst_168 : bf16 to vector<8x256xbf16>
    %188 = arith.select %186, %184, %187 : vector<8x256xi1>, vector<8x256xbf16>
    %c0_169 = arith.constant 0 : index
    %c1_170 = arith.constant 1 : index
    %c6_171 = arith.constant 6 : index
    %c0_172 = arith.constant 0 : index
    %c0_173 = arith.constant 0 : index
    %189 = vector.load %arg4[%c0_169, %c1_170, %c6_171, %c0_172, %c0_173] : memref<1x2x9x16x12xbf16, #tpu.memory_space<vmem>>, vector<1x1x1x16x8xbf16>
    %190 = vector.shape_cast %189 : vector<1x1x1x16x8xbf16> to vector<16x8xbf16>
    %cst_174 = arith.constant dense<0.000000e+00> : vector<16x256xf32>
    %191 = tpu.matmul %190, %188, %cst_174 {dimension_numbers = #tpu.dot_dimension_numbers<[1], [0], [0], [1], [0, 0, 1, 1], [], []>} : vector<16x8xbf16>, vector<8x256xbf16>, vector<16x256xf32> -> vector<16x256xf32>
    %192 = arith.addf %183, %191 : vector<16x256xf32>
    %c0_175 = arith.constant 0 : index
    %c33_176 = arith.constant 33 : index
    %193 = vector.load %arg13[%c0_175, %c33_176] : memref<12x290xbf16, #tpu.memory_space<vmem>>, vector<8x256xbf16>
    %c0_177 = arith.constant 0 : index
    %c1_178 = arith.constant 1 : index
    %c7_179 = arith.constant 7 : index
    %c0_180 = arith.constant 0 : index
    %c0_181 = arith.constant 0 : index
    %194 = vector.load %arg4[%c0_177, %c1_178, %c7_179, %c0_180, %c0_181] : memref<1x2x9x16x12xbf16, #tpu.memory_space<vmem>>, vector<1x1x1x16x8xbf16>
    %195 = vector.shape_cast %194 : vector<1x1x1x16x8xbf16> to vector<16x8xbf16>
    %cst_182 = arith.constant dense<0.000000e+00> : vector<16x256xf32>
    %196 = tpu.matmul %195, %193, %cst_182 {dimension_numbers = #tpu.dot_dimension_numbers<[1], [0], [0], [1], [0, 0, 1, 1], [], []>} : vector<16x8xbf16>, vector<8x256xbf16>, vector<16x256xf32> -> vector<16x256xf32>
    %197 = arith.addf %192, %196 : vector<16x256xf32>
    %c0_183 = arith.constant 0 : index
    %c34_184 = arith.constant 34 : index
    %198 = vector.load %arg13[%c0_183, %c34_184] : memref<12x290xbf16, #tpu.memory_space<vmem>>, vector<8x256xbf16>
    %cst_185 = arith.constant 0.000000e+00 : bf16
    %199 = vector.shape_cast %24 : vector<1x256xi1> to vector<1x256xi1>
    %200 = vector.broadcast %199 : vector<1x256xi1> to vector<8x256xi1>
    %201 = vector.broadcast %cst_185 : bf16 to vector<8x256xbf16>
    %202 = arith.select %200, %198, %201 : vector<8x256xi1>, vector<8x256xbf16>
    %c0_186 = arith.constant 0 : index
    %c1_187 = arith.constant 1 : index
    %c8_188 = arith.constant 8 : index
    %c0_189 = arith.constant 0 : index
    %c0_190 = arith.constant 0 : index
    %203 = vector.load %arg4[%c0_186, %c1_187, %c8_188, %c0_189, %c0_190] : memref<1x2x9x16x12xbf16, #tpu.memory_space<vmem>>, vector<1x1x1x16x8xbf16>
    %204 = vector.shape_cast %203 : vector<1x1x1x16x8xbf16> to vector<16x8xbf16>
    %cst_191 = arith.constant dense<0.000000e+00> : vector<16x256xf32>
    %205 = tpu.matmul %204, %202, %cst_191 {dimension_numbers = #tpu.dot_dimension_numbers<[1], [0], [0], [1], [0, 0, 1, 1], [], []>} : vector<16x8xbf16>, vector<8x256xbf16>, vector<16x256xf32> -> vector<16x256xf32>
    %206 = arith.addf %197, %205 : vector<16x256xf32>
    %c0_192 = arith.constant 0 : index
    %c1_193 = arith.constant 1 : index
    %c0_194 = arith.constant 0 : index
    %c0_195 = arith.constant 0 : index
    %207 = vector.load %arg5[%c0_192, %c1_193, %c0_194, %c0_195] : memref<1x2x16x1xf32, #tpu.memory_space<vmem>>, vector<1x1x16x1xf32>
    %208 = vector.shape_cast %207 : vector<1x1x16x1xf32> to vector<16x1xf32>
    %209 = vector.broadcast %208 : vector<16x1xf32> to vector<16x256xf32>
    %210 = arith.addf %206, %209 : vector<16x256xf32>
    %211 = vector.extract_strided_slice %210 {offsets = [0, 0], sizes = [12, 256], strides = [1, 1]} : vector<16x256xf32> to vector<12x256xf32>
    %212 = arith.negf %211 : vector<12x256xf32>
    %213 = math.exp %212 : vector<12x256xf32>
    %cst_196 = arith.constant 1.000000e+00 : f32
    %214 = vector.broadcast %cst_196 : f32 to vector<12x256xf32>
    %215 = arith.addf %214, %213 : vector<12x256xf32>
    %216 = arith.divf %214, %215 : vector<12x256xf32>
    %217 = vector.extract_strided_slice %216 {offsets = [0, 0], sizes = [4, 256], strides = [1, 1]} : vector<12x256xf32> to vector<4x256xf32>
    %218 = vector.extract_strided_slice %216 {offsets = [4, 0], sizes = [4, 256], strides = [1, 1]} : vector<12x256xf32> to vector<4x256xf32>
    %219 = vector.extract_strided_slice %216 {offsets = [8, 0], sizes = [4, 256], strides = [1, 1]} : vector<12x256xf32> to vector<4x256xf32>
    %220 = vector.extract_strided_slice %210 {offsets = [12, 0], sizes = [4, 256], strides = [1, 1]} : vector<16x256xf32> to vector<4x256xf32>
    %221 = math.tanh %220 : vector<4x256xf32>
    %c0_197 = arith.constant 0 : index
    %c1_198 = arith.constant 1 : index
    %c0_199 = arith.constant 0 : index
    %c0_200 = arith.constant 0 : index
    %c0_201 = arith.constant 0 : index
    %222 = vector.load %arg3[%c0_197, %c1_198, %c0_199, %c0_200, %c0_201] : memref<1x2x1x4x256xf32, #tpu.memory_space<vmem>>, vector<1x1x1x4x256xf32>
    %223 = vector.shape_cast %222 : vector<1x1x1x4x256xf32> to vector<4x256xf32>
    %224 = arith.mulf %218, %223 : vector<4x256xf32>
    %225 = arith.mulf %217, %221 : vector<4x256xf32>
    %226 = arith.addf %224, %225 : vector<4x256xf32>
    %227 = math.tanh %226 : vector<4x256xf32>
    %228 = arith.mulf %219, %227 : vector<4x256xf32>
    %c0_202 = arith.constant 0 : index
    %c1_203 = arith.constant 1 : index
    %c0_204 = arith.constant 0 : index
    %c0_205 = arith.constant 0 : index
    %c0_206 = arith.constant 0 : index
    %229 = vector.load %arg10[%c0_202, %c1_203, %c0_204, %c0_205, %c0_206] : memref<1x2x1x4x256xf32, #tpu.memory_space<vmem>>, vector<1x1x1x4x256xf32>
    %230 = vector.shape_cast %229 : vector<1x1x1x4x256xf32> to vector<4x256xf32>
    %231 = vector.shape_cast %228 : vector<4x256xf32> to vector<1x1x1x4x256xf32>
    tpu.vector_store %arg10[%c0_202, %c1_203, %c0_204, %c0_205, %c0_206], %231 {strides = array<i32>} : memref<1x2x1x4x256xf32, #tpu.memory_space<vmem>>, vector<1x1x1x4x256xf32>,
    %c0_207 = arith.constant 0 : index
    %c1_208 = arith.constant 1 : index
    %c0_209 = arith.constant 0 : index
    %c0_210 = arith.constant 0 : index
    %c0_211 = arith.constant 0 : index
    %232 = vector.load %arg11[%c0_207, %c1_208, %c0_209, %c0_210, %c0_211] : memref<1x2x1x4x256xf32, #tpu.memory_space<vmem>>, vector<1x1x1x4x256xf32>
    %233 = vector.shape_cast %232 : vector<1x1x1x4x256xf32> to vector<4x256xf32>
    %234 = vector.shape_cast %226 : vector<4x256xf32> to vector<1x1x1x4x256xf32>
    tpu.vector_store %arg11[%c0_207, %c1_208, %c0_209, %c0_210, %c0_211], %234 {strides = array<i32>} : memref<1x2x1x4x256xf32, #tpu.memory_space<vmem>>, vector<1x1x1x4x256xf32>,
    %235 = arith.truncf %228 : vector<4x256xf32> to vector<4x256xbf16>
    %c0_212 = arith.constant 0 : index
    %c0_213 = arith.constant 0 : index
    %236 = vector.load %arg6[%c0_212, %c0_213] : memref<8x4xbf16, #tpu.memory_space<vmem>>, vector<8x4xbf16>
    %cst_214 = arith.constant dense<0.000000e+00> : vector<8x256xf32>
    %237 = tpu.matmul %236, %235, %cst_214 {dimension_numbers = #tpu.dot_dimension_numbers<[1], [0], [0], [1], [0, 0, 1, 1], [], []>} : vector<8x4xbf16>, vector<4x256xbf16>, vector<8x256xf32> -> vector<8x256xf32>
    %c0_215 = arith.constant 0 : index
    %c0_216 = arith.constant 0 : index
    %238 = vector.load %arg7[%c0_215, %c0_216] : memref<8x1xf32, #tpu.memory_space<vmem>>, vector<8x1xf32>
    %239 = vector.broadcast %238 : vector<8x1xf32> to vector<8x256xf32>
    %240 = arith.addf %237, %239 : vector<8x256xf32>
    %cst_217 = arith.constant 0.000000e+00 : f32
    %241 = vector.broadcast %cst_217 : f32 to vector<8x256xf32>
    %242 = arith.maximumf %240, %241 : vector<8x256xf32>
    %c0_218 = arith.constant 0 : index
    %c0_219 = arith.constant 0 : index
    %243 = vector.load %arg8[%c0_218, %c0_219] : memref<8x8xbf16, #tpu.memory_space<vmem>>, vector<8x8xbf16>
    %244 = arith.truncf %242 : vector<8x256xf32> to vector<8x256xbf16>
    %cst_220 = arith.constant dense<0.000000e+00> : vector<8x256xf32>
    %245 = tpu.matmul %243, %244, %cst_220 {dimension_numbers = #tpu.dot_dimension_numbers<[1], [0], [0], [1], [0, 0, 1, 1], [], []>} : vector<8x8xbf16>, vector<8x256xbf16>, vector<8x256xf32> -> vector<8x256xf32>
    %c0_221 = arith.constant 0 : index
    %c0_222 = arith.constant 0 : index
    %246 = vector.load %arg9[%c0_221, %c0_222] : memref<8x1xf32, #tpu.memory_space<vmem>>, vector<8x1xf32>
    %247 = vector.broadcast %246 : vector<8x1xf32> to vector<8x256xf32>
    %248 = arith.addf %245, %247 : vector<8x256xf32>
    %c0_223 = arith.constant 0 : index
    %c0_224 = arith.constant 0 : index
    %c0_225 = arith.constant 0 : index
    %249 = vector.load %arg12[%c0_223, %c0_224, %c0_225] : memref<1x8x256xf32, #tpu.memory_space<vmem>>, vector<1x8x256xf32>
    %250 = vector.shape_cast %249 : vector<1x8x256xf32> to vector<8x256xf32>
    %251 = vector.shape_cast %248 : vector<8x256xf32> to vector<1x8x256xf32>
    tpu.vector_store %arg12[%c0_223, %c0_224, %c0_225], %251 {strides = array<i32>} : memref<1x8x256xf32, #tpu.memory_space<vmem>>, vector<1x8x256xf32>,
    return
  }
  func.func @transform_0(%arg0: i32) -> (i32, i32, i32) {
    %c0_i32 = arith.constant 0 : i32
    %c0_i32_0 = arith.constant 0 : i32
    %c0_i32_1 = arith.constant 0 : i32
    return %arg0, %c0_i32, %c0_i32_0 : i32, i32, i32
  }
  func.func @transform_1(%arg0: i32) -> (i32, i32, i32, i32, i32) {
    %c0_i32 = arith.constant 0 : i32
    %c0_i32_0 = arith.constant 0 : i32
    %c0_i32_1 = arith.constant 0 : i32
    %c0_i32_2 = arith.constant 0 : i32
    %c0_i32_3 = arith.constant 0 : i32
    return %c0_i32, %c0_i32_0, %arg0, %c0_i32_1, %c0_i32_2 : i32, i32, i32, i32, i32
  }
  func.func @transform_2(%arg0: i32) -> (i32, i32, i32, i32, i32) {
    %c0_i32 = arith.constant 0 : i32
    %c0_i32_0 = arith.constant 0 : i32
    %c0_i32_1 = arith.constant 0 : i32
    %c0_i32_2 = arith.constant 0 : i32
    %c0_i32_3 = arith.constant 0 : i32
    return %c0_i32, %c0_i32_0, %arg0, %c0_i32_1, %c0_i32_2 : i32, i32, i32, i32, i32
  }
  func.func @transform_3(%arg0: i32) -> (i32, i32, i32, i32, i32) {
    %c0_i32 = arith.constant 0 : i32
    %c0_i32_0 = arith.constant 0 : i32
    %c0_i32_1 = arith.constant 0 : i32
    %c0_i32_2 = arith.constant 0 : i32
    %c0_i32_3 = arith.constant 0 : i32
    %c0_i32_4 = arith.constant 0 : i32
    return %c0_i32, %c0_i32_0, %c0_i32_1, %c0_i32_2, %c0_i32_3 : i32, i32, i32, i32, i32
  }
  func.func @transform_4(%arg0: i32) -> (i32, i32, i32, i32) {
    %c0_i32 = arith.constant 0 : i32
    %c0_i32_0 = arith.constant 0 : i32
    %c0_i32_1 = arith.constant 0 : i32
    %c0_i32_2 = arith.constant 0 : i32
    %c0_i32_3 = arith.constant 0 : i32
    return %c0_i32, %c0_i32_0, %c0_i32_1, %c0_i32_2 : i32, i32, i32, i32
  }
  func.func @transform_5(%arg0: i32) -> (i32, i32) {
    %c0_i32 = arith.constant 0 : i32
    %c0_i32_0 = arith.constant 0 : i32
    %c0_i32_1 = arith.constant 0 : i32
    return %c0_i32, %c0_i32_0 : i32, i32
  }
  func.func @transform_6(%arg0: i32) -> (i32, i32) {
    %c0_i32 = arith.constant 0 : i32
    %c0_i32_0 = arith.constant 0 : i32
    %c0_i32_1 = arith.constant 0 : i32
    return %c0_i32, %c0_i32_0 : i32, i32
  }
  func.func @transform_7(%arg0: i32) -> (i32, i32) {
    %c0_i32 = arith.constant 0 : i32
    %c0_i32_0 = arith.constant 0 : i32
    %c0_i32_1 = arith.constant 0 : i32
    return %c0_i32, %c0_i32_0 : i32, i32
  }
  func.func @transform_8(%arg0: i32) -> (i32, i32) {
    %c0_i32 = arith.constant 0 : i32
    %c0_i32_0 = arith.constant 0 : i32
    %c0_i32_1 = arith.constant 0 : i32
    return %c0_i32, %c0_i32_0 : i32, i32
  }
  func.func @transform_9(%arg0: i32) -> (i32, i32, i32, i32, i32) {
    %c0_i32 = arith.constant 0 : i32
    %c0_i32_0 = arith.constant 0 : i32
    %c0_i32_1 = arith.constant 0 : i32
    %c0_i32_2 = arith.constant 0 : i32
    %c0_i32_3 = arith.constant 0 : i32
    return %c0_i32, %c0_i32_0, %arg0, %c0_i32_1, %c0_i32_2 : i32, i32, i32, i32, i32
  }
  func.func @transform_10(%arg0: i32) -> (i32, i32, i32, i32, i32) {
    %c0_i32 = arith.constant 0 : i32
    %c0_i32_0 = arith.constant 0 : i32
    %c0_i32_1 = arith.constant 0 : i32
    %c0_i32_2 = arith.constant 0 : i32
    %c0_i32_3 = arith.constant 0 : i32
    return %c0_i32, %c0_i32_0, %arg0, %c0_i32_1, %c0_i32_2 : i32, i32, i32, i32, i32
  }
  func.func @transform_11(%arg0: i32) -> (i32, i32, i32) {
    %c0_i32 = arith.constant 0 : i32
    %c0_i32_0 = arith.constant 0 : i32
    %c0_i32_1 = arith.constant 0 : i32
    return %arg0, %c0_i32, %c0_i32_0 : i32, i32, i32
  }
}

</mosaic_0001>

<llo_original>
// kernel: forward.1
$region0: #{forward.1}
  #allocation0 [shape = 'u32[]', space=smem, size = 0x4, offset = 0x4, fixed_abs, tag = 'smem constant byte address 0x4 - core index']
  #allocation1 [shape = 'u32[144,128]{1,0:T(1,128)}', space=vmem, size = 0x12000, scoped, tag = 'internal scratch']
  #allocation2 [shape = 'bf16[12,290]{1,0:T(8,128)(2,1)}', space=vmem, size = 0x3000, scoped, tag = 'scratch operand']
  %s0 = inlined_call_operand.vmem [shape: f32[2,8,256], index: 0, kind: input, shape index: {}]
  %s1 = inlined_call_operand.vmem [shape: f32[2,2,2,4,256], index: 1, kind: input, shape index: {}, may-alias: {1,9}]
  %s2 = inlined_call_operand.vmem [shape: f32[2,2,2,4,256], index: 2, kind: input, shape index: {}, may-alias: {2,10}]
  %s3 = inlined_call_operand.vmem [shape: bf16[2,2,9,16,12], index: 3, kind: input, shape index: {}]
  %s4 = inlined_call_operand.vmem [shape: f32[2,2,16,1], index: 4, kind: input, shape index: {}]
  %s5 = inlined_call_operand.vmem [shape: bf16[8,4], index: 5, kind: input, shape index: {}]
  %s6 = inlined_call_operand.vmem [shape: f32[8,1], index: 6, kind: input, shape index: {}]
  %s7 = inlined_call_operand.vmem [shape: bf16[8,8], index: 7, kind: input, shape index: {}]
  %s8 = inlined_call_operand.vmem [shape: f32[8,1], index: 8, kind: input, shape index: {}]
  %s9 = inlined_call_operand.vmem [shape: f32[2,2,2,4,256], index: 9, kind: output, shape index: {0}, may-alias: {1,9}]
  %s10 = inlined_call_operand.vmem [shape: f32[2,2,2,4,256], index: 10, kind: output, shape index: {1}, may-alias: {2,10}]
  %s11 = inlined_call_operand.vmem [shape: f32[2,8,256], index: 11, kind: output, shape index: {2}]
  %12 = xla_tuple %s9, %s10, %s11
  %s13 = sld [smem:[#allocation0]]
  $region229: #{forward.1} parent=0
    _
  %s15 = ssub.s32 1, %s13
  %s16 = scalar_select 0, %s15, %s13
  $region1: #{forward.1} parent=0
    #allocation3 [shape = 'u8[16384]{0}', space=vmem, size = 0x4000, scoped, tag = 'input window, operand 1']
    #allocation4 [shape = 'u8[16384]{0}', space=vmem, size = 0x4000, scoped, tag = 'input window, operand 2']
    #allocation5 [shape = 'u8[16384]{0}', space=vmem, size = 0x4000, scoped, tag = 'output window, operand 0']
    #allocation6 [shape = 'u8[16384]{0}', space=vmem, size = 0x4000, scoped, tag = 'output window, operand 1']
    loop: start=0, step=1, limit=4
    $region2: #{forward.1} parent=1 // loop_pre_header
      _
    $region3: #{forward.1} parent=1 // loop_header
      %s18 = sphi 0, %s22
      %p19 = scmp.ge.s32.totalorder %s18, 4
      %s28 = sphi 0, %s30
      %s31 = sphi 0, %s28
      %s32 = sphi 0, %s31
      %s48 = sphi 0, %s32
      %s54 = sphi 0, %s56
      %s57 = sphi 0, %s54
      %s58 = sphi 0, %s57
      %s74 = sphi 0, %s58
      %s80 = sphi 0, %s82
      %s83 = sphi 0, %s80
      %s84 = sphi 0, %s83
      %s100 = sphi 0, %s84
      %s104 = sphi 0, %s104
      %s106 = sphi 0, %s104
      %s107 = sphi 0, %s106
      %s121 = sphi 0, %s107
      %s125 = sphi 0, %s125
      %s127 = sphi 0, %s125
      %s128 = sphi 0, %s127
      %s142 = sphi 0, %s128
      %s146 = sphi 0, %s146
      %s148 = sphi 0, %s146
      %s149 = sphi 0, %s148
      %s163 = sphi 0, %s149
      %s167 = sphi 0, %s167
      %s169 = sphi 0, %s167
      %s170 = sphi 0, %s169
      %s184 = sphi 0, %s170
      %s188 = sphi 0, %s188
      %s190 = sphi 0, %s188
      %s191 = sphi 0, %s190
      %s205 = sphi 0, %s191
      %s209 = sphi 0, %s209
      %s211 = sphi 0, %s209
      %s212 = sphi 0, %s211
      %s226 = sphi 0, %s212
      %s232 = sphi 0, %s234
      %s235 = sphi 0, %s232
      %s236 = sphi 0, %s235
      %s252 = sphi 0, %s236
      %s258 = sphi 0, %s260
      %s261 = sphi 0, %s258
      %s262 = sphi 0, %s261
      %s278 = sphi 0, %s262
      %s284 = sphi 0, %s286
      %s287 = sphi 0, %s284
      %s288 = sphi 0, %s287
      %s304 = sphi 0, %s288
    $region4: #{forward.1} parent=1 // loop_header_branch
      %21 = sbr.rel (%p19) target = $region8
    $region5: #{forward.1} parent=1 // loop_body
      %s23 = ssub.s32 %s18, 1
      %s24 = ssub.s32 %s18, 2
      %s25 = sadd.s32 %s18, 1
      %s26 = ssub.s32 %s18, %s25
      %p27 = scmp.eq.s32.totalorder %s26, 0
      %s29 = sadd.s32 %s28, 1
      %s30 = scalar_select %p27, %s28, %s29
      %p33 = pneg %p27
      %p34 = scmp.eq.s32.totalorder %s18, 1
      %p35 = por %p33, %p34
      %p36 = scmp.ne.s32.totalorder %s28, %s31
      %p37 = scmp.eq.s32.totalorder %s18, 0
      %p38 = por %p36, %p37
      %p39 = scmp.ne.s32.totalorder %s28, %s31
      %p40 = scmp.eq.s32.totalorder %s23, 1
      %p41 = por %p39, %p40
      %p42 = scmp.ne.s32.totalorder %s31, %s32
      %p43 = scmp.eq.s32.totalorder %s23, 0
      %p44 = por %p42, %p43
      %p45 = scmp.ne.s32.totalorder %s31, %s32
      %p46 = scmp.eq.s32.totalorder %s24, 1
      %p47 = por %p45, %p46
      %p49 = scmp.ne.s32.totalorder %s32, %s48
      %p50 = scmp.eq.s32.totalorder %s24, 0
      %p51 = por %p49, %p50
      %s52 = ssub.s32 %s18, %s25
      %p53 = scmp.eq.s32.totalorder %s52, 0
      %s55 = sadd.s32 %s54, 1
      %s56 = scalar_select %p53, %s54, %s55
      %p59 = pneg %p53
      %p60 = scmp.eq.s32.totalorder %s18, 1
      %p61 = por %p59, %p60
      %p62 = scmp.ne.s32.totalorder %s54, %s57
      %p63 = scmp.eq.s32.totalorder %s18, 0
      %p64 = por %p62, %p63
      %p65 = scmp.ne.s32.totalorder %s54, %s57
      %p66 = scmp.eq.s32.totalorder %s23, 1
      %p67 = por %p65, %p66
      %p68 = scmp.ne.s32.totalorder %s57, %s58
      %p69 = scmp.eq.s32.totalorder %s23, 0
      %p70 = por %p68, %p69
      %p71 = scmp.ne.s32.totalorder %s57, %s58
      %p72 = scmp.eq.s32.totalorder %s24, 1
      %p73 = por %p71, %p72
      %p75 = scmp.ne.s32.totalorder %s58, %s74
      %p76 = scmp.eq.s32.totalorder %s24, 0
      %p77 = por %p75, %p76
      %s78 = ssub.s32 %s18, %s25
      %p79 = scmp.eq.s32.totalorder %s78, 0
      %s81 = sadd.s32 %s80, 1
      %s82 = scalar_select %p79, %s80, %s81
      %p85 = pneg %p79
      %p86 = scmp.eq.s32.totalorder %s18, 1
      %p87 = por %p85, %p86
      %p88 = scmp.ne.s32.totalorder %s80, %s83
      %p89 = scmp.eq.s32.totalorder %s18, 0
      %p90 = por %p88, %p89
      %p91 = scmp.ne.s32.totalorder %s80, %s83
      %p92 = scmp.eq.s32.totalorder %s23, 1
      %p93 = por %p91, %p92
      %p94 = scmp.ne.s32.totalorder %s83, %s84
      %p95 = scmp.eq.s32.totalorder %s23, 0
      %p96 = por %p94, %p95
      %p97 = scmp.ne.s32.totalorder %s83, %s84
      %p98 = scmp.eq.s32.totalorder %s24, 1
      %p99 = por %p97, %p98
      %p101 = scmp.ne.s32.totalorder %s84, %s100
      %p102 = scmp.eq.s32.totalorder %s24, 0
      %p103 = por %p101, %p102
      %s105 = sadd.s32 %s104, 1
      %p108 = scmp.eq.s32.totalorder %s18, 1
      %p109 = scmp.ne.s32.totalorder %s104, %s106
      %p110 = scmp.eq.s32.totalorder %s18, 0
      %p111 = por %p109, %p110
      %p112 = scmp.ne.s32.totalorder %s104, %s106
      %p113 = scmp.eq.s32.totalorder %s23, 1
      %p114 = por %p112, %p113
      %p115 = scmp.ne.s32.totalorder %s106, %s107
      %p116 = scmp.eq.s32.totalorder %s23, 0
      %p117 = por %p115, %p116
      %p118 = scmp.ne.s32.totalorder %s106, %s107
      %p119 = scmp.eq.s32.totalorder %s24, 1
      %p120 = por %p118, %p119
      %p122 = scmp.ne.s32.totalorder %s107, %s121
      %p123 = scmp.eq.s32.totalorder %s24, 0
      %p124 = por %p122, %p123
      %s126 = sadd.s32 %s125, 1
      %p129 = scmp.eq.s32.totalorder %s18, 1
      %p130 = scmp.ne.s32.totalorder %s125, %s127
      %p131 = scmp.eq.s32.totalorder %s18, 0
      %p132 = por %p130, %p131
      %p133 = scmp.ne.s32.totalorder %s125, %s127
      %p134 = scmp.eq.s32.totalorder %s23, 1
      %p135 = por %p133, %p134
      %p136 = scmp.ne.s32.totalorder %s127, %s128
      %p137 = scmp.eq.s32.totalorder %s23, 0
      %p138 = por %p136, %p137
      %p139 = scmp.ne.s32.totalorder %s127, %s128
      %p140 = scmp.eq.s32.totalorder %s24, 1
      %p141 = por %p139, %p140
      %p143 = scmp.ne.s32.totalorder %s128, %s142
      %p144 = scmp.eq.s32.totalorder %s24, 0
      %p145 = por %p143, %p144
      %s147 = sadd.s32 %s146, 1
      %p150 = scmp.eq.s32.totalorder %s18, 1
      %p151 = scmp.ne.s32.totalorder %s146, %s148
      %p152 = scmp.eq.s32.totalorder %s18, 0
      %p153 = por %p151, %p152
      %p154 = scmp.ne.s32.totalorder %s146, %s148
      %p155 = scmp.eq.s32.totalorder %s23, 1
      %p156 = por %p154, %p155
      %p157 = scmp.ne.s32.totalorder %s148, %s149
      %p158 = scmp.eq.s32.totalorder %s23, 0
      %p159 = por %p157, %p158
      %p160 = scmp.ne.s32.totalorder %s148, %s149
      %p161 = scmp.eq.s32.totalorder %s24, 1
      %p162 = por %p160, %p161
      %p164 = scmp.ne.s32.totalorder %s149, %s163
      %p165 = scmp.eq.s32.totalorder %s24, 0
      %p166 = por %p164, %p165
      %s168 = sadd.s32 %s167, 1
      %p171 = scmp.eq.s32.totalorder %s18, 1
      %p172 = scmp.ne.s32.totalorder %s167, %s169
      %p173 = scmp.eq.s32.totalorder %s18, 0
      %p174 = por %p172, %p173
      %p175 = scmp.ne.s32.totalorder %s167, %s169
      %p176 = scmp.eq.s32.totalorder %s23, 1
      %p177 = por %p175, %p176
      %p178 = scmp.ne.s32.totalorder %s169, %s170
      %p179 = scmp.eq.s32.totalorder %s23, 0
      %p180 = por %p178, %p179
      %p181 = scmp.ne.s32.totalorder %s169, %s170
      %p182 = scmp.eq.s32.totalorder %s24, 1
      %p183 = por %p181, %p182
      %p185 = scmp.ne.s32.totalorder %s170, %s184
      %p186 = scmp.eq.s32.totalorder %s24, 0
      %p187 = por %p185, %p186
      %s189 = sadd.s32 %s188, 1
      %p192 = scmp.eq.s32.totalorder %s18, 1
      %p193 = scmp.ne.s32.totalorder %s188, %s190
      %p194 = scmp.eq.s32.totalorder %s18, 0
      %p195 = por %p193, %p194
      %p196 = scmp.ne.s32.totalorder %s188, %s190
      %p197 = scmp.eq.s32.totalorder %s23, 1
      %p198 = por %p196, %p197
      %p199 = scmp.ne.s32.totalorder %s190, %s191
      %p200 = scmp.eq.s32.totalorder %s23, 0
      %p201 = por %p199, %p200
      %p202 = scmp.ne.s32.totalorder %s190, %s191
      %p203 = scmp.eq.s32.totalorder %s24, 1
      %p204 = por %p202, %p203
      %p206 = scmp.ne.s32.totalorder %s191, %s205
      %p207 = scmp.eq.s32.totalorder %s24, 0
      %p208 = por %p206, %p207
      %s210 = sadd.s32 %s209, 1
      %p213 = scmp.eq.s32.totalorder %s18, 1
      %p214 = scmp.ne.s32.totalorder %s209, %s211
      %p215 = scmp.eq.s32.totalorder %s18, 0
      %p216 = por %p214, %p215
      %p217 = scmp.ne.s32.totalorder %s209, %s211
      %p218 = scmp.eq.s32.totalorder %s23, 1
      %p219 = por %p217, %p218
      %p220 = scmp.ne.s32.totalorder %s211, %s212
      %p221 = scmp.eq.s32.totalorder %s23, 0
      %p222 = por %p220, %p221
      %p223 = scmp.ne.s32.totalorder %s211, %s212
      %p224 = scmp.eq.s32.totalorder %s24, 1
      %p225 = por %p223, %p224
      %p227 = scmp.ne.s32.totalorder %s212, %s226
      %p228 = scmp.eq.s32.totalorder %s24, 0
      %p229 = por %p227, %p228
      %s230 = ssub.s32 %s18, %s25
      %p231 = scmp.eq.s32.totalorder %s230, 0
      %s233 = sadd.s32 %s232, 1
      %s234 = scalar_select %p231, %s232, %s233
      %p237 = pneg %p231
      %p238 = scmp.eq.s32.totalorder %s18, 1
      %p239 = por %p237, %p238
      %p240 = scmp.ne.s32.totalorder %s232, %s235
      %p241 = scmp.eq.s32.totalorder %s18, 0
      %p242 = por %p240, %p241
      %p243 = scmp.ne.s32.totalorder %s232, %s235
      %p244 = scmp.eq.s32.totalorder %s23, 1
      %p245 = por %p243, %p244
      %p246 = scmp.ne.s32.totalorder %s235, %s236
      %p247 = scmp.eq.s32.totalorder %s23, 0
      %p248 = por %p246, %p247
      %p249 = scmp.ne.s32.totalorder %s235, %s236
      %p250 = scmp.eq.s32.totalorder %s24, 1
      %p251 = por %p249, %p250
      %p253 = scmp.ne.s32.totalorder %s236, %s252
      %p254 = scmp.eq.s32.totalorder %s24, 0
      %p255 = por %p253, %p254
      %s256 = ssub.s32 %s18, %s25
      %p257 = scmp.eq.s32.totalorder %s256, 0
      %s259 = sadd.s32 %s258, 1
      %s260 = scalar_select %p257, %s258, %s259
      %p263 = pneg %p257
      %p264 = scmp.eq.s32.totalorder %s18, 1
      %p265 = por %p263, %p264
      %p266 = scmp.ne.s32.totalorder %s258, %s261
      %p267 = scmp.eq.s32.totalorder %s18, 0
      %p268 = por %p266, %p267
      %p269 = scmp.ne.s32.totalorder %s258, %s261
      %p270 = scmp.eq.s32.totalorder %s23, 1
      %p271 = por %p269, %p270
      %p272 = scmp.ne.s32.totalorder %s261, %s262
      %p273 = scmp.eq.s32.totalorder %s23, 0
      %p274 = por %p272, %p273
      %p275 = scmp.ne.s32.totalorder %s261, %s262
      %p276 = scmp.eq.s32.totalorder %s24, 1
      %p277 = por %p275, %p276
      %p279 = scmp.ne.s32.totalorder %s262, %s278
      %p280 = scmp.eq.s32.totalorder %s24, 0
      %p281 = por %p279, %p280
      %s282 = ssub.s32 %s18, %s25
      %p283 = scmp.eq.s32.totalorder %s282, 0
      %s285 = sadd.s32 %s284, 1
      %s286 = scalar_select %p283, %s284, %s285
      %p289 = pneg %p283
      %p290 = scmp.eq.s32.totalorder %s18, 1
      %p291 = por %p289, %p290
      %p292 = scmp.ne.s32.totalorder %s284, %s287
      %p293 = scmp.eq.s32.totalorder %s18, 0
      %p294 = por %p292, %p293
      %p295 = scmp.ne.s32.totalorder %s284, %s287
      %p296 = scmp.eq.s32.totalorder %s23, 1
      %p297 = por %p295, %p296
      %p298 = scmp.ne.s32.totalorder %s287, %s288
      %p299 = scmp.eq.s32.totalorder %s23, 0
      %p300 = por %p298, %p299
      %p301 = scmp.ne.s32.totalorder %s287, %s288
      %p302 = scmp.eq.s32.totalorder %s24, 1
      %p303 = por %p301, %p302
      %p305 = scmp.ne.s32.totalorder %s288, %s304
      %p306 = scmp.eq.s32.totalorder %s24, 0
      %p307 = por %p305, %p306
      %p308 = scmp.le.s32.totalorder 1, %s18
      %p309 = scmp.lt.s32.totalorder %s18, 3
      %p310 = pnand %p308, %p309
      %p311 = pneg %p310
      // Predicated region
      $region9: #{forward.1} parent=5 // pred_check
        _
      $region10: #{forward.1} parent=5 // pred_check_branch
        %313 = sbr.rel (%p310) target = $region12
      $region11: #{forward.1} parent=5 // pred_region
        %s314 = ssub.s32 %s18, 1
        // Predicated region
        $region13: #{forward.1} parent=11 // pred_check
          %p315 = pneg %p117
        $region14: #{forward.1} parent=11 // pred_check_branch
          %317 = sbr.rel (%p315) target = $region16
        $region15: #{forward.1} parent=11 // pred_region
          _
        $region16: #{forward.1} parent=11 // pred_fallthru
          _
        // Predicated region
        $region17: #{forward.1} parent=11 // pred_check
          %p318 = pneg %p138
        $region18: #{forward.1} parent=11 // pred_check_branch
          %320 = sbr.rel (%p318) target = $region20
        $region19: #{forward.1} parent=11 // pred_region
          _
        $region20: #{forward.1} parent=11 // pred_fallthru
          _
        // Predicated region
        $region21: #{forward.1} parent=11 // pred_check
          %p321 = pneg %p159
        $region22: #{forward.1} parent=11 // pred_check_branch
          %323 = sbr.rel (%p321) target = $region24
        $region23: #{forward.1} parent=11 // pred_region
          _
        $region24: #{forward.1} parent=11 // pred_fallthru
          _
        // Predicated region
        $region25: #{forward.1} parent=11 // pred_check
          %p324 = pneg %p180
        $region26: #{forward.1} parent=11 // pred_check_branch
          %326 = sbr.rel (%p324) target = $region28
        $region27: #{forward.1} parent=11 // pred_region
          _
        $region28: #{forward.1} parent=11 // pred_fallthru
          _
        // Predicated region
        $region29: #{forward.1} parent=11 // pred_check
          %p327 = pneg %p201
        $region30: #{forward.1} parent=11 // pred_check_branch
          %329 = sbr.rel (%p327) target = $region32
        $region31: #{forward.1} parent=11 // pred_region
          _
        $region32: #{forward.1} parent=11 // pred_fallthru
          _
        // Predicated region
        $region33: #{forward.1} parent=11 // pred_check
          %p330 = pneg %p222
        $region34: #{forward.1} parent=11 // pred_check_branch
          %332 = sbr.rel (%p330) target = $region36
        $region35: #{forward.1} parent=11 // pred_region
          _
        $region36: #{forward.1} parent=11 // pred_fallthru
          _
      $region12: #{forward.1} parent=5 // pred_fallthru
        _
      %p333 = scmp.lt.s32.totalorder %s18, 2
      // Predicated region
      $region37: #{forward.1} parent=5 // pred_check
        %p334 = pneg %p333
      $region38: #{forward.1} parent=5 // pred_check_branch
        %336 = sbr.rel (%p334) target = $region40
      $region39: #{forward.1} parent=5 // pred_region
        // Predicated region
        $region41: #{forward.1} parent=39 // pred_check
          %p337 = pneg %p38
        $region42: #{forward.1} parent=39 // pred_check_branch
          %339 = sbr.rel (%p337) target = $region44
        $region43: #{forward.1} parent=39 // pred_region
          %p340 = scmp.lt.s32.totalorder %s18, 1
          %s341 = scalar_select %p340, %s18, 1
          %s342 = smul.addr %s341, 2
          %s343 = smul.addr %s342, 8
          %s344 = scalar_lea.vmem %s0, %s343
        $region44: #{forward.1} parent=39 // pred_fallthru
          _
        // Predicated region
        $region45: #{forward.1} parent=39 // pred_check
          %p345 = pneg %p64
        $region46: #{forward.1} parent=39 // pred_check_branch
          %347 = sbr.rel (%p345) target = $region48
        $region47: #{forward.1} parent=39 // pred_region
          %s348 = sand.u32 %s54, 1
          %s349 = sand.u32 %s54, 1
          %s350 = smul.addr %s349, 16
          %s351 = scalar_lea.vmem [#allocation3], %s350
          %s352 = smul.addr %s18, 2
          %s353 = smul.addr %s352, 4
          %s354 = scalar_lea.vmem %s1, %s353
          // Predicated region
          $region49: #{forward.1} parent=47 // pred_check
            _
          $region50: #{forward.1} parent=47 // pred_check_branch
            %356 = sbr.rel (0) target = $region52
          $region51: #{forward.1} parent=47 // pred_region
            // Predicated region
            $region53: #{forward.1} parent=51 // pred_check
              _
            $region54: #{forward.1} parent=51 // pred_check_branch
              %358 = sbr.rel (0) target = $region56
            $region55: #{forward.1} parent=51 // pred_region
              // Predicated region
              $region68: #{forward.1} parent=55 // pred_check
                _
              $region69: #{forward.1} parent=55 // pred_check_branch
                %376 = sbr.rel (0) target = $region71
              $region70: #{forward.1} parent=55 // pred_region
                loop: start=0, step=1, limit=1
                $region72: #{forward.1} parent=70 // loop_pre_header
                  _
                $region73: #{forward.1} parent=70 // loop_header
                  %s378 = sphi 0, %s382
                  %p379 = scmp.ge.s32.totalorder %s378, 1
                  %s383 = sphi %s354, %s354
                  %s384 = sphi %s351, %s351
                $region74: #{forward.1} parent=70 // loop_header_branch
                  %381 = sbr.rel (%p379) target = $region78
                $region75: #{forward.1} parent=70 // loop_body
                  %v385 = vld [vmem:[%s383] sm:$0xff]
                  %386 = vst [vmem:[%s384] sm:$0xff] %v385
                  %v387 = vld [vmem:[%s383 + $0x10] sm:$0xff]
                  %388 = vst [vmem:[%s384 + $0x8] sm:$0xff] %v387
                $region76: #{forward.1} parent=70 // loop_footer
                  %s382 = sadd.s32 1, %s378
                $region77: #{forward.1} parent=70 // loop_footer_branch
                  %377 = sbr.rel target = $region73
                $region78: #{forward.1} parent=70 // loop_exit
                  _
              $region71: #{forward.1} parent=55 // pred_fallthru
                _
              // Predicated region
              $region79: #{forward.1} parent=55 // pred_check
                _
              $region80: #{forward.1} parent=55 // pred_check_branch
                %390 = sbr.rel target = $region82
              $region81: #{forward.1} parent=55 // pred_region
                _
              $region82: #{forward.1} parent=55 // pred_fallthru
                _
            $region56: #{forward.1} parent=51 // pred_fallthru
              _
            // Predicated region
            $region57: #{forward.1} parent=51 // pred_check
              _
            $region58: #{forward.1} parent=51 // pred_check_branch
              %360 = sbr.rel target = $region60
            $region59: #{forward.1} parent=51 // pred_region
              %s362 = ssub.s32 256, 1
              loop: start=0, step=1, limit=1
              $region61: #{forward.1} parent=59 // loop_pre_header
                _
              $region62: #{forward.1} parent=59 // loop_header
                %s364 = sphi 0, %s368
                %p365 = scmp.ge.s32.totalorder %s364, 1
                %s369 = sphi %s354, %s354
                %s370 = sphi %s351, %s351
              $region63: #{forward.1} parent=59 // loop_header_branch
                %367 = sbr.rel (%p365) target = $region67
              $region64: #{forward.1} parent=59 // loop_body
                %v371 = vld [vmem:[%s369] sm:%s362]
                %372 = vst [vmem:[%s370] sm:%s362] %v371
                %v373 = vld [vmem:[%s369 + $0x10] sm:%s362]
                %374 = vst [vmem:[%s370 + $0x8] sm:%s362] %v373
              $region65: #{forward.1} parent=59 // loop_footer
                %s368 = sadd.s32 1, %s364
              $region66: #{forward.1} parent=59 // loop_footer_branch
                %363 = sbr.rel target = $region62
              $region67: #{forward.1} parent=59 // loop_exit
                _
            $region60: #{forward.1} parent=51 // pred_fallthru
              _
          $region52: #{forward.1} parent=47 // pred_fallthru
            _
          %391 = vnop
        $region48: #{forward.1} parent=39 // pred_fallthru
          _
        // Predicated region
        $region83: #{forward.1} parent=39 // pred_check
          %p392 = pneg %p90
        $region84: #{forward.1} parent=39 // pred_check_branch
          %394 = sbr.rel (%p392) target = $region86
        $region85: #{forward.1} parent=39 // pred_region
          %s395 = sand.u32 %s80, 1
          %s396 = sand.u32 %s80, 1
          %s397 = smul.addr %s396, 16
          %s398 = scalar_lea.vmem [#allocation4], %s397
          %s399 = smul.addr %s18, 2
          %s400 = smul.addr %s399, 4
          %s401 = scalar_lea.vmem %s2, %s400
          // Predicated region
          $region87: #{forward.1} parent=85 // pred_check
            _
          $region88: #{forward.1} parent=85 // pred_check_branch
            %403 = sbr.rel (0) target = $region90
          $region89: #{forward.1} parent=85 // pred_region
            // Predicated region
            $region91: #{forward.1} parent=89 // pred_check
              _
            $region92: #{forward.1} parent=89 // pred_check_branch
              %405 = sbr.rel (0) target = $region94
            $region93: #{forward.1} parent=89 // pred_region
              // Predicated region
              $region106: #{forward.1} parent=93 // pred_check
                _
              $region107: #{forward.1} parent=93 // pred_check_branch
                %423 = sbr.rel (0) target = $region109
              $region108: #{forward.1} parent=93 // pred_region
                loop: start=0, step=1, limit=1
                $region110: #{forward.1} parent=108 // loop_pre_header
                  _
                $region111: #{forward.1} parent=108 // loop_header
                  %s425 = sphi 0, %s429
                  %p426 = scmp.ge.s32.totalorder %s425, 1
                  %s430 = sphi %s401, %s401
                  %s431 = sphi %s398, %s398
                $region112: #{forward.1} parent=108 // loop_header_branch
                  %428 = sbr.rel (%p426) target = $region116
                $region113: #{forward.1} parent=108 // loop_body
                  %v432 = vld [vmem:[%s430] sm:$0xff]
                  %433 = vst [vmem:[%s431] sm:$0xff] %v432
                  %v434 = vld [vmem:[%s430 + $0x10] sm:$0xff]
                  %435 = vst [vmem:[%s431 + $0x8] sm:$0xff] %v434
                $region114: #{forward.1} parent=108 // loop_footer
                  %s429 = sadd.s32 1, %s425
                $region115: #{forward.1} parent=108 // loop_footer_branch
                  %424 = sbr.rel target = $region111
                $region116: #{forward.1} parent=108 // loop_exit
                  _
              $region109: #{forward.1} parent=93 // pred_fallthru
                _
              // Predicated region
              $region117: #{forward.1} parent=93 // pred_check
                _
              $region118: #{forward.1} parent=93 // pred_check_branch
                %437 = sbr.rel target = $region120
              $region119: #{forward.1} parent=93 // pred_region
                _
              $region120: #{forward.1} parent=93 // pred_fallthru
                _
            $region94: #{forward.1} parent=89 // pred_fallthru
              _
            // Predicated region
            $region95: #{forward.1} parent=89 // pred_check
              _
            $region96: #{forward.1} parent=89 // pred_check_branch
              %407 = sbr.rel target = $region98
            $region97: #{forward.1} parent=89 // pred_region
              %s409 = ssub.s32 256, 1
              loop: start=0, step=1, limit=1
              $region99: #{forward.1} parent=97 // loop_pre_header
                _
              $region100: #{forward.1} parent=97 // loop_header
                %s411 = sphi 0, %s415
                %p412 = scmp.ge.s32.totalorder %s411, 1
                %s416 = sphi %s401, %s401
                %s417 = sphi %s398, %s398
              $region101: #{forward.1} parent=97 // loop_header_branch
                %414 = sbr.rel (%p412) target = $region105
              $region102: #{forward.1} parent=97 // loop_body
                %v418 = vld [vmem:[%s416] sm:%s409]
                %419 = vst [vmem:[%s417] sm:%s409] %v418
                %v420 = vld [vmem:[%s416 + $0x10] sm:%s409]
                %421 = vst [vmem:[%s417 + $0x8] sm:%s409] %v420
              $region103: #{forward.1} parent=97 // loop_footer
                %s415 = sadd.s32 1, %s411
              $region104: #{forward.1} parent=97 // loop_footer_branch
                %410 = sbr.rel target = $region100
              $region105: #{forward.1} parent=97 // loop_exit
                _
            $region98: #{forward.1} parent=89 // pred_fallthru
              _
          $region90: #{forward.1} parent=85 // pred_fallthru
            _
          %438 = vnop
        $region86: #{forward.1} parent=39 // pred_fallthru
          _
      $region40: #{forward.1} parent=5 // pred_fallthru
        _
      %p439 = scmp.le.s32.totalorder 1, %s18
      %p440 = scmp.lt.s32.totalorder %s18, 3
      %p441 = pnand %p439, %p440
      %p442 = pneg %p441
      // Predicated region
      $region121: #{forward.1} parent=5 // pred_check
        _
      $region122: #{forward.1} parent=5 // pred_check_branch
        %444 = sbr.rel (%p441) target = $region124
      $region123: #{forward.1} parent=5 // pred_region
        %s445 = ssub.s32 %s18, 1
        %s446 = sand.u32 %s57, 1
        %s447 = sand.u32 %s57, 1
        %s448 = smul.addr %s447, 16
        %s449 = scalar_lea.vmem [#allocation3], %s448
        // Predicated region
        $region125: #{forward.1} parent=123 // pred_check
          %p450 = pneg %p70
        $region126: #{forward.1} parent=123 // pred_check_branch
          %452 = sbr.rel (%p450) target = $region128
        $region127: #{forward.1} parent=123 // pred_region
          _
        $region128: #{forward.1} parent=123 // pred_fallthru
          _
        %s453 = sand.u32 %s83, 1
        %s454 = sand.u32 %s83, 1
        %s455 = smul.addr %s454, 16
        %s456 = scalar_lea.vmem [#allocation4], %s455
        // Predicated region
        $region129: #{forward.1} parent=123 // pred_check
          %p457 = pneg %p96
        $region130: #{forward.1} parent=123 // pred_check_branch
          %459 = sbr.rel (%p457) target = $region132
        $region131: #{forward.1} parent=123 // pred_region
          _
        $region132: #{forward.1} parent=123 // pred_fallthru
          _
        %p460 = scmp.lt.s32.totalorder %s23, 1
        %s461 = scalar_select %p460, %s23, 1
        %s462 = smul.addr %s461, 2
        %s463 = smul.addr %s462, 8
        %s464 = scalar_lea.vmem %s0, %s463
        %p465 = pneg %p44
        %p466 = pneg %p41
        %s467 = sand.u32 %s57, 1
        %s468 = sand.u32 %s57, 1
        %s469 = smul.addr %s468, 16
        %s470 = scalar_lea.vmem [#allocation3], %s469
        %p471 = pneg %p70
        %p472 = pneg %p67
        %s473 = sand.u32 %s83, 1
        %s474 = sand.u32 %s83, 1
        %s475 = smul.addr %s474, 16
        %s476 = scalar_lea.vmem [#allocation4], %s475
        %p477 = pneg %p96
        %p478 = pneg %p93
        %p479 = pneg %p117
        %p480 = pneg %p114
        %p481 = pneg %p138
        %p482 = pneg %p135
        %p483 = pneg %p159
        %p484 = pneg %p156
        %p485 = pneg %p180
        %p486 = pneg %p177
        %p487 = pneg %p201
        %p488 = pneg %p198
        %p489 = pneg %p222
        %p490 = pneg %p219
        %p491 = pneg %p248
        %p492 = pneg %p245
        %s493 = sand.u32 %s235, 1
        %s494 = sand.u32 %s235, 1
        %s495 = smul.addr %s494, 16
        %s496 = scalar_lea.vmem [#allocation5], %s495
        %p497 = pneg %p274
        %p498 = pneg %p271
        %s499 = sand.u32 %s261, 1
        %s500 = sand.u32 %s261, 1
        %s501 = smul.addr %s500, 16
        %s502 = scalar_lea.vmem [#allocation6], %s501
        %p503 = pneg %p300
        %p504 = pneg %p297
        %p505 = scmp.lt.s32.totalorder %s23, 1
        %s506 = scalar_select %p505, %s23, 1
        %s507 = smul.addr %s506, 2
        %s508 = smul.addr %s507, 8
        %s509 = scalar_lea.vmem %s11, %s508
        %p510 = scmp.lt.s32.totalorder %s23, 1
        %s511 = scalar_select %p510, %s23, 1
        %s512 = smul.addr %s511, 2
        %s513 = smul.addr %s512, 8
        %s514 = scalar_lea.vmem %s0, %s513
        %p515 = scmp.lt.s32.totalorder %s23, 1
        %s516 = scalar_select %p515, %s23, 1
        %s517 = smul.addr %s516, 2
        %s518 = smul.addr %s517, 8
        %s519 = scalar_lea.vmem %s11, %s518
        %vm523 = vcmask 134144
        %524 = vst.msk [vmem:[#allocation2] sm:$0xf] %vm523, 0
        %vm525 = vcmask 132096
        %526 = vst.msk [vmem:[#allocation2 + $0xc] sm:$0x3] %vm525, 0
        %vm527 = vcmask 273544
        %528 = vst.msk [vmem:[#allocation2 + $0x8] sm:$0xf] %vm527, 0
        %vm529 = vcmask 271496
        %530 = vst.msk [vmem:[#allocation2 + $0x14] sm:$0x3] %vm529, 0
        %v531 = vlaneseq
        %v532 = vand.u32 %v531, 127
        %v533 = vadd.s32 %v532, 128
        %vm534 = vcmp.lt.s32.totalorder %v532, 0
        %v535 = vsub.s32 0, %v532
        %v536 = vsel %vm534, %v535, %v532
        %v537 = vshrl.u32 %v536, 4
        %v538 = vand.u32 %v536, 15
        %v539 = vsub.s32 0, %v538
        %v540 = vsel %vm534, %v539, %v538
        %vm541 = vcmp.lt.s32.totalorder %v533, 0
        %v542 = vsub.s32 0, %v533
        %v543 = vsel %vm541, %v542, %v533
        %v544 = vshrl.u32 %v543, 4
        %v545 = vand.u32 %v543, 15
        %v546 = vsub.s32 0, %v545
        %v547 = vsel %vm541, %v546, %v545
        %vm548 = vcmp.ne.s32.totalorder %v540, 0
        %vm549 = vcmp.ne.s32.totalorder %v547, 0
        %vm550 = vcmp.lt.s32.totalorder %v540, 0
        %vm551 = vcmp.lt.s32.totalorder %v547, 0
        %vm552 = vmand %vm550, %vm548
        %vm553 = vmand %vm551, %vm549
        %v554 = vadd.s32 %v540, 16
        %v555 = vadd.s32 %v547, 16
        %v556 = vsel %vm552, %v554, %v540
        %v557 = vsel %vm553, %v555, %v547
        %vm558 = vcmp.ge.s32.totalorder %v556, 1
        %vm559 = vcmp.ge.s32.totalorder %v557, 1
        %vm560 = vcmp.le.s32.totalorder %v556, 14
        %vm561 = vcmp.le.s32.totalorder %v557, 14
        %v562 = vld [vmem:[%s514] sm:$0xff]
        %v563 = vld [vmem:[%s514 + $0x8] sm:$0xff]
        %v564 = vpack.c.bf16 %v562, %v562
        %v565 = vpack.c.bf16 %v563, %v563
        %v568 = vunpack.c.l.b16 %v564
        %v569 = vunpack.c.l.b16 %v565
        %v570 = vpack.c.b16 %v569, %v568
        %571 = vrot.lane.b32.xlu0 %v570, 17
        %v572 = vpop.permute.xlu0 %571
        %v573 = vrot.slane %v572, 4
        %vm574 = vcmask 138240
        %v575 = vsel %vm574, %v573, %v572
        %vm578 = vcmask 1043592
        %vm579 = vcmask 1047556
        %vm580 = vmor %vm579, %vm578
        %581 = vst.msk [vmem:[#allocation2] sm:$0xff] %vm580, %v575
        %582 = vst.msk [vmem:[#allocation2 + $0x8] sm:$0xf] %vm523, %v573
        %v583 = vld [vmem:[%s449] sm:$0xff]
        %v585 = vcombine.high %v583, %v583
        %v587 = vpack.c.bf16 %v583, %v583
        %v588 = vpack.c.bf16 %v585, %v585
        %v591 = vunpack.c.l.b16 %v587
        %v592 = vunpack.c.l.b16 %v588
        %v593 = vpack.c.b16 %v592, %v591
        %594 = vrot.lane.b32.xlu0 %v593, 17
        %v595 = vpop.permute.xlu0 %594
        %v596 = vrot.slane %v595, 4
        %v597 = vsel %vm574, %v596, %v595
        %vm600 = vcmask 1041544
        %vm601 = vcmask 1045508
        %vm602 = vmor %vm601, %vm600
        %603 = vst.msk [vmem:[#allocation2 + $0xc] sm:$0x33] %vm602, %v597
        %604 = vst.msk [vmem:[#allocation2 + $0x14] sm:$0x3] %vm525, %v596
        %v605 = vld [vmem:[#allocation2] sm:$0xff]
        %v606 = vld [vmem:[#allocation2 + $0xc] sm:$0x33]
        %v607 = vsel %vm558, 1, 0
        %v608 = vsel %vm559, 1, 0
        %vm609 = vcmp.eq.s32.totalorder %v607, 1
        %vm610 = vcmp.eq.s32.totalorder %v608, 1
        %vm611 = vmpackc.low %vm610, %vm609
        %v612 = vsel %vm611, %v605, 0
        %v613 = vsel %vm611, %v606, 0
        %v614 = vld [vmem:[%s3] sm:$0xf]
        %v615 = vld [vmem:[%s3 + $0x4] sm:$0xf]
        %v616 = vld [vmem:[#allocation2 + $0x8] sm:$0xf]
        %v617 = vld [vmem:[#allocation2 + $0x14] sm:$0x3]
        %s618 = scalar_lea.vmem %s3, 8
        %v619 = vld [vmem:[%s618] sm:$0xf]
        %v620 = vld [vmem:[%s618 + $0x4] sm:$0xf]
        %v623 = vunpack.c.l.b16 %v619
        %v624 = vunpack.c.l.b16 %v620
        %v625 = vpack.c.b16 %v624, %v623
        %v630 = vunpack.c.l.b16 %v605
        %v631 = vunpack.c.h.b16 %v605
        %v632 = vunpack.c.l.b16 %v616
        %v633 = vunpack.c.l.b16 %v606
        %v634 = vunpack.c.h.b16 %v606
        %v635 = vunpack.c.l.b16 %v617
        %v636 = vpack.c.b16 %v633, %v630
        %v637 = vpack.c.b16 %v634, %v631
        %v638 = vpack.c.b16 %v635, %v632
        %639 = vrot.lane.b32.xlu0 %v636, 127
        %v640 = vpop.permute.xlu0 %639
        %641 = vrot.lane.b32.xlu0 %v637, 127
        %v642 = vpop.permute.xlu0 %641
        %643 = vrot.lane.b32.xlu0 %v638, 127
        %v644 = vpop.permute.xlu0 %643
        %vm645 = vcmask 1039360
        %v646 = vsel %vm645, %v640, %v642
        %v647 = vsel %vm645, %v642, %v644
        %vm648 = vcmask 97280
        %v650 = vsel %vm648, %v625, 0
        %vm652 = vcmask 1045504
        %v654 = vsel %vm652, %v646, 0
        %v657 = vsel %vm652, %v647, 0
        %659 = vmatprep.subr.bf16.mxu0 0
        %660 = vmatpush1.bf16.msra.mxu0 0
        %661 = vmatprep.subr.bf16.mxu0 0
        %662 = vmatpush1.bf16.msra.mxu0 0
        %663 = vmatprep.subr.bf16.mxu0 0
        %664 = vmatpush1.bf16.msra.mxu0 0
        %665 = vmatprep.subr.bf16.mxu0 0
        %666 = vmatpush1.bf16.msra.mxu0 0
        %667 = vmatprep.subr.bf16.mxu0 0
        %668 = vmatpush1.bf16.msra.mxu0 0
        %669 = vmatprep.subr.bf16.mxu0 0
        %670 = vmatpush1.bf16.msra.mxu0 0
        %671 = vmatprep.subr.bf16.mxu0 0
        %672 = vmatpush1.bf16.msra.mxu0 0
        %673 = vmatprep.subr.bf16.mxu0 %v657
        %674 = vmatpush1.bf16.msra.mxu0 %v654
        %675 = vmatprep.subr.bf16.mxu0 0
        %676 = vmatpush2.bf16.msra.mxu0 0
        %677 = vmatprep.subr.bf16.mxu0 0
        %678 = vmatpush2.bf16.msra.mxu0 0
        %679 = vmatprep.subr.bf16.mxu0 0
        %680 = vmatpush2.bf16.msra.mxu0 0
        %681 = vmatprep.subr.bf16.mxu0 0
        %682 = vmatpush2.bf16.msra.mxu0 0
        %683 = vmatprep.subr.bf16.mxu0 0
        %684 = vmatpush2.bf16.msra.mxu0 0
        %685 = vmatprep.subr.bf16.mxu0 0
        %686 = vmatpush2.bf16.msra.mxu0 0
        %687 = vmatprep.subr.bf16.mxu0 0
        %688 = vmatpush2.bf16.msra.mxu0 0
        %689 = vmatprep.subr.bf16.mxu0 0
        %690 = vmatpush2.bf16.msra.mxu0 0
        %691 = vmatprep.mubr.bf16.mxu0 0
        %692 = vmatmul.mubr.bf16.gmra.mxu0 %v650
        %v693 = vpop.f32.mrf.mxu0
        %v694 = vadd.f32 0.0, %v693
        %v695 = vpop.f32.mrf.mxu0
        %v696 = vadd.f32 0.0, %v695
        %v697 = vpop.f32.mrf.mxu0
        %v698 = vadd.f32 0.0, %v697
        %v699 = vpop.f32.mrf.mxu0
        %v700 = vadd.f32 0.0, %v699
        %701 = vdwg.mxu0
        %v704 = vunpack.c.l.b16 %v614
        %v705 = vunpack.c.l.b16 %v615
        %v706 = vpack.c.b16 %v705, %v704
        %v709 = vunpack.c.l.b16 %v612
        %v710 = vunpack.c.h.b16 %v612
        %v711 = vunpack.c.l.b16 %v613
        %v712 = vunpack.c.h.b16 %v613
        %v713 = vpack.c.b16 %v711, %v709
        %v714 = vpack.c.b16 %v712, %v710
        %v716 = vsel %vm648, %v706, 0
        %v719 = vsel %vm652, %v713, 0
        %v722 = vsel %vm652, %v714, 0
        %724 = vmatprep.subr.bf16.mxu0 0
        %725 = vmatpush1.bf16.msra.mxu0 0
        %726 = vmatprep.subr.bf16.mxu0 0
        %727 = vmatpush1.bf16.msra.mxu0 0
        %728 = vmatprep.subr.bf16.mxu0 0
        %729 = vmatpush1.bf16.msra.mxu0 0
        %730 = vmatprep.subr.bf16.mxu0 0
        %731 = vmatpush1.bf16.msra.mxu0 0
        %732 = vmatprep.subr.bf16.mxu0 0
        %733 = vmatpush1.bf16.msra.mxu0 0
        %734 = vmatprep.subr.bf16.mxu0 0
        %735 = vmatpush1.bf16.msra.mxu0 0
        %736 = vmatprep.subr.bf16.mxu0 0
        %737 = vmatpush1.bf16.msra.mxu0 0
        %738 = vmatprep.subr.bf16.mxu0 %v722
        %739 = vmatpush1.bf16.msra.mxu0 %v719
        %740 = vmatprep.subr.bf16.mxu0 0
        %741 = vmatpush2.bf16.msra.mxu0 0
        %742 = vmatprep.subr.bf16.mxu0 0
        %743 = vmatpush2.bf16.msra.mxu0 0
        %744 = vmatprep.subr.bf16.mxu0 0
        %745 = vmatpush2.bf16.msra.mxu0 0
        %746 = vmatprep.subr.bf16.mxu0 0
        %747 = vmatpush2.bf16.msra.mxu0 0
        %748 = vmatprep.subr.bf16.mxu0 0
        %749 = vmatpush2.bf16.msra.mxu0 0
        %750 = vmatprep.subr.bf16.mxu0 0
        %751 = vmatpush2.bf16.msra.mxu0 0
        %752 = vmatprep.subr.bf16.mxu0 0
        %753 = vmatpush2.bf16.msra.mxu0 0
        %754 = vmatprep.subr.bf16.mxu0 0
        %755 = vmatpush2.bf16.msra.mxu0 0
        %756 = vmatprep.mubr.bf16.mxu0 0
        %757 = vmatmul.mubr.bf16.gmra.mxu0 %v716
        %v758 = vpop.f32.mrf.mxu0
        %v759 = vadd.f32 %v694, %v758
        %v760 = vpop.f32.mrf.mxu0
        %v761 = vadd.f32 %v696, %v760
        %v762 = vpop.f32.mrf.mxu0
        %v763 = vadd.f32 %v698, %v762
        %v764 = vpop.f32.mrf.mxu0
        %v765 = vadd.f32 %v700, %v764
        %766 = vdwg.mxu0
        %v767 = vsel %vm560, 1, 0
        %v768 = vsel %vm561, 1, 0
        %vm769 = vcmp.eq.s32.totalorder %v767, 1
        %vm770 = vcmp.eq.s32.totalorder %v768, 1
        %vm771 = vmpackc.low %vm770, %vm769
        %v772 = vsel %vm771, 65537, 0
        %773 = vrot.lane.b32.xlu0 %v772, 2
        %v774 = vpop.permute.xlu0 %773
        %v775 = vrot.slane %v774, 4
        %vm776 = vcmask 15360
        %v777 = vsel %vm776, %v775, %v774
        %vm778 = vcmp.ne.s16.totalorder %v777, 0
        %vm779 = vcmp.ne.s16.totalorder %v775, 0
        %v780 = vsel %vm778, %v605, 0
        %v781 = vsel %vm779, %v616, 0
        %v782 = vsel %vm778, %v606, 0
        %v783 = vsel %vm779, %v617, 0
        %s784 = scalar_lea.vmem %s3, 16
        %v785 = vld [vmem:[%s784] sm:$0xf]
        %v786 = vld [vmem:[%s784 + $0x4] sm:$0xf]
        %v789 = vunpack.c.l.b16 %v785
        %v790 = vunpack.c.l.b16 %v786
        %v791 = vpack.c.b16 %v790, %v789
        %v796 = vunpack.c.l.b16 %v780
        %v797 = vunpack.c.h.b16 %v780
        %v798 = vunpack.c.l.b16 %v781
        %v799 = vunpack.c.l.b16 %v782
        %v800 = vunpack.c.h.b16 %v782
        %v801 = vunpack.c.l.b16 %v783
        %v802 = vpack.c.b16 %v799, %v796
        %v803 = vpack.c.b16 %v800, %v797
        %v804 = vpack.c.b16 %v801, %v798
        %805 = vrot.lane.b32.xlu0 %v802, 126
        %v806 = vpop.permute.xlu0 %805
        %807 = vrot.lane.b32.xlu0 %v803, 126
        %v808 = vpop.permute.xlu0 %807
        %809 = vrot.lane.b32.xlu0 %v804, 126
        %v810 = vpop.permute.xlu0 %809
        %vm811 = vcmask 1031168
        %v812 = vsel %vm811, %v806, %v808
        %v813 = vsel %vm811, %v808, %v810
        %v815 = vsel %vm648, %v791, 0
        %v818 = vsel %vm652, %v812, 0
        %v821 = vsel %vm652, %v813, 0
        %823 = vmatprep.subr.bf16.mxu0 0
        %824 = vmatpush1.bf16.msra.mxu0 0
        %825 = vmatprep.subr.bf16.mxu0 0
        %826 = vmatpush1.bf16.msra.mxu0 0
        %827 = vmatprep.subr.bf16.mxu0 0
        %828 = vmatpush1.bf16.msra.mxu0 0
        %829 = vmatprep.subr.bf16.mxu0 0
        %830 = vmatpush1.bf16.msra.mxu0 0
        %831 = vmatprep.subr.bf16.mxu0 0
        %832 = vmatpush1.bf16.msra.mxu0 0
        %833 = vmatprep.subr.bf16.mxu0 0
        %834 = vmatpush1.bf16.msra.mxu0 0
        %835 = vmatprep.subr.bf16.mxu0 0
        %836 = vmatpush1.bf16.msra.mxu0 0
        %837 = vmatprep.subr.bf16.mxu0 %v821
        %838 = vmatpush1.bf16.msra.mxu0 %v818
        %839 = vmatprep.subr.bf16.mxu0 0
        %840 = vmatpush2.bf16.msra.mxu0 0
        %841 = vmatprep.subr.bf16.mxu0 0
        %842 = vmatpush2.bf16.msra.mxu0 0
        %843 = vmatprep.subr.bf16.mxu0 0
        %844 = vmatpush2.bf16.msra.mxu0 0
        %845 = vmatprep.subr.bf16.mxu0 0
        %846 = vmatpush2.bf16.msra.mxu0 0
        %847 = vmatprep.subr.bf16.mxu0 0
        %848 = vmatpush2.bf16.msra.mxu0 0
        %849 = vmatprep.subr.bf16.mxu0 0
        %850 = vmatpush2.bf16.msra.mxu0 0
        %851 = vmatprep.subr.bf16.mxu0 0
        %852 = vmatpush2.bf16.msra.mxu0 0
        %853 = vmatprep.subr.bf16.mxu0 0
        %854 = vmatpush2.bf16.msra.mxu0 0
        %855 = vmatprep.mubr.bf16.mxu0 0
        %856 = vmatmul.mubr.bf16.gmra.mxu0 %v815
        %v857 = vpop.f32.mrf.mxu0
        %v858 = vadd.f32 0.0, %v857
        %v859 = vpop.f32.mrf.mxu0
        %v860 = vadd.f32 0.0, %v859
        %v861 = vpop.f32.mrf.mxu0
        %v862 = vadd.f32 0.0, %v861
        %v863 = vpop.f32.mrf.mxu0
        %v864 = vadd.f32 0.0, %v863
        %865 = vdwg.mxu0
        %v866 = vadd.f32 %v759, %v858
        %v867 = vadd.f32 %v761, %v860
        %v868 = vadd.f32 %v763, %v862
        %v869 = vadd.f32 %v765, %v864
        %v870 = vsel %vm611, 65537, 0
        %871 = vrot.lane.b32.xlu0 %v870, 16
        %v872 = vpop.permute.xlu0 %871
        %v873 = vrot.slane %v872, 4
        %vm874 = vcmask 130048
        %v875 = vsel %vm874, %v873, %v872
        %vm876 = vcmp.ne.s16.totalorder %v875, 0
        %vm877 = vcmp.ne.s16.totalorder %v873, 0
        %v878 = vsel %vm876, %v605, 0
        %v879 = vsel %vm877, %v616, 0
        %v880 = vsel %vm876, %v606, 0
        %v881 = vsel %vm877, %v617, 0
        %s882 = scalar_lea.vmem %s3, 24
        %v883 = vld [vmem:[%s882] sm:$0xf]
        %v884 = vld [vmem:[%s882 + $0x4] sm:$0xf]
        %v887 = vunpack.c.l.b16 %v883
        %v888 = vunpack.c.l.b16 %v884
        %v889 = vpack.c.b16 %v888, %v887
        %v894 = vunpack.c.l.b16 %v878
        %v895 = vunpack.c.h.b16 %v878
        %v896 = vunpack.c.l.b16 %v879
        %v897 = vunpack.c.l.b16 %v880
        %v898 = vunpack.c.h.b16 %v880
        %v899 = vunpack.c.l.b16 %v881
        %v900 = vpack.c.b16 %v897, %v894
        %v901 = vpack.c.b16 %v898, %v895
        %v902 = vpack.c.b16 %v899, %v896
        %903 = vrot.lane.b32.xlu0 %v900, 112
        %v904 = vpop.permute.xlu0 %903
        %905 = vrot.lane.b32.xlu0 %v901, 112
        %v906 = vpop.permute.xlu0 %905
        %907 = vrot.lane.b32.xlu0 %v902, 112
        %v908 = vpop.permute.xlu0 %907
        %vm909 = vcmask 916480
        %v910 = vsel %vm909, %v904, %v906
        %v911 = vsel %vm909, %v906, %v908
        %v913 = vsel %vm648, %v889, 0
        %v916 = vsel %vm652, %v910, 0
        %v919 = vsel %vm652, %v911, 0
        %921 = vmatprep.subr.bf16.mxu0 0
        %922 = vmatpush1.bf16.msra.mxu0 0
        %923 = vmatprep.subr.bf16.mxu0 0
        %924 = vmatpush1.bf16.msra.mxu0 0
        %925 = vmatprep.subr.bf16.mxu0 0
        %926 = vmatpush1.bf16.msra.mxu0 0
        %927 = vmatprep.subr.bf16.mxu0 0
        %928 = vmatpush1.bf16.msra.mxu0 0
        %929 = vmatprep.subr.bf16.mxu0 0
        %930 = vmatpush1.bf16.msra.mxu0 0
        %931 = vmatprep.subr.bf16.mxu0 0
        %932 = vmatpush1.bf16.msra.mxu0 0
        %933 = vmatprep.subr.bf16.mxu0 0
        %934 = vmatpush1.bf16.msra.mxu0 0
        %935 = vmatprep.subr.bf16.mxu0 %v919
        %936 = vmatpush1.bf16.msra.mxu0 %v916
        %937 = vmatprep.subr.bf16.mxu0 0
        %938 = vmatpush2.bf16.msra.mxu0 0
        %939 = vmatprep.subr.bf16.mxu0 0
        %940 = vmatpush2.bf16.msra.mxu0 0
        %941 = vmatprep.subr.bf16.mxu0 0
        %942 = vmatpush2.bf16.msra.mxu0 0
        %943 = vmatprep.subr.bf16.mxu0 0
        %944 = vmatpush2.bf16.msra.mxu0 0
        %945 = vmatprep.subr.bf16.mxu0 0
        %946 = vmatpush2.bf16.msra.mxu0 0
        %947 = vmatprep.subr.bf16.mxu0 0
        %948 = vmatpush2.bf16.msra.mxu0 0
        %949 = vmatprep.subr.bf16.mxu0 0
        %950 = vmatpush2.bf16.msra.mxu0 0
        %951 = vmatprep.subr.bf16.mxu0 0
        %952 = vmatpush2.bf16.msra.mxu0 0
        %953 = vmatprep.mubr.bf16.mxu0 0
        %954 = vmatmul.mubr.bf16.gmra.mxu0 %v913
        %v955 = vpop.f32.mrf.mxu0
        %v956 = vadd.f32 0.0, %v955
        %v957 = vpop.f32.mrf.mxu0
        %v958 = vadd.f32 0.0, %v957
        %v959 = vpop.f32.mrf.mxu0
        %v960 = vadd.f32 0.0, %v959
        %v961 = vpop.f32.mrf.mxu0
        %v962 = vadd.f32 0.0, %v961
        %963 = vdwg.mxu0
        %v964 = vadd.f32 %v866, %v956
        %v965 = vadd.f32 %v867, %v958
        %v966 = vadd.f32 %v868, %v960
        %v967 = vadd.f32 %v869, %v962
        %s968 = scalar_lea.vmem %s3, 32
        %v969 = vld [vmem:[%s968] sm:$0xf]
        %v970 = vld [vmem:[%s968 + $0x4] sm:$0xf]
        %v973 = vunpack.c.l.b16 %v969
        %v974 = vunpack.c.l.b16 %v970
        %v975 = vpack.c.b16 %v974, %v973
        %976 = vrot.lane.b32.xlu0 %v636, 111
        %v977 = vpop.permute.xlu0 %976
        %978 = vrot.lane.b32.xlu0 %v637, 111
        %v979 = vpop.permute.xlu0 %978
        %980 = vrot.lane.b32.xlu0 %v638, 111
        %v981 = vpop.permute.xlu0 %980
        %vm982 = vcmask 908288
        %v983 = vsel %vm982, %v977, %v979
        %v984 = vsel %vm982, %v979, %v981
        %v986 = vsel %vm648, %v975, 0
        %v989 = vsel %vm652, %v983, 0
        %v992 = vsel %vm652, %v984, 0
        %994 = vmatprep.subr.bf16.mxu0 0
        %995 = vmatpush1.bf16.msra.mxu0 0
        %996 = vmatprep.subr.bf16.mxu0 0
        %997 = vmatpush1.bf16.msra.mxu0 0
        %998 = vmatprep.subr.bf16.mxu0 0
        %999 = vmatpush1.bf16.msra.mxu0 0
        %1000 = vmatprep.subr.bf16.mxu0 0
        %1001 = vmatpush1.bf16.msra.mxu0 0
        %1002 = vmatprep.subr.bf16.mxu0 0
        %1003 = vmatpush1.bf16.msra.mxu0 0
        %1004 = vmatprep.subr.bf16.mxu0 0
        %1005 = vmatpush1.bf16.msra.mxu0 0
        %1006 = vmatprep.subr.bf16.mxu0 0
        %1007 = vmatpush1.bf16.msra.mxu0 0
        %1008 = vmatprep.subr.bf16.mxu0 %v992
        %1009 = vmatpush1.bf16.msra.mxu0 %v989
        %1010 = vmatprep.subr.bf16.mxu0 0
        %1011 = vmatpush2.bf16.msra.mxu0 0
        %1012 = vmatprep.subr.bf16.mxu0 0
        %1013 = vmatpush2.bf16.msra.mxu0 0
        %1014 = vmatprep.subr.bf16.mxu0 0
        %1015 = vmatpush2.bf16.msra.mxu0 0
        %1016 = vmatprep.subr.bf16.mxu0 0
        %1017 = vmatpush2.bf16.msra.mxu0 0
        %1018 = vmatprep.subr.bf16.mxu0 0
        %1019 = vmatpush2.bf16.msra.mxu0 0
        %1020 = vmatprep.subr.bf16.mxu0 0
        %1021 = vmatpush2.bf16.msra.mxu0 0
        %1022 = vmatprep.subr.bf16.mxu0 0
        %1023 = vmatpush2.bf16.msra.mxu0 0
        %1024 = vmatprep.subr.bf16.mxu0 0
        %1025 = vmatpush2.bf16.msra.mxu0 0
        %1026 = vmatprep.mubr.bf16.mxu0 0
        %1027 = vmatmul.mubr.bf16.gmra.mxu0 %v986
        %v1028 = vpop.f32.mrf.mxu0
        %v1029 = vadd.f32 0.0, %v1028
        %v1030 = vpop.f32.mrf.mxu0
        %v1031 = vadd.f32 0.0, %v1030
        %v1032 = vpop.f32.mrf.mxu0
        %v1033 = vadd.f32 0.0, %v1032
        %v1034 = vpop.f32.mrf.mxu0
        %v1035 = vadd.f32 0.0, %v1034
        %1036 = vdwg.mxu0
        %v1037 = vadd.f32 %v964, %v1029
        %v1038 = vadd.f32 %v965, %v1031
        %v1039 = vadd.f32 %v966, %v1033
        %v1040 = vadd.f32 %v967, %v1035
        %1041 = vrot.lane.b32.xlu0 %v772, 18
        %v1042 = vpop.permute.xlu0 %1041
        %v1043 = vrot.slane %v1042, 4
        %vm1044 = vcmask 146432
        %v1045 = vsel %vm1044, %v1043, %v1042
        %vm1046 = vcmp.ne.s16.totalorder %v1045, 0
        %vm1047 = vcmp.ne.s16.totalorder %v1043, 0
        %v1048 = vsel %vm1046, %v605, 0
        %v1049 = vsel %vm1047, %v616, 0
        %v1050 = vsel %vm1046, %v606, 0
        %v1051 = vsel %vm1047, %v617, 0
        %s1052 = scalar_lea.vmem %s3, 40
        %v1053 = vld [vmem:[%s1052] sm:$0xf]
        %v1054 = vld [vmem:[%s1052 + $0x4] sm:$0xf]
        %v1057 = vunpack.c.l.b16 %v1053
        %v1058 = vunpack.c.l.b16 %v1054
        %v1059 = vpack.c.b16 %v1058, %v1057
        %v1064 = vunpack.c.l.b16 %v1048
        %v1065 = vunpack.c.h.b16 %v1048
        %v1066 = vunpack.c.l.b16 %v1049
        %v1067 = vunpack.c.l.b16 %v1050
        %v1068 = vunpack.c.h.b16 %v1050
        %v1069 = vunpack.c.l.b16 %v1051
        %v1070 = vpack.c.b16 %v1067, %v1064
        %v1071 = vpack.c.b16 %v1068, %v1065
        %v1072 = vpack.c.b16 %v1069, %v1066
        %1073 = vrot.lane.b32.xlu0 %v1070, 110
        %v1074 = vpop.permute.xlu0 %1073
        %1075 = vrot.lane.b32.xlu0 %v1071, 110
        %v1076 = vpop.permute.xlu0 %1075
        %1077 = vrot.lane.b32.xlu0 %v1072, 110
        %v1078 = vpop.permute.xlu0 %1077
        %vm1079 = vcmask 900096
        %v1080 = vsel %vm1079, %v1074, %v1076
        %v1081 = vsel %vm1079, %v1076, %v1078
        %v1083 = vsel %vm648, %v1059, 0
        %v1086 = vsel %vm652, %v1080, 0
        %v1089 = vsel %vm652, %v1081, 0
        %1091 = vmatprep.subr.bf16.mxu0 0
        %1092 = vmatpush1.bf16.msra.mxu0 0
        %1093 = vmatprep.subr.bf16.mxu0 0
        %1094 = vmatpush1.bf16.msra.mxu0 0
        %1095 = vmatprep.subr.bf16.mxu0 0
        %1096 = vmatpush1.bf16.msra.mxu0 0
        %1097 = vmatprep.subr.bf16.mxu0 0
        %1098 = vmatpush1.bf16.msra.mxu0 0
        %1099 = vmatprep.subr.bf16.mxu0 0
        %1100 = vmatpush1.bf16.msra.mxu0 0
        %1101 = vmatprep.subr.bf16.mxu0 0
        %1102 = vmatpush1.bf16.msra.mxu0 0
        %1103 = vmatprep.subr.bf16.mxu0 0
        %1104 = vmatpush1.bf16.msra.mxu0 0
        %1105 = vmatprep.subr.bf16.mxu0 %v1089
        %1106 = vmatpush1.bf16.msra.mxu0 %v1086
        %1107 = vmatprep.subr.bf16.mxu0 0
        %1108 = vmatpush2.bf16.msra.mxu0 0
        %1109 = vmatprep.subr.bf16.mxu0 0
        %1110 = vmatpush2.bf16.msra.mxu0 0
        %1111 = vmatprep.subr.bf16.mxu0 0
        %1112 = vmatpush2.bf16.msra.mxu0 0
        %1113 = vmatprep.subr.bf16.mxu0 0
        %1114 = vmatpush2.bf16.msra.mxu0 0
        %1115 = vmatprep.subr.bf16.mxu0 0
        %1116 = vmatpush2.bf16.msra.mxu0 0
        %1117 = vmatprep.subr.bf16.mxu0 0
        %1118 = vmatpush2.bf16.msra.mxu0 0
        %1119 = vmatprep.subr.bf16.mxu0 0
        %1120 = vmatpush2.bf16.msra.mxu0 0
        %1121 = vmatprep.subr.bf16.mxu0 0
        %1122 = vmatpush2.bf16.msra.mxu0 0
        %1123 = vmatprep.mubr.bf16.mxu0 0
        %1124 = vmatmul.mubr.bf16.gmra.mxu0 %v1083
        %v1125 = vpop.f32.mrf.mxu0
        %v1126 = vadd.f32 0.0, %v1125
        %v1127 = vpop.f32.mrf.mxu0
        %v1128 = vadd.f32 0.0, %v1127
        %v1129 = vpop.f32.mrf.mxu0
        %v1130 = vadd.f32 0.0, %v1129
        %v1131 = vpop.f32.mrf.mxu0
        %v1132 = vadd.f32 0.0, %v1131
        %1133 = vdwg.mxu0
        %v1134 = vadd.f32 %v1037, %v1126
        %v1135 = vadd.f32 %v1038, %v1128
        %v1136 = vadd.f32 %v1039, %v1130
        %v1137 = vadd.f32 %v1040, %v1132
        %1138 = vrot.lane.b32.xlu0 %v870, 32
        %v1139 = vpop.permute.xlu0 %1138
        %v1140 = vrot.slane %v1139, 4
        %vm1141 = vcmask 261120
        %v1142 = vsel %vm1141, %v1140, %v1139
        %vm1143 = vcmp.ne.s16.totalorder %v1142, 0
        %vm1144 = vcmp.ne.s16.totalorder %v1140, 0
        %v1145 = vsel %vm1143, %v605, 0
        %v1146 = vsel %vm1144, %v616, 0
        %v1147 = vsel %vm1143, %v606, 0
        %v1148 = vsel %vm1144, %v617, 0
        %s1149 = scalar_lea.vmem %s3, 48
        %v1150 = vld [vmem:[%s1149] sm:$0xf]
        %v1151 = vld [vmem:[%s1149 + $0x4] sm:$0xf]
        %v1154 = vunpack.c.l.b16 %v1150
        %v1155 = vunpack.c.l.b16 %v1151
        %v1156 = vpack.c.b16 %v1155, %v1154
        %v1161 = vunpack.c.l.b16 %v1145
        %v1162 = vunpack.c.h.b16 %v1145
        %v1163 = vunpack.c.l.b16 %v1146
        %v1164 = vunpack.c.l.b16 %v1147
        %v1165 = vunpack.c.h.b16 %v1147
        %v1166 = vunpack.c.l.b16 %v1148
        %v1167 = vpack.c.b16 %v1164, %v1161
        %v1168 = vpack.c.b16 %v1165, %v1162
        %v1169 = vpack.c.b16 %v1166, %v1163
        %1170 = vrot.lane.b32.xlu0 %v1167, 96
        %v1171 = vpop.permute.xlu0 %1170
        %1172 = vrot.lane.b32.xlu0 %v1168, 96
        %v1173 = vpop.permute.xlu0 %1172
        %1174 = vrot.lane.b32.xlu0 %v1169, 96
        %v1175 = vpop.permute.xlu0 %1174
        %vm1176 = vcmask 785408
        %v1177 = vsel %vm1176, %v1171, %v1173
        %v1178 = vsel %vm1176, %v1173, %v1175
        %v1180 = vsel %vm648, %v1156, 0
        %v1183 = vsel %vm652, %v1177, 0
        %v1186 = vsel %vm652, %v1178, 0
        %1188 = vmatprep.subr.bf16.mxu0 0
        %1189 = vmatpush1.bf16.msra.mxu0 0
        %1190 = vmatprep.subr.bf16.mxu0 0
        %1191 = vmatpush1.bf16.msra.mxu0 0
        %1192 = vmatprep.subr.bf16.mxu0 0
        %1193 = vmatpush1.bf16.msra.mxu0 0
        %1194 = vmatprep.subr.bf16.mxu0 0
        %1195 = vmatpush1.bf16.msra.mxu0 0
        %1196 = vmatprep.subr.bf16.mxu0 0
        %1197 = vmatpush1.bf16.msra.mxu0 0
        %1198 = vmatprep.subr.bf16.mxu0 0
        %1199 = vmatpush1.bf16.msra.mxu0 0
        %1200 = vmatprep.subr.bf16.mxu0 0
        %1201 = vmatpush1.bf16.msra.mxu0 0
        %1202 = vmatprep.subr.bf16.mxu0 %v1186
        %1203 = vmatpush1.bf16.msra.mxu0 %v1183
        %1204 = vmatprep.subr.bf16.mxu0 0
        %1205 = vmatpush2.bf16.msra.mxu0 0
        %1206 = vmatprep.subr.bf16.mxu0 0
        %1207 = vmatpush2.bf16.msra.mxu0 0
        %1208 = vmatprep.subr.bf16.mxu0 0
        %1209 = vmatpush2.bf16.msra.mxu0 0
        %1210 = vmatprep.subr.bf16.mxu0 0
        %1211 = vmatpush2.bf16.msra.mxu0 0
        %1212 = vmatprep.subr.bf16.mxu0 0
        %1213 = vmatpush2.bf16.msra.mxu0 0
        %1214 = vmatprep.subr.bf16.mxu0 0
        %1215 = vmatpush2.bf16.msra.mxu0 0
        %1216 = vmatprep.subr.bf16.mxu0 0
        %1217 = vmatpush2.bf16.msra.mxu0 0
        %1218 = vmatprep.subr.bf16.mxu0 0
        %1219 = vmatpush2.bf16.msra.mxu0 0
        %1220 = vmatprep.mubr.bf16.mxu0 0
        %1221 = vmatmul.mubr.bf16.gmra.mxu0 %v1180
        %v1222 = vpop.f32.mrf.mxu0
        %v1223 = vadd.f32 0.0, %v1222
        %v1224 = vpop.f32.mrf.mxu0
        %v1225 = vadd.f32 0.0, %v1224
        %v1226 = vpop.f32.mrf.mxu0
        %v1227 = vadd.f32 0.0, %v1226
        %v1228 = vpop.f32.mrf.mxu0
        %v1229 = vadd.f32 0.0, %v1228
        %1230 = vdwg.mxu0
        %v1231 = vadd.f32 %v1134, %v1223
        %v1232 = vadd.f32 %v1135, %v1225
        %v1233 = vadd.f32 %v1136, %v1227
        %v1234 = vadd.f32 %v1137, %v1229
        %s1235 = scalar_lea.vmem %s3, 56
        %v1236 = vld [vmem:[%s1235] sm:$0xf]
        %v1237 = vld [vmem:[%s1235 + $0x4] sm:$0xf]
        %v1240 = vunpack.c.l.b16 %v1236
        %v1241 = vunpack.c.l.b16 %v1237
        %v1242 = vpack.c.b16 %v1241, %v1240
        %1243 = vrot.lane.b32.xlu0 %v636, 95
        %v1244 = vpop.permute.xlu0 %1243
        %1245 = vrot.lane.b32.xlu0 %v637, 95
        %v1246 = vpop.permute.xlu0 %1245
        %1247 = vrot.lane.b32.xlu0 %v638, 95
        %v1248 = vpop.permute.xlu0 %1247
        %vm1249 = vcmask 777216
        %v1250 = vsel %vm1249, %v1244, %v1246
        %v1251 = vsel %vm1249, %v1246, %v1248
        %v1253 = vsel %vm648, %v1242, 0
        %v1256 = vsel %vm652, %v1250, 0
        %v1259 = vsel %vm652, %v1251, 0
        %1261 = vmatprep.subr.bf16.mxu0 0
        %1262 = vmatpush1.bf16.msra.mxu0 0
        %1263 = vmatprep.subr.bf16.mxu0 0
        %1264 = vmatpush1.bf16.msra.mxu0 0
        %1265 = vmatprep.subr.bf16.mxu0 0
        %1266 = vmatpush1.bf16.msra.mxu0 0
        %1267 = vmatprep.subr.bf16.mxu0 0
        %1268 = vmatpush1.bf16.msra.mxu0 0
        %1269 = vmatprep.subr.bf16.mxu0 0
        %1270 = vmatpush1.bf16.msra.mxu0 0
        %1271 = vmatprep.subr.bf16.mxu0 0
        %1272 = vmatpush1.bf16.msra.mxu0 0
        %1273 = vmatprep.subr.bf16.mxu0 0
        %1274 = vmatpush1.bf16.msra.mxu0 0
        %1275 = vmatprep.subr.bf16.mxu0 %v1259
        %1276 = vmatpush1.bf16.msra.mxu0 %v1256
        %1277 = vmatprep.subr.bf16.mxu0 0
        %1278 = vmatpush2.bf16.msra.mxu0 0
        %1279 = vmatprep.subr.bf16.mxu0 0
        %1280 = vmatpush2.bf16.msra.mxu0 0
        %1281 = vmatprep.subr.bf16.mxu0 0
        %1282 = vmatpush2.bf16.msra.mxu0 0
        %1283 = vmatprep.subr.bf16.mxu0 0
        %1284 = vmatpush2.bf16.msra.mxu0 0
        %1285 = vmatprep.subr.bf16.mxu0 0
        %1286 = vmatpush2.bf16.msra.mxu0 0
        %1287 = vmatprep.subr.bf16.mxu0 0
        %1288 = vmatpush2.bf16.msra.mxu0 0
        %1289 = vmatprep.subr.bf16.mxu0 0
        %1290 = vmatpush2.bf16.msra.mxu0 0
        %1291 = vmatprep.subr.bf16.mxu0 0
        %1292 = vmatpush2.bf16.msra.mxu0 0
        %1293 = vmatprep.mubr.bf16.mxu0 0
        %1294 = vmatmul.mubr.bf16.gmra.mxu0 %v1253
        %v1295 = vpop.f32.mrf.mxu0
        %v1296 = vadd.f32 0.0, %v1295
        %v1297 = vpop.f32.mrf.mxu0
        %v1298 = vadd.f32 0.0, %v1297
        %v1299 = vpop.f32.mrf.mxu0
        %v1300 = vadd.f32 0.0, %v1299
        %v1301 = vpop.f32.mrf.mxu0
        %v1302 = vadd.f32 0.0, %v1301
        %1303 = vdwg.mxu0
        %v1304 = vadd.f32 %v1231, %v1296
        %v1305 = vadd.f32 %v1232, %v1298
        %v1306 = vadd.f32 %v1233, %v1300
        %v1307 = vadd.f32 %v1234, %v1302
        %1308 = vrot.lane.b32.xlu0 %v772, 34
        %v1309 = vpop.permute.xlu0 %1308
        %v1310 = vrot.slane %v1309, 4
        %vm1311 = vcmask 277504
        %v1312 = vsel %vm1311, %v1310, %v1309
        %vm1313 = vcmp.ne.s16.totalorder %v1312, 0
        %vm1314 = vcmp.ne.s16.totalorder %v1310, 0
        %v1315 = vsel %vm1313, %v605, 0
        %v1316 = vsel %vm1314, %v616, 0
        %v1317 = vsel %vm1313, %v606, 0
        %v1318 = vsel %vm1314, %v617, 0
        %s1319 = scalar_lea.vmem %s3, 64
        %v1320 = vld [vmem:[%s1319] sm:$0xf]
        %v1321 = vld [vmem:[%s1319 + $0x4] sm:$0xf]
        %v1324 = vunpack.c.l.b16 %v1320
        %v1325 = vunpack.c.l.b16 %v1321
        %v1326 = vpack.c.b16 %v1325, %v1324
        %v1331 = vunpack.c.l.b16 %v1315
        %v1332 = vunpack.c.h.b16 %v1315
        %v1333 = vunpack.c.l.b16 %v1316
        %v1334 = vunpack.c.l.b16 %v1317
        %v1335 = vunpack.c.h.b16 %v1317
        %v1336 = vunpack.c.l.b16 %v1318
        %v1337 = vpack.c.b16 %v1334, %v1331
        %v1338 = vpack.c.b16 %v1335, %v1332
        %v1339 = vpack.c.b16 %v1336, %v1333
        %1340 = vrot.lane.b32.xlu0 %v1337, 94
        %v1341 = vpop.permute.xlu0 %1340
        %1342 = vrot.lane.b32.xlu0 %v1338, 94
        %v1343 = vpop.permute.xlu0 %1342
        %1344 = vrot.lane.b32.xlu0 %v1339, 94
        %v1345 = vpop.permute.xlu0 %1344
        %vm1346 = vcmask 769024
        %v1347 = vsel %vm1346, %v1341, %v1343
        %v1348 = vsel %vm1346, %v1343, %v1345
        %v1350 = vsel %vm648, %v1326, 0
        %v1353 = vsel %vm652, %v1347, 0
        %v1356 = vsel %vm652, %v1348, 0
        %1358 = vmatprep.subr.bf16.mxu0 0
        %1359 = vmatpush1.bf16.msra.mxu0 0
        %1360 = vmatprep.subr.bf16.mxu0 0
        %1361 = vmatpush1.bf16.msra.mxu0 0
        %1362 = vmatprep.subr.bf16.mxu0 0
        %1363 = vmatpush1.bf16.msra.mxu0 0
        %1364 = vmatprep.subr.bf16.mxu0 0
        %1365 = vmatpush1.bf16.msra.mxu0 0
        %1366 = vmatprep.subr.bf16.mxu0 0
        %1367 = vmatpush1.bf16.msra.mxu0 0
        %1368 = vmatprep.subr.bf16.mxu0 0
        %1369 = vmatpush1.bf16.msra.mxu0 0
        %1370 = vmatprep.subr.bf16.mxu0 0
        %1371 = vmatpush1.bf16.msra.mxu0 0
        %1372 = vmatprep.subr.bf16.mxu0 %v1356
        %1373 = vmatpush1.bf16.msra.mxu0 %v1353
        %1374 = vmatprep.subr.bf16.mxu0 0
        %1375 = vmatpush2.bf16.msra.mxu0 0
        %1376 = vmatprep.subr.bf16.mxu0 0
        %1377 = vmatpush2.bf16.msra.mxu0 0
        %1378 = vmatprep.subr.bf16.mxu0 0
        %1379 = vmatpush2.bf16.msra.mxu0 0
        %1380 = vmatprep.subr.bf16.mxu0 0
        %1381 = vmatpush2.bf16.msra.mxu0 0
        %1382 = vmatprep.subr.bf16.mxu0 0
        %1383 = vmatpush2.bf16.msra.mxu0 0
        %1384 = vmatprep.subr.bf16.mxu0 0
        %1385 = vmatpush2.bf16.msra.mxu0 0
        %1386 = vmatprep.subr.bf16.mxu0 0
        %1387 = vmatpush2.bf16.msra.mxu0 0
        %1388 = vmatprep.subr.bf16.mxu0 0
        %1389 = vmatpush2.bf16.msra.mxu0 0
        %1390 = vmatprep.mubr.bf16.mxu0 0
        %1391 = vmatmul.mubr.bf16.gmra.mxu0 %v1350
        %v1392 = vpop.f32.mrf.mxu0
        %v1393 = vadd.f32 0.0, %v1392
        %v1394 = vpop.f32.mrf.mxu0
        %v1395 = vadd.f32 0.0, %v1394
        %v1396 = vpop.f32.mrf.mxu0
        %v1397 = vadd.f32 0.0, %v1396
        %v1398 = vpop.f32.mrf.mxu0
        %v1399 = vadd.f32 0.0, %v1398
        %1400 = vdwg.mxu0
        %v1401 = vadd.f32 %v1304, %v1393
        %v1402 = vadd.f32 %v1305, %v1395
        %v1403 = vadd.f32 %v1306, %v1397
        %v1404 = vadd.f32 %v1307, %v1399
        %v1405 = vld [vmem:[%s4] sm:$0xff]
        %v1406 = vld [vmem:[%s4 + $0x8] sm:$0xff]
        %1408 = vset.pattern.permute.xlu0 0
        %1409 = vperm.xlu0 %1408, %v1405
        %v1410 = vpop.permute.xlu0 %1409
        %1413 = vset.pattern.permute.xlu0 0
        %1414 = vperm.xlu0 %1413, %v1406
        %v1415 = vpop.permute.xlu0 %1414
        %v1417 = vadd.f32 %v1401, %v1410
        %v1418 = vadd.f32 %v1402, %v1410
        %v1419 = vadd.f32 %v1403, %v1415
        %v1420 = vadd.f32 %v1404, %v1415
        %v1421 = vxor.u32 %v1417, 2147483648
        %v1422 = vxor.u32 %v1418, 2147483648
        %v1423 = vxor.u32 %v1419, 2147483648
        %v1424 = vxor.u32 %v1420, 2147483648
        %v1425 = vmul.f32 %v1421, 1.442695
        %v1426 = vpow.pop %v1425
        %v1427 = vmul.f32 %v1422, 1.442695
        %v1428 = vpow.pop %v1427
        %v1429 = vmul.f32 %v1423, 1.442695
        %v1430 = vpow.pop %v1429
        %v1431 = vmul.f32 %v1424, 1.442695
        %v1432 = vpow.pop %v1431
        %v1433 = vadd.f32 %v1426, 1.0
        %v1434 = vadd.f32 %v1428, 1.0
        %v1435 = vadd.f32 %v1430, 1.0
        %v1436 = vadd.f32 %v1432, 1.0
        %v1437 = vrcp.pop %v1433
        %v1438 = vmul.f32 1.0, %v1437
        %v1439 = vrcp.pop %v1434
        %v1440 = vmul.f32 1.0, %v1439
        %v1441 = vrcp.pop %v1435
        %v1442 = vmul.f32 1.0, %v1441
        %v1443 = vrcp.pop %v1436
        %v1444 = vmul.f32 1.0, %v1443
        %v1445 = vtanh.pop %v1419
        %v1446 = vtanh.pop %v1420
        %v1447 = vld [vmem:[%s456] sm:$0xff]
        %v1449 = vcombine.low %v1447, %v1447
        %v1451 = vmul.f32 %v1438, %v1449
        %v1452 = vmul.f32 %v1440, %v1447
        %v1455 = vrot.slane %v1445, 4
        %v1456 = vrot.slane %v1446, 4
        %v1459 = vmul.f32 %v1438, %v1455
        %v1460 = vmul.f32 %v1440, %v1456
        %v1463 = vrot.slane %v1459, 4
        %v1464 = vrot.slane %v1460, 4
        %v1467 = vadd.f32 %v1451, %v1463
        %v1468 = vadd.f32 %v1452, %v1464
        %v1469 = vtanh.pop %v1467
        %v1470 = vtanh.pop %v1468
        %v1473 = vrot.slane %v1469, 4
        %v1474 = vrot.slane %v1470, 4
        %v1477 = vmul.f32 %v1442, %v1473
        %v1478 = vmul.f32 %v1444, %v1474
        %v1481 = vcombine.low %v1477, %v1478
        %1483 = vst [vmem:[%s496] sm:$0xff] %v1481
        %v1486 = vcombine.high %v1467, %v1468
        %1488 = vst [vmem:[%s502] sm:$0xff] %v1486
        %v1489 = vpack.c.bf16 %v1477, %v1477
        %v1490 = vpack.c.bf16 %v1478, %v1478
        %v1493 = vunpack.c.l.b16 %v1489
        %v1494 = vunpack.c.l.b16 %v1490
        %v1495 = vpack.c.b16 %v1494, %v1493
        %1496 = vrot.lane.b32.xlu0 %v1495, 17
        %v1497 = vpop.permute.xlu0 %1496
        %v1498 = vrot.slane %v1497, 4
        %v1499 = vsel %vm574, %v1498, %v1497
        %1502 = vst.msk [vmem:[#allocation2] sm:$0x33] %vm602, %v1499
        %1503 = vst.msk [vmem:[#allocation2 + $0x8] sm:$0x3] %vm525, %v1498
        %s1504 = scalar_lea.vmem %s449, 8 [#allocation3]
        %v1505 = vld [vmem:[%s1504] sm:$0xff]
        %v1507 = vcombine.high %v1505, %v1505
        %v1509 = vpack.c.bf16 %v1505, %v1505
        %v1510 = vpack.c.bf16 %v1507, %v1507
        %v1513 = vunpack.c.l.b16 %v1509
        %v1514 = vunpack.c.l.b16 %v1510
        %v1515 = vpack.c.b16 %v1514, %v1513
        %v1516 = vrot.slane %v1515, 6
        %1517 = vrot.lane.b32.xlu0 %v1516, 17
        %v1518 = vpop.permute.xlu0 %1517
        %v1519 = vrot.slane %v1518, 4
        %v1520 = vsel %vm574, %v1519, %v1518
        %vm1523 = vcmask 1043594
        %vm1524 = vcmask 1047558
        %vm1525 = vmor %vm1524, %vm1523
        %1526 = vst.msk [vmem:[#allocation2] sm:$0xcc] %vm1525, %v1520
        %vm1527 = vcmask 134146
        %1528 = vst.msk [vmem:[#allocation2 + $0x8] sm:$0xc] %vm1527, %v1519
        %v1529 = vld [vmem:[#allocation2] sm:$0xff]
        %v1530 = vsel %vm611, %v1529, 0
        %s1531 = scalar_lea.vmem %s3, 72
        %v1532 = vld [vmem:[%s1531] sm:$0xf]
        %v1533 = vld [vmem:[%s1531 + $0x4] sm:$0xf]
        %v1534 = vld [vmem:[#allocation2 + $0x8] sm:$0xf]
        %s1535 = scalar_lea.vmem %s3, 80
        %v1536 = vld [vmem:[%s1535] sm:$0xf]
        %v1537 = vld [vmem:[%s1535 + $0x4] sm:$0xf]
        %v1540 = vunpack.c.l.b16 %v1536
        %v1541 = vunpack.c.l.b16 %v1537
        %v1542 = vpack.c.b16 %v1541, %v1540
        %v1545 = vunpack.c.l.b16 %v1529
        %v1546 = vunpack.c.h.b16 %v1529
        %v1547 = vunpack.c.l.b16 %v1534
        %v1548 = vpack.c.b16 %v1545, %v1545
        %v1549 = vpack.c.b16 %v1546, %v1546
        %v1550 = vpack.c.b16 %v1547, %v1547
        %1551 = vrot.lane.b32.xlu0 %v1548, 127
        %v1552 = vpop.permute.xlu0 %1551
        %1553 = vrot.lane.b32.xlu0 %v1549, 127
        %v1554 = vpop.permute.xlu0 %1553
        %1555 = vrot.lane.b32.xlu0 %v1550, 127
        %v1556 = vpop.permute.xlu0 %1555
        %v1557 = vsel %vm645, %v1552, %v1554
        %v1558 = vsel %vm645, %v1554, %v1556
        %vm1559 = vcmask 64512
        %v1561 = vsel %vm1559, %v1542, 0
        %vm1563 = vcmask 1043456
        %v1565 = vsel %vm1563, %v1557, 0
        %v1568 = vsel %vm1563, %v1558, 0
        %1570 = vmatprep.subr.bf16.mxu0 0
        %1571 = vmatpush1.bf16.msra.mxu0 0
        %1572 = vmatprep.subr.bf16.mxu0 0
        %1573 = vmatpush1.bf16.msra.mxu0 0
        %1574 = vmatprep.subr.bf16.mxu0 0
        %1575 = vmatpush1.bf16.msra.mxu0 0
        %1576 = vmatprep.subr.bf16.mxu0 0
        %1577 = vmatpush1.bf16.msra.mxu0 0
        %1578 = vmatprep.subr.bf16.mxu0 0
        %1579 = vmatpush1.bf16.msra.mxu0 0
        %1580 = vmatprep.subr.bf16.mxu0 0
        %1581 = vmatpush1.bf16.msra.mxu0 0
        %1582 = vmatprep.subr.bf16.mxu0 0
        %1583 = vmatpush1.bf16.msra.mxu0 0
        %1584 = vmatprep.subr.bf16.mxu0 %v1568
        %1585 = vmatpush1.bf16.msra.mxu0 %v1565
        %1586 = vmatprep.subr.bf16.mxu0 0
        %1587 = vmatpush2.bf16.msra.mxu0 0
        %1588 = vmatprep.subr.bf16.mxu0 0
        %1589 = vmatpush2.bf16.msra.mxu0 0
        %1590 = vmatprep.subr.bf16.mxu0 0
        %1591 = vmatpush2.bf16.msra.mxu0 0
        %1592 = vmatprep.subr.bf16.mxu0 0
        %1593 = vmatpush2.bf16.msra.mxu0 0
        %1594 = vmatprep.subr.bf16.mxu0 0
        %1595 = vmatpush2.bf16.msra.mxu0 0
        %1596 = vmatprep.subr.bf16.mxu0 0
        %1597 = vmatpush2.bf16.msra.mxu0 0
        %1598 = vmatprep.subr.bf16.mxu0 0
        %1599 = vmatpush2.bf16.msra.mxu0 0
        %1600 = vmatprep.subr.bf16.mxu0 0
        %1601 = vmatpush2.bf16.msra.mxu0 0
        %1602 = vmatprep.mubr.bf16.mxu0 0
        %1603 = vmatmul.mubr.bf16.gmra.mxu0 %v1561
        %v1604 = vpop.f32.mrf.mxu0
        %v1605 = vadd.f32 0.0, %v1604
        %v1606 = vpop.f32.mrf.mxu0
        %v1607 = vadd.f32 0.0, %v1606
        %v1608 = vpop.f32.mrf.mxu0
        %v1609 = vadd.f32 0.0, %v1608
        %v1610 = vpop.f32.mrf.mxu0
        %v1611 = vadd.f32 0.0, %v1610
        %1612 = vdwg.mxu0
        %v1615 = vunpack.c.l.b16 %v1532
        %v1616 = vunpack.c.l.b16 %v1533
        %v1617 = vpack.c.b16 %v1616, %v1615
        %v1619 = vunpack.c.l.b16 %v1530
        %v1620 = vunpack.c.h.b16 %v1530
        %v1621 = vpack.c.b16 %v1619, %v1619
        %v1622 = vpack.c.b16 %v1620, %v1620
        %v1624 = vsel %vm1559, %v1617, 0
        %v1627 = vsel %vm1563, %v1621, 0
        %v1630 = vsel %vm1563, %v1622, 0
        %1632 = vmatprep.subr.bf16.mxu0 0
        %1633 = vmatpush1.bf16.msra.mxu0 0
        %1634 = vmatprep.subr.bf16.mxu0 0
        %1635 = vmatpush1.bf16.msra.mxu0 0
        %1636 = vmatprep.subr.bf16.mxu0 0
        %1637 = vmatpush1.bf16.msra.mxu0 0
        %1638 = vmatprep.subr.bf16.mxu0 0
        %1639 = vmatpush1.bf16.msra.mxu0 0
        %1640 = vmatprep.subr.bf16.mxu0 0
        %1641 = vmatpush1.bf16.msra.mxu0 0
        %1642 = vmatprep.subr.bf16.mxu0 0
        %1643 = vmatpush1.bf16.msra.mxu0 0
        %1644 = vmatprep.subr.bf16.mxu0 0
        %1645 = vmatpush1.bf16.msra.mxu0 0
        %1646 = vmatprep.subr.bf16.mxu0 %v1630
        %1647 = vmatpush1.bf16.msra.mxu0 %v1627
        %1648 = vmatprep.subr.bf16.mxu0 0
        %1649 = vmatpush2.bf16.msra.mxu0 0
        %1650 = vmatprep.subr.bf16.mxu0 0
        %1651 = vmatpush2.bf16.msra.mxu0 0
        %1652 = vmatprep.subr.bf16.mxu0 0
        %1653 = vmatpush2.bf16.msra.mxu0 0
        %1654 = vmatprep.subr.bf16.mxu0 0
        %1655 = vmatpush2.bf16.msra.mxu0 0
        %1656 = vmatprep.subr.bf16.mxu0 0
        %1657 = vmatpush2.bf16.msra.mxu0 0
        %1658 = vmatprep.subr.bf16.mxu0 0
        %1659 = vmatpush2.bf16.msra.mxu0 0
        %1660 = vmatprep.subr.bf16.mxu0 0
        %1661 = vmatpush2.bf16.msra.mxu0 0
        %1662 = vmatprep.subr.bf16.mxu0 0
        %1663 = vmatpush2.bf16.msra.mxu0 0
        %1664 = vmatprep.mubr.bf16.mxu0 0
        %1665 = vmatmul.mubr.bf16.gmra.mxu0 %v1624
        %v1666 = vpop.f32.mrf.mxu0
        %v1667 = vadd.f32 %v1605, %v1666
        %v1668 = vpop.f32.mrf.mxu0
        %v1669 = vadd.f32 %v1607, %v1668
        %v1670 = vpop.f32.mrf.mxu0
        %v1671 = vadd.f32 %v1609, %v1670
        %v1672 = vpop.f32.mrf.mxu0
        %v1673 = vadd.f32 %v1611, %v1672
        %1674 = vdwg.mxu0
        %v1675 = vsel %vm778, %v1529, 0
        %v1676 = vsel %vm779, %v1534, 0
        %s1677 = scalar_lea.vmem %s3, 88
        %v1678 = vld [vmem:[%s1677] sm:$0xf]
        %v1679 = vld [vmem:[%s1677 + $0x4] sm:$0xf]
        %v1682 = vunpack.c.l.b16 %v1678
        %v1683 = vunpack.c.l.b16 %v1679
        %v1684 = vpack.c.b16 %v1683, %v1682
        %v1687 = vunpack.c.l.b16 %v1675
        %v1688 = vunpack.c.h.b16 %v1675
        %v1689 = vunpack.c.l.b16 %v1676
        %v1690 = vpack.c.b16 %v1687, %v1687
        %v1691 = vpack.c.b16 %v1688, %v1688
        %v1692 = vpack.c.b16 %v1689, %v1689
        %1693 = vrot.lane.b32.xlu0 %v1690, 126
        %v1694 = vpop.permute.xlu0 %1693
        %1695 = vrot.lane.b32.xlu0 %v1691, 126
        %v1696 = vpop.permute.xlu0 %1695
        %1697 = vrot.lane.b32.xlu0 %v1692, 126
        %v1698 = vpop.permute.xlu0 %1697
        %v1699 = vsel %vm811, %v1694, %v1696
        %v1700 = vsel %vm811, %v1696, %v1698
        %v1702 = vsel %vm1559, %v1684, 0
        %v1705 = vsel %vm1563, %v1699, 0
        %v1708 = vsel %vm1563, %v1700, 0
        %1710 = vmatprep.subr.bf16.mxu0 0
        %1711 = vmatpush1.bf16.msra.mxu0 0
        %1712 = vmatprep.subr.bf16.mxu0 0
        %1713 = vmatpush1.bf16.msra.mxu0 0
        %1714 = vmatprep.subr.bf16.mxu0 0
        %1715 = vmatpush1.bf16.msra.mxu0 0
        %1716 = vmatprep.subr.bf16.mxu0 0
        %1717 = vmatpush1.bf16.msra.mxu0 0
        %1718 = vmatprep.subr.bf16.mxu0 0
        %1719 = vmatpush1.bf16.msra.mxu0 0
        %1720 = vmatprep.subr.bf16.mxu0 0
        %1721 = vmatpush1.bf16.msra.mxu0 0
        %1722 = vmatprep.subr.bf16.mxu0 0
        %1723 = vmatpush1.bf16.msra.mxu0 0
        %1724 = vmatprep.subr.bf16.mxu0 %v1708
        %1725 = vmatpush1.bf16.msra.mxu0 %v1705
        %1726 = vmatprep.subr.bf16.mxu0 0
        %1727 = vmatpush2.bf16.msra.mxu0 0
        %1728 = vmatprep.subr.bf16.mxu0 0
        %1729 = vmatpush2.bf16.msra.mxu0 0
        %1730 = vmatprep.subr.bf16.mxu0 0
        %1731 = vmatpush2.bf16.msra.mxu0 0
        %1732 = vmatprep.subr.bf16.mxu0 0
        %1733 = vmatpush2.bf16.msra.mxu0 0
        %1734 = vmatprep.subr.bf16.mxu0 0
        %1735 = vmatpush2.bf16.msra.mxu0 0
        %1736 = vmatprep.subr.bf16.mxu0 0
        %1737 = vmatpush2.bf16.msra.mxu0 0
        %1738 = vmatprep.subr.bf16.mxu0 0
        %1739 = vmatpush2.bf16.msra.mxu0 0
        %1740 = vmatprep.subr.bf16.mxu0 0
        %1741 = vmatpush2.bf16.msra.mxu0 0
        %1742 = vmatprep.mubr.bf16.mxu0 0
        %1743 = vmatmul.mubr.bf16.gmra.mxu0 %v1702
        %v1744 = vpop.f32.mrf.mxu0
        %v1745 = vadd.f32 0.0, %v1744
        %v1746 = vpop.f32.mrf.mxu0
        %v1747 = vadd.f32 0.0, %v1746
        %v1748 = vpop.f32.mrf.mxu0
        %v1749 = vadd.f32 0.0, %v1748
        %v1750 = vpop.f32.mrf.mxu0
        %v1751 = vadd.f32 0.0, %v1750
        %1752 = vdwg.mxu0
        %v1753 = vadd.f32 %v1667, %v1745
        %v1754 = vadd.f32 %v1669, %v1747
        %v1755 = vadd.f32 %v1671, %v1749
        %v1756 = vadd.f32 %v1673, %v1751
        %v1757 = vsel %vm876, %v1529, 0
        %v1758 = vsel %vm877, %v1534, 0
        %s1759 = scalar_lea.vmem %s3, 96
        %v1760 = vld [vmem:[%s1759] sm:$0xf]
        %v1761 = vld [vmem:[%s1759 + $0x4] sm:$0xf]
        %v1764 = vunpack.c.l.b16 %v1760
        %v1765 = vunpack.c.l.b16 %v1761
        %v1766 = vpack.c.b16 %v1765, %v1764
        %v1769 = vunpack.c.l.b16 %v1757
        %v1770 = vunpack.c.h.b16 %v1757
        %v1771 = vunpack.c.l.b16 %v1758
        %v1772 = vpack.c.b16 %v1769, %v1769
        %v1773 = vpack.c.b16 %v1770, %v1770
        %v1774 = vpack.c.b16 %v1771, %v1771
        %1775 = vrot.lane.b32.xlu0 %v1772, 112
        %v1776 = vpop.permute.xlu0 %1775
        %1777 = vrot.lane.b32.xlu0 %v1773, 112
        %v1778 = vpop.permute.xlu0 %1777
        %1779 = vrot.lane.b32.xlu0 %v1774, 112
        %v1780 = vpop.permute.xlu0 %1779
        %v1781 = vsel %vm909, %v1776, %v1778
        %v1782 = vsel %vm909, %v1778, %v1780
        %v1784 = vsel %vm1559, %v1766, 0
        %v1787 = vsel %vm1563, %v1781, 0
        %v1790 = vsel %vm1563, %v1782, 0
        %1792 = vmatprep.subr.bf16.mxu0 0
        %1793 = vmatpush1.bf16.msra.mxu0 0
        %1794 = vmatprep.subr.bf16.mxu0 0
        %1795 = vmatpush1.bf16.msra.mxu0 0
        %1796 = vmatprep.subr.bf16.mxu0 0
        %1797 = vmatpush1.bf16.msra.mxu0 0
        %1798 = vmatprep.subr.bf16.mxu0 0
        %1799 = vmatpush1.bf16.msra.mxu0 0
        %1800 = vmatprep.subr.bf16.mxu0 0
        %1801 = vmatpush1.bf16.msra.mxu0 0
        %1802 = vmatprep.subr.bf16.mxu0 0
        %1803 = vmatpush1.bf16.msra.mxu0 0
        %1804 = vmatprep.subr.bf16.mxu0 0
        %1805 = vmatpush1.bf16.msra.mxu0 0
        %1806 = vmatprep.subr.bf16.mxu0 %v1790
        %1807 = vmatpush1.bf16.msra.mxu0 %v1787
        %1808 = vmatprep.subr.bf16.mxu0 0
        %1809 = vmatpush2.bf16.msra.mxu0 0
        %1810 = vmatprep.subr.bf16.mxu0 0
        %1811 = vmatpush2.bf16.msra.mxu0 0
        %1812 = vmatprep.subr.bf16.mxu0 0
        %1813 = vmatpush2.bf16.msra.mxu0 0
        %1814 = vmatprep.subr.bf16.mxu0 0
        %1815 = vmatpush2.bf16.msra.mxu0 0
        %1816 = vmatprep.subr.bf16.mxu0 0
        %1817 = vmatpush2.bf16.msra.mxu0 0
        %1818 = vmatprep.subr.bf16.mxu0 0
        %1819 = vmatpush2.bf16.msra.mxu0 0
        %1820 = vmatprep.subr.bf16.mxu0 0
        %1821 = vmatpush2.bf16.msra.mxu0 0
        %1822 = vmatprep.subr.bf16.mxu0 0
        %1823 = vmatpush2.bf16.msra.mxu0 0
        %1824 = vmatprep.mubr.bf16.mxu0 0
        %1825 = vmatmul.mubr.bf16.gmra.mxu0 %v1784
        %v1826 = vpop.f32.mrf.mxu0
        %v1827 = vadd.f32 0.0, %v1826
        %v1828 = vpop.f32.mrf.mxu0
        %v1829 = vadd.f32 0.0, %v1828
        %v1830 = vpop.f32.mrf.mxu0
        %v1831 = vadd.f32 0.0, %v1830
        %v1832 = vpop.f32.mrf.mxu0
        %v1833 = vadd.f32 0.0, %v1832
        %1834 = vdwg.mxu0
        %v1835 = vadd.f32 %v1753, %v1827
        %v1836 = vadd.f32 %v1754, %v1829
        %v1837 = vadd.f32 %v1755, %v1831
        %v1838 = vadd.f32 %v1756, %v1833
        %s1839 = scalar_lea.vmem %s3, 104
        %v1840 = vld [vmem:[%s1839] sm:$0xf]
        %v1841 = vld [vmem:[%s1839 + $0x4] sm:$0xf]
        %v1844 = vunpack.c.l.b16 %v1840
        %v1845 = vunpack.c.l.b16 %v1841
        %v1846 = vpack.c.b16 %v1845, %v1844
        %1847 = vrot.lane.b32.xlu0 %v1548, 111
        %v1848 = vpop.permute.xlu0 %1847
        %1849 = vrot.lane.b32.xlu0 %v1549, 111
        %v1850 = vpop.permute.xlu0 %1849
        %1851 = vrot.lane.b32.xlu0 %v1550, 111
        %v1852 = vpop.permute.xlu0 %1851
        %v1853 = vsel %vm982, %v1848, %v1850
        %v1854 = vsel %vm982, %v1850, %v1852
        %v1856 = vsel %vm1559, %v1846, 0
        %v1859 = vsel %vm1563, %v1853, 0
        %v1862 = vsel %vm1563, %v1854, 0
        %1864 = vmatprep.subr.bf16.mxu0 0
        %1865 = vmatpush1.bf16.msra.mxu0 0
        %1866 = vmatprep.subr.bf16.mxu0 0
        %1867 = vmatpush1.bf16.msra.mxu0 0
        %1868 = vmatprep.subr.bf16.mxu0 0
        %1869 = vmatpush1.bf16.msra.mxu0 0
        %1870 = vmatprep.subr.bf16.mxu0 0
        %1871 = vmatpush1.bf16.msra.mxu0 0
        %1872 = vmatprep.subr.bf16.mxu0 0
        %1873 = vmatpush1.bf16.msra.mxu0 0
        %1874 = vmatprep.subr.bf16.mxu0 0
        %1875 = vmatpush1.bf16.msra.mxu0 0
        %1876 = vmatprep.subr.bf16.mxu0 0
        %1877 = vmatpush1.bf16.msra.mxu0 0
        %1878 = vmatprep.subr.bf16.mxu0 %v1862
        %1879 = vmatpush1.bf16.msra.mxu0 %v1859
        %1880 = vmatprep.subr.bf16.mxu0 0
        %1881 = vmatpush2.bf16.msra.mxu0 0
        %1882 = vmatprep.subr.bf16.mxu0 0
        %1883 = vmatpush2.bf16.msra.mxu0 0
        %1884 = vmatprep.subr.bf16.mxu0 0
        %1885 = vmatpush2.bf16.msra.mxu0 0
        %1886 = vmatprep.subr.bf16.mxu0 0
        %1887 = vmatpush2.bf16.msra.mxu0 0
        %1888 = vmatprep.subr.bf16.mxu0 0
        %1889 = vmatpush2.bf16.msra.mxu0 0
        %1890 = vmatprep.subr.bf16.mxu0 0
        %1891 = vmatpush2.bf16.msra.mxu0 0
        %1892 = vmatprep.subr.bf16.mxu0 0
        %1893 = vmatpush2.bf16.msra.mxu0 0
        %1894 = vmatprep.subr.bf16.mxu0 0
        %1895 = vmatpush2.bf16.msra.mxu0 0
        %1896 = vmatprep.mubr.bf16.mxu0 0
        %1897 = vmatmul.mubr.bf16.gmra.mxu0 %v1856
        %v1898 = vpop.f32.mrf.mxu0
        %v1899 = vadd.f32 0.0, %v1898
        %v1900 = vpop.f32.mrf.mxu0
        %v1901 = vadd.f32 0.0, %v1900
        %v1902 = vpop.f32.mrf.mxu0
        %v1903 = vadd.f32 0.0, %v1902
        %v1904 = vpop.f32.mrf.mxu0
        %v1905 = vadd.f32 0.0, %v1904
        %1906 = vdwg.mxu0
        %v1907 = vadd.f32 %v1835, %v1899
        %v1908 = vadd.f32 %v1836, %v1901
        %v1909 = vadd.f32 %v1837, %v1903
        %v1910 = vadd.f32 %v1838, %v1905
        %v1911 = vsel %vm1046, %v1529, 0
        %v1912 = vsel %vm1047, %v1534, 0
        %s1913 = scalar_lea.vmem %s3, 112
        %v1914 = vld [vmem:[%s1913] sm:$0xf]
        %v1915 = vld [vmem:[%s1913 + $0x4] sm:$0xf]
        %v1918 = vunpack.c.l.b16 %v1914
        %v1919 = vunpack.c.l.b16 %v1915
        %v1920 = vpack.c.b16 %v1919, %v1918
        %v1923 = vunpack.c.l.b16 %v1911
        %v1924 = vunpack.c.h.b16 %v1911
        %v1925 = vunpack.c.l.b16 %v1912
        %v1926 = vpack.c.b16 %v1923, %v1923
        %v1927 = vpack.c.b16 %v1924, %v1924
        %v1928 = vpack.c.b16 %v1925, %v1925
        %1929 = vrot.lane.b32.xlu0 %v1926, 110
        %v1930 = vpop.permute.xlu0 %1929
        %1931 = vrot.lane.b32.xlu0 %v1927, 110
        %v1932 = vpop.permute.xlu0 %1931
        %1933 = vrot.lane.b32.xlu0 %v1928, 110
        %v1934 = vpop.permute.xlu0 %1933
        %v1935 = vsel %vm1079, %v1930, %v1932
        %v1936 = vsel %vm1079, %v1932, %v1934
        %v1938 = vsel %vm1559, %v1920, 0
        %v1941 = vsel %vm1563, %v1935, 0
        %v1944 = vsel %vm1563, %v1936, 0
        %1946 = vmatprep.subr.bf16.mxu0 0
        %1947 = vmatpush1.bf16.msra.mxu0 0
        %1948 = vmatprep.subr.bf16.mxu0 0
        %1949 = vmatpush1.bf16.msra.mxu0 0
        %1950 = vmatprep.subr.bf16.mxu0 0
        %1951 = vmatpush1.bf16.msra.mxu0 0
        %1952 = vmatprep.subr.bf16.mxu0 0
        %1953 = vmatpush1.bf16.msra.mxu0 0
        %1954 = vmatprep.subr.bf16.mxu0 0
        %1955 = vmatpush1.bf16.msra.mxu0 0
        %1956 = vmatprep.subr.bf16.mxu0 0
        %1957 = vmatpush1.bf16.msra.mxu0 0
        %1958 = vmatprep.subr.bf16.mxu0 0
        %1959 = vmatpush1.bf16.msra.mxu0 0
        %1960 = vmatprep.subr.bf16.mxu0 %v1944
        %1961 = vmatpush1.bf16.msra.mxu0 %v1941
        %1962 = vmatprep.subr.bf16.mxu0 0
        %1963 = vmatpush2.bf16.msra.mxu0 0
        %1964 = vmatprep.subr.bf16.mxu0 0
        %1965 = vmatpush2.bf16.msra.mxu0 0
        %1966 = vmatprep.subr.bf16.mxu0 0
        %1967 = vmatpush2.bf16.msra.mxu0 0
        %1968 = vmatprep.subr.bf16.mxu0 0
        %1969 = vmatpush2.bf16.msra.mxu0 0
        %1970 = vmatprep.subr.bf16.mxu0 0
        %1971 = vmatpush2.bf16.msra.mxu0 0
        %1972 = vmatprep.subr.bf16.mxu0 0
        %1973 = vmatpush2.bf16.msra.mxu0 0
        %1974 = vmatprep.subr.bf16.mxu0 0
        %1975 = vmatpush2.bf16.msra.mxu0 0
        %1976 = vmatprep.subr.bf16.mxu0 0
        %1977 = vmatpush2.bf16.msra.mxu0 0
        %1978 = vmatprep.mubr.bf16.mxu0 0
        %1979 = vmatmul.mubr.bf16.gmra.mxu0 %v1938
        %v1980 = vpop.f32.mrf.mxu0
        %v1981 = vadd.f32 0.0, %v1980
        %v1982 = vpop.f32.mrf.mxu0
        %v1983 = vadd.f32 0.0, %v1982
        %v1984 = vpop.f32.mrf.mxu0
        %v1985 = vadd.f32 0.0, %v1984
        %v1986 = vpop.f32.mrf.mxu0
        %v1987 = vadd.f32 0.0, %v1986
        %1988 = vdwg.mxu0
        %v1989 = vadd.f32 %v1907, %v1981
        %v1990 = vadd.f32 %v1908, %v1983
        %v1991 = vadd.f32 %v1909, %v1985
        %v1992 = vadd.f32 %v1910, %v1987
        %v1993 = vsel %vm1143, %v1529, 0
        %v1994 = vsel %vm1144, %v1534, 0
        %s1995 = scalar_lea.vmem %s3, 120
        %v1996 = vld [vmem:[%s1995] sm:$0xf]
        %v1997 = vld [vmem:[%s1995 + $0x4] sm:$0xf]
        %v2000 = vunpack.c.l.b16 %v1996
        %v2001 = vunpack.c.l.b16 %v1997
        %v2002 = vpack.c.b16 %v2001, %v2000
        %v2005 = vunpack.c.l.b16 %v1993
        %v2006 = vunpack.c.h.b16 %v1993
        %v2007 = vunpack.c.l.b16 %v1994
        %v2008 = vpack.c.b16 %v2005, %v2005
        %v2009 = vpack.c.b16 %v2006, %v2006
        %v2010 = vpack.c.b16 %v2007, %v2007
        %2011 = vrot.lane.b32.xlu0 %v2008, 96
        %v2012 = vpop.permute.xlu0 %2011
        %2013 = vrot.lane.b32.xlu0 %v2009, 96
        %v2014 = vpop.permute.xlu0 %2013
        %2015 = vrot.lane.b32.xlu0 %v2010, 96
        %v2016 = vpop.permute.xlu0 %2015
        %v2017 = vsel %vm1176, %v2012, %v2014
        %v2018 = vsel %vm1176, %v2014, %v2016
        %v2020 = vsel %vm1559, %v2002, 0
        %v2023 = vsel %vm1563, %v2017, 0
        %v2026 = vsel %vm1563, %v2018, 0
        %2028 = vmatprep.subr.bf16.mxu0 0
        %2029 = vmatpush1.bf16.msra.mxu0 0
        %2030 = vmatprep.subr.bf16.mxu0 0
        %2031 = vmatpush1.bf16.msra.mxu0 0
        %2032 = vmatprep.subr.bf16.mxu0 0
        %2033 = vmatpush1.bf16.msra.mxu0 0
        %2034 = vmatprep.subr.bf16.mxu0 0
        %2035 = vmatpush1.bf16.msra.mxu0 0
        %2036 = vmatprep.subr.bf16.mxu0 0
        %2037 = vmatpush1.bf16.msra.mxu0 0
        %2038 = vmatprep.subr.bf16.mxu0 0
        %2039 = vmatpush1.bf16.msra.mxu0 0
        %2040 = vmatprep.subr.bf16.mxu0 0
        %2041 = vmatpush1.bf16.msra.mxu0 0
        %2042 = vmatprep.subr.bf16.mxu0 %v2026
        %2043 = vmatpush1.bf16.msra.mxu0 %v2023
        %2044 = vmatprep.subr.bf16.mxu0 0
        %2045 = vmatpush2.bf16.msra.mxu0 0
        %2046 = vmatprep.subr.bf16.mxu0 0
        %2047 = vmatpush2.bf16.msra.mxu0 0
        %2048 = vmatprep.subr.bf16.mxu0 0
        %2049 = vmatpush2.bf16.msra.mxu0 0
        %2050 = vmatprep.subr.bf16.mxu0 0
        %2051 = vmatpush2.bf16.msra.mxu0 0
        %2052 = vmatprep.subr.bf16.mxu0 0
        %2053 = vmatpush2.bf16.msra.mxu0 0
        %2054 = vmatprep.subr.bf16.mxu0 0
        %2055 = vmatpush2.bf16.msra.mxu0 0
        %2056 = vmatprep.subr.bf16.mxu0 0
        %2057 = vmatpush2.bf16.msra.mxu0 0
        %2058 = vmatprep.subr.bf16.mxu0 0
        %2059 = vmatpush2.bf16.msra.mxu0 0
        %2060 = vmatprep.mubr.bf16.mxu0 0
        %2061 = vmatmul.mubr.bf16.gmra.mxu0 %v2020
        %v2062 = vpop.f32.mrf.mxu0
        %v2063 = vadd.f32 0.0, %v2062
        %v2064 = vpop.f32.mrf.mxu0
        %v2065 = vadd.f32 0.0, %v2064
        %v2066 = vpop.f32.mrf.mxu0
        %v2067 = vadd.f32 0.0, %v2066
        %v2068 = vpop.f32.mrf.mxu0
        %v2069 = vadd.f32 0.0, %v2068
        %2070 = vdwg.mxu0
        %v2071 = vadd.f32 %v1989, %v2063
        %v2072 = vadd.f32 %v1990, %v2065
        %v2073 = vadd.f32 %v1991, %v2067
        %v2074 = vadd.f32 %v1992, %v2069
        %s2075 = scalar_lea.vmem %s3, 128
        %v2076 = vld [vmem:[%s2075] sm:$0xf]
        %v2077 = vld [vmem:[%s2075 + $0x4] sm:$0xf]
        %v2080 = vunpack.c.l.b16 %v2076
        %v2081 = vunpack.c.l.b16 %v2077
        %v2082 = vpack.c.b16 %v2081, %v2080
        %2083 = vrot.lane.b32.xlu0 %v1548, 95
        %v2084 = vpop.permute.xlu0 %2083
        %2085 = vrot.lane.b32.xlu0 %v1549, 95
        %v2086 = vpop.permute.xlu0 %2085
        %2087 = vrot.lane.b32.xlu0 %v1550, 95
        %v2088 = vpop.permute.xlu0 %2087
        %v2089 = vsel %vm1249, %v2084, %v2086
        %v2090 = vsel %vm1249, %v2086, %v2088
        %v2092 = vsel %vm1559, %v2082, 0
        %v2095 = vsel %vm1563, %v2089, 0
        %v2098 = vsel %vm1563, %v2090, 0
        %2100 = vmatprep.subr.bf16.mxu0 0
        %2101 = vmatpush1.bf16.msra.mxu0 0
        %2102 = vmatprep.subr.bf16.mxu0 0
        %2103 = vmatpush1.bf16.msra.mxu0 0
        %2104 = vmatprep.subr.bf16.mxu0 0
        %2105 = vmatpush1.bf16.msra.mxu0 0
        %2106 = vmatprep.subr.bf16.mxu0 0
        %2107 = vmatpush1.bf16.msra.mxu0 0
        %2108 = vmatprep.subr.bf16.mxu0 0
        %2109 = vmatpush1.bf16.msra.mxu0 0
        %2110 = vmatprep.subr.bf16.mxu0 0
        %2111 = vmatpush1.bf16.msra.mxu0 0
        %2112 = vmatprep.subr.bf16.mxu0 0
        %2113 = vmatpush1.bf16.msra.mxu0 0
        %2114 = vmatprep.subr.bf16.mxu0 %v2098
        %2115 = vmatpush1.bf16.msra.mxu0 %v2095
        %2116 = vmatprep.subr.bf16.mxu0 0
        %2117 = vmatpush2.bf16.msra.mxu0 0
        %2118 = vmatprep.subr.bf16.mxu0 0
        %2119 = vmatpush2.bf16.msra.mxu0 0
        %2120 = vmatprep.subr.bf16.mxu0 0
        %2121 = vmatpush2.bf16.msra.mxu0 0
        %2122 = vmatprep.subr.bf16.mxu0 0
        %2123 = vmatpush2.bf16.msra.mxu0 0
        %2124 = vmatprep.subr.bf16.mxu0 0
        %2125 = vmatpush2.bf16.msra.mxu0 0
        %2126 = vmatprep.subr.bf16.mxu0 0
        %2127 = vmatpush2.bf16.msra.mxu0 0
        %2128 = vmatprep.subr.bf16.mxu0 0
        %2129 = vmatpush2.bf16.msra.mxu0 0
        %2130 = vmatprep.subr.bf16.mxu0 0
        %2131 = vmatpush2.bf16.msra.mxu0 0
        %2132 = vmatprep.mubr.bf16.mxu0 0
        %2133 = vmatmul.mubr.bf16.gmra.mxu0 %v2092
        %v2134 = vpop.f32.mrf.mxu0
        %v2135 = vadd.f32 0.0, %v2134
        %v2136 = vpop.f32.mrf.mxu0
        %v2137 = vadd.f32 0.0, %v2136
        %v2138 = vpop.f32.mrf.mxu0
        %v2139 = vadd.f32 0.0, %v2138
        %v2140 = vpop.f32.mrf.mxu0
        %v2141 = vadd.f32 0.0, %v2140
        %2142 = vdwg.mxu0
        %v2143 = vadd.f32 %v2071, %v2135
        %v2144 = vadd.f32 %v2072, %v2137
        %v2145 = vadd.f32 %v2073, %v2139
        %v2146 = vadd.f32 %v2074, %v2141
        %v2147 = vsel %vm1313, %v1529, 0
        %v2148 = vsel %vm1314, %v1534, 0
        %s2149 = scalar_lea.vmem %s3, 136
        %v2150 = vld [vmem:[%s2149] sm:$0xf]
        %v2151 = vld [vmem:[%s2149 + $0x4] sm:$0xf]
        %v2154 = vunpack.c.l.b16 %v2150
        %v2155 = vunpack.c.l.b16 %v2151
        %v2156 = vpack.c.b16 %v2155, %v2154
        %v2159 = vunpack.c.l.b16 %v2147
        %v2160 = vunpack.c.h.b16 %v2147
        %v2161 = vunpack.c.l.b16 %v2148
        %v2162 = vpack.c.b16 %v2159, %v2159
        %v2163 = vpack.c.b16 %v2160, %v2160
        %v2164 = vpack.c.b16 %v2161, %v2161
        %2165 = vrot.lane.b32.xlu0 %v2162, 94
        %v2166 = vpop.permute.xlu0 %2165
        %2167 = vrot.lane.b32.xlu0 %v2163, 94
        %v2168 = vpop.permute.xlu0 %2167
        %2169 = vrot.lane.b32.xlu0 %v2164, 94
        %v2170 = vpop.permute.xlu0 %2169
        %v2171 = vsel %vm1346, %v2166, %v2168
        %v2172 = vsel %vm1346, %v2168, %v2170
        %v2174 = vsel %vm1559, %v2156, 0
        %v2177 = vsel %vm1563, %v2171, 0
        %v2180 = vsel %vm1563, %v2172, 0
        %2182 = vmatprep.subr.bf16.mxu0 0
        %2183 = vmatpush1.bf16.msra.mxu0 0
        %2184 = vmatprep.subr.bf16.mxu0 0
        %2185 = vmatpush1.bf16.msra.mxu0 0
        %2186 = vmatprep.subr.bf16.mxu0 0
        %2187 = vmatpush1.bf16.msra.mxu0 0
        %2188 = vmatprep.subr.bf16.mxu0 0
        %2189 = vmatpush1.bf16.msra.mxu0 0
        %2190 = vmatprep.subr.bf16.mxu0 0
        %2191 = vmatpush1.bf16.msra.mxu0 0
        %2192 = vmatprep.subr.bf16.mxu0 0
        %2193 = vmatpush1.bf16.msra.mxu0 0
        %2194 = vmatprep.subr.bf16.mxu0 0
        %2195 = vmatpush1.bf16.msra.mxu0 0
        %2196 = vmatprep.subr.bf16.mxu0 %v2180
        %2197 = vmatpush1.bf16.msra.mxu0 %v2177
        %2198 = vmatprep.subr.bf16.mxu0 0
        %2199 = vmatpush2.bf16.msra.mxu0 0
        %2200 = vmatprep.subr.bf16.mxu0 0
        %2201 = vmatpush2.bf16.msra.mxu0 0
        %2202 = vmatprep.subr.bf16.mxu0 0
        %2203 = vmatpush2.bf16.msra.mxu0 0
        %2204 = vmatprep.subr.bf16.mxu0 0
        %2205 = vmatpush2.bf16.msra.mxu0 0
        %2206 = vmatprep.subr.bf16.mxu0 0
        %2207 = vmatpush2.bf16.msra.mxu0 0
        %2208 = vmatprep.subr.bf16.mxu0 0
        %2209 = vmatpush2.bf16.msra.mxu0 0
        %2210 = vmatprep.subr.bf16.mxu0 0
        %2211 = vmatpush2.bf16.msra.mxu0 0
        %2212 = vmatprep.subr.bf16.mxu0 0
        %2213 = vmatpush2.bf16.msra.mxu0 0
        %2214 = vmatprep.mubr.bf16.mxu0 0
        %2215 = vmatmul.mubr.bf16.gmra.mxu0 %v2174
        %v2216 = vpop.f32.mrf.mxu0
        %v2217 = vadd.f32 0.0, %v2216
        %v2218 = vpop.f32.mrf.mxu0
        %v2219 = vadd.f32 0.0, %v2218
        %v2220 = vpop.f32.mrf.mxu0
        %v2221 = vadd.f32 0.0, %v2220
        %v2222 = vpop.f32.mrf.mxu0
        %v2223 = vadd.f32 0.0, %v2222
        %2224 = vdwg.mxu0
        %v2225 = vadd.f32 %v2143, %v2217
        %v2226 = vadd.f32 %v2144, %v2219
        %v2227 = vadd.f32 %v2145, %v2221
        %v2228 = vadd.f32 %v2146, %v2223
        %s2229 = scalar_lea.vmem %s4, 16
        %v2230 = vld [vmem:[%s2229] sm:$0xff]
        %v2231 = vld [vmem:[%s2229 + $0x8] sm:$0xff]
        %2233 = vset.pattern.permute.xlu0 0
        %2234 = vperm.xlu0 %2233, %v2230
        %v2235 = vpop.permute.xlu0 %2234
        %2238 = vset.pattern.permute.xlu0 0
        %2239 = vperm.xlu0 %2238, %v2231
        %v2240 = vpop.permute.xlu0 %2239
        %v2242 = vadd.f32 %v2225, %v2235
        %v2243 = vadd.f32 %v2226, %v2235
        %v2244 = vadd.f32 %v2227, %v2240
        %v2245 = vadd.f32 %v2228, %v2240
        %v2246 = vxor.u32 %v2242, 2147483648
        %v2247 = vxor.u32 %v2243, 2147483648
        %v2248 = vxor.u32 %v2244, 2147483648
        %v2249 = vxor.u32 %v2245, 2147483648
        %v2250 = vmul.f32 %v2246, 1.442695
        %v2251 = vpow.pop %v2250
        %v2252 = vmul.f32 %v2247, 1.442695
        %v2253 = vpow.pop %v2252
        %v2254 = vmul.f32 %v2248, 1.442695
        %v2255 = vpow.pop %v2254
        %v2256 = vmul.f32 %v2249, 1.442695
        %v2257 = vpow.pop %v2256
        %v2258 = vadd.f32 %v2251, 1.0
        %v2259 = vadd.f32 %v2253, 1.0
        %v2260 = vadd.f32 %v2255, 1.0
        %v2261 = vadd.f32 %v2257, 1.0
        %v2262 = vrcp.pop %v2258
        %v2263 = vmul.f32 1.0, %v2262
        %v2264 = vrcp.pop %v2259
        %v2265 = vmul.f32 1.0, %v2264
        %v2266 = vrcp.pop %v2260
        %v2267 = vmul.f32 1.0, %v2266
        %v2268 = vrcp.pop %v2261
        %v2269 = vmul.f32 1.0, %v2268
        %v2270 = vtanh.pop %v2244
        %v2271 = vtanh.pop %v2245
        %s2272 = scalar_lea.vmem %s456, 8 [#allocation4]
        %v2273 = vld [vmem:[%s2272] sm:$0xff]
        %v2275 = vcombine.low %v2273, %v2273
        %v2277 = vmul.f32 %v2263, %v2275
        %v2278 = vmul.f32 %v2265, %v2273
        %v2281 = vrot.slane %v2270, 4
        %v2282 = vrot.slane %v2271, 4
        %v2285 = vmul.f32 %v2263, %v2281
        %v2286 = vmul.f32 %v2265, %v2282
        %v2289 = vrot.slane %v2285, 4
        %v2290 = vrot.slane %v2286, 4
        %v2293 = vadd.f32 %v2277, %v2289
        %v2294 = vadd.f32 %v2278, %v2290
        %v2295 = vtanh.pop %v2293
        %v2296 = vtanh.pop %v2294
        %v2299 = vrot.slane %v2295, 4
        %v2300 = vrot.slane %v2296, 4
        %v2303 = vmul.f32 %v2267, %v2299
        %v2304 = vmul.f32 %v2269, %v2300
        %v2307 = vcombine.low %v2303, %v2304
        %s2309 = scalar_lea.vmem %s496, 8 [#allocation5]
        %2310 = vst [vmem:[%s2309] sm:$0xff] %v2307
        %v2313 = vcombine.high %v2293, %v2294
        %s2315 = scalar_lea.vmem %s502, 8 [#allocation6]
        %2316 = vst [vmem:[%s2315] sm:$0xff] %v2313
        %v2317 = vpack.c.bf16 %v2303, %v2303
        %v2318 = vpack.c.bf16 %v2304, %v2304
        %v2319 = vld [vmem:[%s5] sm:$0xf]
        %v2320 = vld [vmem:[%s6] sm:$0xff]
        %2322 = vset.pattern.permute.xlu0 0
        %2323 = vperm.xlu0 %2322, %v2320
        %v2324 = vpop.permute.xlu0 %2323
        %vm2326 = vcmask 31744
        %v2328 = vsel %vm2326, %v2319, 0
        %vm2330 = vcmask 1041408
        %v2332 = vsel %vm2330, %v2317, 0
        %v2335 = vsel %vm2330, %v2318, 0
        %2337 = vmatprep.subr.bf16.mxu0 0
        %2338 = vmatpush1.bf16.msra.mxu0 0
        %2339 = vmatprep.subr.bf16.mxu0 0
        %2340 = vmatpush1.bf16.msra.mxu0 0
        %2341 = vmatprep.subr.bf16.mxu0 0
        %2342 = vmatpush1.bf16.msra.mxu0 0
        %2343 = vmatprep.subr.bf16.mxu0 0
        %2344 = vmatpush1.bf16.msra.mxu0 0
        %2345 = vmatprep.subr.bf16.mxu0 0
        %2346 = vmatpush1.bf16.msra.mxu0 0
        %2347 = vmatprep.subr.bf16.mxu0 0
        %2348 = vmatpush1.bf16.msra.mxu0 0
        %2349 = vmatprep.subr.bf16.mxu0 0
        %2350 = vmatpush1.bf16.msra.mxu0 0
        %2351 = vmatprep.subr.bf16.mxu0 %v2335
        %2352 = vmatpush1.bf16.msra.mxu0 %v2332
        %2353 = vmatprep.subr.bf16.mxu0 0
        %2354 = vmatpush2.bf16.msra.mxu0 0
        %2355 = vmatprep.subr.bf16.mxu0 0
        %2356 = vmatpush2.bf16.msra.mxu0 0
        %2357 = vmatprep.subr.bf16.mxu0 0
        %2358 = vmatpush2.bf16.msra.mxu0 0
        %2359 = vmatprep.subr.bf16.mxu0 0
        %2360 = vmatpush2.bf16.msra.mxu0 0
        %2361 = vmatprep.subr.bf16.mxu0 0
        %2362 = vmatpush2.bf16.msra.mxu0 0
        %2363 = vmatprep.subr.bf16.mxu0 0
        %2364 = vmatpush2.bf16.msra.mxu0 0
        %2365 = vmatprep.subr.bf16.mxu0 0
        %2366 = vmatpush2.bf16.msra.mxu0 0
        %2367 = vmatprep.subr.bf16.mxu0 0
        %2368 = vmatpush2.bf16.msra.mxu0 0
        %2369 = vmatprep.mubr.bf16.mxu0 0
        %2370 = vmatmul.mubr.bf16.gmra.mxu0 %v2328
        %v2371 = vpop.f32.mrf.mxu0
        %v2372 = vadd.f32 %v2324, %v2371
        %v2373 = vpop.f32.mrf.mxu0
        %v2374 = vadd.f32 %v2324, %v2373
        %v2375 = vpop.f32.mrf.mxu0
        %v2376 = vpop.f32.mrf.mxu0
        %2377 = vdwg.mxu0
        %v2378 = vmax.f32 %v2372, 0.0
        %v2379 = vmax.f32 %v2374, 0.0
        %v2380 = vld [vmem:[%s7] sm:$0xf]
        %v2381 = vpack.c.bf16 %v2378, %v2378
        %v2382 = vpack.c.bf16 %v2379, %v2379
        %v2383 = vld [vmem:[%s8] sm:$0xff]
        %2385 = vset.pattern.permute.xlu0 0
        %2386 = vperm.xlu0 %2385, %v2383
        %v2387 = vpop.permute.xlu0 %2386
        %v2390 = vsel %vm1559, %v2380, 0
        %v2393 = vsel %vm1563, %v2381, 0
        %v2396 = vsel %vm1563, %v2382, 0
        %2398 = vmatprep.subr.bf16.mxu0 0
        %2399 = vmatpush1.bf16.msra.mxu0 0
        %2400 = vmatprep.subr.bf16.mxu0 0
        %2401 = vmatpush1.bf16.msra.mxu0 0
        %2402 = vmatprep.subr.bf16.mxu0 0
        %2403 = vmatpush1.bf16.msra.mxu0 0
        %2404 = vmatprep.subr.bf16.mxu0 0
        %2405 = vmatpush1.bf16.msra.mxu0 0
        %2406 = vmatprep.subr.bf16.mxu0 0
        %2407 = vmatpush1.bf16.msra.mxu0 0
        %2408 = vmatprep.subr.bf16.mxu0 0
        %2409 = vmatpush1.bf16.msra.mxu0 0
        %2410 = vmatprep.subr.bf16.mxu0 0
        %2411 = vmatpush1.bf16.msra.mxu0 0
        %2412 = vmatprep.subr.bf16.mxu0 %v2396
        %2413 = vmatpush1.bf16.msra.mxu0 %v2393
        %2414 = vmatprep.subr.bf16.mxu0 0
        %2415 = vmatpush2.bf16.msra.mxu0 0
        %2416 = vmatprep.subr.bf16.mxu0 0
        %2417 = vmatpush2.bf16.msra.mxu0 0
        %2418 = vmatprep.subr.bf16.mxu0 0
        %2419 = vmatpush2.bf16.msra.mxu0 0
        %2420 = vmatprep.subr.bf16.mxu0 0
        %2421 = vmatpush2.bf16.msra.mxu0 0
        %2422 = vmatprep.subr.bf16.mxu0 0
        %2423 = vmatpush2.bf16.msra.mxu0 0
        %2424 = vmatprep.subr.bf16.mxu0 0
        %2425 = vmatpush2.bf16.msra.mxu0 0
        %2426 = vmatprep.subr.bf16.mxu0 0
        %2427 = vmatpush2.bf16.msra.mxu0 0
        %2428 = vmatprep.subr.bf16.mxu0 0
        %2429 = vmatpush2.bf16.msra.mxu0 0
        %2430 = vmatprep.mubr.bf16.mxu0 0
        %2431 = vmatmul.mubr.bf16.gmra.mxu0 %v2390
        %v2432 = vpop.f32.mrf.mxu0
        %v2433 = vadd.f32 %v2387, %v2432
        %v2434 = vpop.f32.mrf.mxu0
        %v2435 = vadd.f32 %v2387, %v2434
        %v2436 = vpop.f32.mrf.mxu0
        %v2437 = vpop.f32.mrf.mxu0
        %2438 = vdwg.mxu0
        %2439 = vst [vmem:[%s519] sm:$0xff] %v2433
        %2440 = vst [vmem:[%s519 + $0x8] sm:$0xff] %v2435
        %s2441 = sand.u32 %s235, 1
        %s2442 = sand.u32 %s235, 1
        %s2443 = smul.addr %s2442, 16
        %s2444 = scalar_lea.vmem [#allocation5], %s2443
        %s2445 = sand.u32 %s261, 1
        %s2446 = sand.u32 %s261, 1
        %s2447 = smul.addr %s2446, 16
        %s2448 = scalar_lea.vmem [#allocation6], %s2447
        %p2449 = scmp.lt.s32.totalorder %s23, 1
        %s2450 = scalar_select %p2449, %s23, 1
        %s2451 = smul.addr %s2450, 2
        %s2452 = smul.addr %s2451, 8
        %s2453 = scalar_lea.vmem %s11, %s2452
        // Predicated region
        $region133: #{forward.1} parent=123 // pred_check
          %p2454 = pneg %p245
        $region134: #{forward.1} parent=123 // pred_check_branch
          %2456 = sbr.rel (%p2454) target = $region136
        $region135: #{forward.1} parent=123 // pred_region
          %s2457 = smul.addr %s23, 2
          %s2458 = smul.addr %s2457, 4
          %s2459 = scalar_lea.vmem %s9, %s2458
          // Predicated region
          $region137: #{forward.1} parent=135 // pred_check
            _
          $region138: #{forward.1} parent=135 // pred_check_branch
            %2461 = sbr.rel (0) target = $region140
          $region139: #{forward.1} parent=135 // pred_region
            // Predicated region
            $region141: #{forward.1} parent=139 // pred_check
              _
            $region142: #{forward.1} parent=139 // pred_check_branch
              %2463 = sbr.rel (0) target = $region144
            $region143: #{forward.1} parent=139 // pred_region
              // Predicated region
              $region156: #{forward.1} parent=143 // pred_check
                _
              $region157: #{forward.1} parent=143 // pred_check_branch
                %2481 = sbr.rel (0) target = $region159
              $region158: #{forward.1} parent=143 // pred_region
                loop: start=0, step=1, limit=1
                $region160: #{forward.1} parent=158 // loop_pre_header
                  _
                $region161: #{forward.1} parent=158 // loop_header
                  %s2483 = sphi 0, %s2487
                  %p2484 = scmp.ge.s32.totalorder %s2483, 1
                  %s2488 = sphi %s2444, %s2444
                  %s2489 = sphi %s2459, %s2459
                $region162: #{forward.1} parent=158 // loop_header_branch
                  %2486 = sbr.rel (%p2484) target = $region166
                $region163: #{forward.1} parent=158 // loop_body
                  %v2490 = vld [vmem:[%s2488] sm:$0xff]
                  %2491 = vst [vmem:[%s2489] sm:$0xff] %v2490
                  %v2492 = vld [vmem:[%s2488 + $0x8] sm:$0xff]
                  %2493 = vst [vmem:[%s2489 + $0x10] sm:$0xff] %v2492
                $region164: #{forward.1} parent=158 // loop_footer
                  %s2487 = sadd.s32 1, %s2483
                $region165: #{forward.1} parent=158 // loop_footer_branch
                  %2482 = sbr.rel target = $region161
                $region166: #{forward.1} parent=158 // loop_exit
                  _
              $region159: #{forward.1} parent=143 // pred_fallthru
                _
              // Predicated region
              $region167: #{forward.1} parent=143 // pred_check
                _
              $region168: #{forward.1} parent=143 // pred_check_branch
                %2495 = sbr.rel target = $region170
              $region169: #{forward.1} parent=143 // pred_region
                _
              $region170: #{forward.1} parent=143 // pred_fallthru
                _
            $region144: #{forward.1} parent=139 // pred_fallthru
              _
            // Predicated region
            $region145: #{forward.1} parent=139 // pred_check
              _
            $region146: #{forward.1} parent=139 // pred_check_branch
              %2465 = sbr.rel target = $region148
            $region147: #{forward.1} parent=139 // pred_region
              %s2467 = ssub.s32 256, 1
              loop: start=0, step=1, limit=1
              $region149: #{forward.1} parent=147 // loop_pre_header
                _
              $region150: #{forward.1} parent=147 // loop_header
                %s2469 = sphi 0, %s2473
                %p2470 = scmp.ge.s32.totalorder %s2469, 1
                %s2474 = sphi %s2444, %s2444
                %s2475 = sphi %s2459, %s2459
              $region151: #{forward.1} parent=147 // loop_header_branch
                %2472 = sbr.rel (%p2470) target = $region155
              $region152: #{forward.1} parent=147 // loop_body
                %v2476 = vld [vmem:[%s2474] sm:%s2467]
                %2477 = vst [vmem:[%s2475] sm:%s2467] %v2476
                %v2478 = vld [vmem:[%s2474 + $0x8] sm:%s2467]
                %2479 = vst [vmem:[%s2475 + $0x10] sm:%s2467] %v2478
              $region153: #{forward.1} parent=147 // loop_footer
                %s2473 = sadd.s32 1, %s2469
              $region154: #{forward.1} parent=147 // loop_footer_branch
                %2468 = sbr.rel target = $region150
              $region155: #{forward.1} parent=147 // loop_exit
                _
            $region148: #{forward.1} parent=139 // pred_fallthru
              _
          $region140: #{forward.1} parent=135 // pred_fallthru
            _
          %2496 = vnop
        $region136: #{forward.1} parent=123 // pred_fallthru
          _
        // Predicated region
        $region171: #{forward.1} parent=123 // pred_check
          %p2497 = pneg %p271
        $region172: #{forward.1} parent=123 // pred_check_branch
          %2499 = sbr.rel (%p2497) target = $region174
        $region173: #{forward.1} parent=123 // pred_region
          %s2500 = smul.addr %s23, 2
          %s2501 = smul.addr %s2500, 4
          %s2502 = scalar_lea.vmem %s10, %s2501
          // Predicated region
          $region175: #{forward.1} parent=173 // pred_check
            _
          $region176: #{forward.1} parent=173 // pred_check_branch
            %2504 = sbr.rel (0) target = $region178
          $region177: #{forward.1} parent=173 // pred_region
            // Predicated region
            $region179: #{forward.1} parent=177 // pred_check
              _
            $region180: #{forward.1} parent=177 // pred_check_branch
              %2506 = sbr.rel (0) target = $region182
            $region181: #{forward.1} parent=177 // pred_region
              // Predicated region
              $region194: #{forward.1} parent=181 // pred_check
                _
              $region195: #{forward.1} parent=181 // pred_check_branch
                %2524 = sbr.rel (0) target = $region197
              $region196: #{forward.1} parent=181 // pred_region
                loop: start=0, step=1, limit=1
                $region198: #{forward.1} parent=196 // loop_pre_header
                  _
                $region199: #{forward.1} parent=196 // loop_header
                  %s2526 = sphi 0, %s2530
                  %p2527 = scmp.ge.s32.totalorder %s2526, 1
                  %s2531 = sphi %s2448, %s2448
                  %s2532 = sphi %s2502, %s2502
                $region200: #{forward.1} parent=196 // loop_header_branch
                  %2529 = sbr.rel (%p2527) target = $region204
                $region201: #{forward.1} parent=196 // loop_body
                  %v2533 = vld [vmem:[%s2531] sm:$0xff]
                  %2534 = vst [vmem:[%s2532] sm:$0xff] %v2533
                  %v2535 = vld [vmem:[%s2531 + $0x8] sm:$0xff]
                  %2536 = vst [vmem:[%s2532 + $0x10] sm:$0xff] %v2535
                $region202: #{forward.1} parent=196 // loop_footer
                  %s2530 = sadd.s32 1, %s2526
                $region203: #{forward.1} parent=196 // loop_footer_branch
                  %2525 = sbr.rel target = $region199
                $region204: #{forward.1} parent=196 // loop_exit
                  _
              $region197: #{forward.1} parent=181 // pred_fallthru
                _
              // Predicated region
              $region205: #{forward.1} parent=181 // pred_check
                _
              $region206: #{forward.1} parent=181 // pred_check_branch
                %2538 = sbr.rel target = $region208
              $region207: #{forward.1} parent=181 // pred_region
                _
              $region208: #{forward.1} parent=181 // pred_fallthru
                _
            $region182: #{forward.1} parent=177 // pred_fallthru
              _
            // Predicated region
            $region183: #{forward.1} parent=177 // pred_check
              _
            $region184: #{forward.1} parent=177 // pred_check_branch
              %2508 = sbr.rel target = $region186
            $region185: #{forward.1} parent=177 // pred_region
              %s2510 = ssub.s32 256, 1
              loop: start=0, step=1, limit=1
              $region187: #{forward.1} parent=185 // loop_pre_header
                _
              $region188: #{forward.1} parent=185 // loop_header
                %s2512 = sphi 0, %s2516
                %p2513 = scmp.ge.s32.totalorder %s2512, 1
                %s2517 = sphi %s2448, %s2448
                %s2518 = sphi %s2502, %s2502
              $region189: #{forward.1} parent=185 // loop_header_branch
                %2515 = sbr.rel (%p2513) target = $region193
              $region190: #{forward.1} parent=185 // loop_body
                %v2519 = vld [vmem:[%s2517] sm:%s2510]
                %2520 = vst [vmem:[%s2518] sm:%s2510] %v2519
                %v2521 = vld [vmem:[%s2517 + $0x8] sm:%s2510]
                %2522 = vst [vmem:[%s2518 + $0x10] sm:%s2510] %v2521
              $region191: #{forward.1} parent=185 // loop_footer
                %s2516 = sadd.s32 1, %s2512
              $region192: #{forward.1} parent=185 // loop_footer_branch
                %2511 = sbr.rel target = $region188
              $region193: #{forward.1} parent=185 // loop_exit
                _
            $region186: #{forward.1} parent=177 // pred_fallthru
              _
          $region178: #{forward.1} parent=173 // pred_fallthru
            _
          %2539 = vnop
        $region174: #{forward.1} parent=123 // pred_fallthru
          _
        // Predicated region
        $region209: #{forward.1} parent=123 // pred_check
          %p2540 = pneg %p297
        $region210: #{forward.1} parent=123 // pred_check_branch
          %2542 = sbr.rel (%p2540) target = $region212
        $region211: #{forward.1} parent=123 // pred_region
          _
        $region212: #{forward.1} parent=123 // pred_fallthru
          _
      $region124: #{forward.1} parent=5 // pred_fallthru
        _
      %p2543 = scmp.le.s32.totalorder 2, %s18
      // Predicated region
      $region213: #{forward.1} parent=5 // pred_check
        %p2544 = pneg %p2543
      $region214: #{forward.1} parent=5 // pred_check_branch
        %2546 = sbr.rel (%p2544) target = $region216
      $region215: #{forward.1} parent=5 // pred_region
        %s2547 = ssub.s32 %s18, 2
        // Predicated region
        $region217: #{forward.1} parent=215 // pred_check
          %p2548 = pneg %p251
        $region218: #{forward.1} parent=215 // pred_check_branch
          %2550 = sbr.rel (%p2548) target = $region220
        $region219: #{forward.1} parent=215 // pred_region
          %s2551 = sand.u32 %s236, 1
          %s2552 = sand.u32 %s236, 1
          %s2553 = smul.addr %s2552, 16
          %s2554 = scalar_lea.vmem [#allocation5], %s2553
        $region220: #{forward.1} parent=215 // pred_fallthru
          _
        // Predicated region
        $region221: #{forward.1} parent=215 // pred_check
          %p2555 = pneg %p277
        $region222: #{forward.1} parent=215 // pred_check_branch
          %2557 = sbr.rel (%p2555) target = $region224
        $region223: #{forward.1} parent=215 // pred_region
          %s2558 = sand.u32 %s262, 1
          %s2559 = sand.u32 %s262, 1
          %s2560 = smul.addr %s2559, 16
          %s2561 = scalar_lea.vmem [#allocation6], %s2560
        $region224: #{forward.1} parent=215 // pred_fallthru
          _
        // Predicated region
        $region225: #{forward.1} parent=215 // pred_check
          %p2562 = pneg %p303
        $region226: #{forward.1} parent=215 // pred_check_branch
          %2564 = sbr.rel (%p2562) target = $region228
        $region227: #{forward.1} parent=215 // pred_region
          %p2565 = scmp.lt.s32.totalorder %s24, 1
          %s2566 = scalar_select %p2565, %s24, 1
          %s2567 = smul.addr %s2566, 2
          %s2568 = smul.addr %s2567, 8
          %s2569 = scalar_lea.vmem %s11, %s2568
        $region228: #{forward.1} parent=215 // pred_fallthru
          _
      $region216: #{forward.1} parent=5 // pred_fallthru
        _
    $region6: #{forward.1} parent=1 // loop_footer
      %s22 = sadd.s32 1, %s18
    $region7: #{forward.1} parent=1 // loop_footer_branch
      %17 = sbr.rel target = $region3
    $region8: #{forward.1} parent=1 // loop_exit
      _

</llo_original>
